<compile_context>
chip_gen: v5e
topology: v5e:2x2
jax: 0.10.0
libtpu: 0.0.40
codegen_flags: <defaults>
</compile_context>

<pallas_src>
import functools
import math

import jax
import jax.numpy as jnp
from jax import lax
from jax.experimental import pallas as pl
from jax.experimental.pallas import tpu as pltpu


# ---------------------------------------------------------------------------
# Hyper-parameters (small, deterministic, consistent with the module)
# ---------------------------------------------------------------------------
class hp:
    mel_bands = 8
    decoder_prenet_affine_size = 32
    decoder_prenet_conv_width = 3
    decoder_prenet_layer_size = 2
    decoder_pre_dilation_base = 2
    decoder_layer_size = 1
    decoder_conv_width = 3
    decoder_conv_layer_size = [2]
    decoder_dilation_base = 2
    charactor_embedding_size = 32
    attention_hidden_size = 32
    attention_num_head = 2
    decoder_postnet_affine_size = 32
    decoder_postnet_conv_width = 3
    decoder_postnet_layer_size = 2
    decoder_post_dilation_base = 2


_SQRT_HALF = math.sqrt(0.5)


def _pad_max():
    """Max causal left-pad (K-1)*dil over all conv layers."""
    pads = [0]
    for i in range(hp.decoder_prenet_layer_size):
        pads.append((hp.decoder_prenet_conv_width - 1)
                    * hp.decoder_pre_dilation_base ** (i % 4))
    for li in range(hp.decoder_layer_size):
        for j in range(hp.decoder_conv_layer_size[li]):
            pads.append((hp.decoder_conv_width - 1)
                        * hp.decoder_dilation_base ** j)
    for i in range(hp.decoder_postnet_layer_size):
        pads.append((hp.decoder_postnet_conv_width - 1)
                    * hp.decoder_post_dilation_base ** (i % 4))
    pads.append(hp.decoder_postnet_conv_width - 1)
    return max(pads)


# ---------------------------------------------------------------------------
# Fused Pallas kernel (Bt batch elements per grid step)
# ---------------------------------------------------------------------------
def _fused_decoder_kernel(*refs, n_w, bt, pad, t_len, s_len):
    inp_ref, keys_ref, values_ref = refs[:3]
    w_refs = refs[3:3 + n_w]
    meldone_ref, xout_ref, attn_ref = refs[3 + n_w:3 + n_w + 3]
    xbuf = refs[3 + n_w + 3]          # VMEM scratch (bt*(pad+T), A), fp32

    A = hp.decoder_prenet_affine_size
    nh = hp.attention_num_head
    H = hp.attention_hidden_size
    dh = H // nh
    blk = pad + t_len                 # rows per folded element (pad + active)
    n_rows = bt * blk
    m_rows = n_rows - pad             # "slab" rows [pad, n_rows)

    w_it = iter(w_refs)

    def next_wb():
        return next(w_it), next(w_it)

    def _act(y, act):
        if act == "relu":
            return jnp.maximum(y, 0.0)
        if act == "sigmoid":
            return jax.nn.sigmoid(y)
        return y

    # Mask that zeroes the per-element causal pad rows sitting inside the
    # slab (elements 1..bt-1).  No mask needed when bt == 1.
    if bt > 1:
        row = lax.broadcasted_iota(jnp.int32, (m_rows, 1), 0) + pad
        active_mask = ((row % blk) >= pad).astype(jnp.float32)
    else:
        active_mask = None

    def get_slab():
        return xbuf[pl.ds(pad, m_rows), :]

    def set_slab(y):
        if active_mask is not None:
            y = y * active_mask       # keep inter-element pad rows at zero
        xbuf[pl.ds(pad, m_rows), :] = y

    def set_elem(bb, y):
        xbuf[pl.ds(bb * blk + pad, t_len), :] = y

    def dense(x_f32, w_ref, b_ref, act="none"):
        y = jnp.dot(x_f32.astype(jnp.bfloat16), w_ref[...],
                    preferred_element_type=jnp.float32) + b_ref[...]
        return _act(y, act)

    def causal_conv(w_ref, b_ref, K, dil, act):
        # K accumulated dots against static row-slices of the weight ref:
        # removes the im2col lane-concat (which materialized a relayout copy).
        cin = w_ref.shape[0] // K
        y = b_ref[...]
        for j in range(K):
            shift = (K - 1 - j) * dil
            tap = xbuf[pl.ds(pad - shift, m_rows), :].astype(jnp.bfloat16)
            y = y + jnp.dot(tap, w_ref[j * cin:(j + 1) * cin, :],
                            preferred_element_type=jnp.float32)
        return _act(y, act)

    # Zero only the (tiny) causal pad rows every step.  Scratch is persistent
    # but may be fresh per core under megacore grid sharding, so this is done
    # unconditionally; active rows are fully overwritten each layer and the
    # masked slab writes keep the inner pad rows at zero thereafter.
    zero_pad = jnp.zeros((pad, A), jnp.float32)
    for bb in range(bt):
        xbuf[pl.ds(bb * blk, pad), :] = zero_pad

    # --- prenet ------------------------------------------------------------
    w, b = next_wb()
    x0 = dense(inp_ref[...].reshape(bt * t_len, hp.mel_bands), w, b,
               act="relu")
    for bb in range(bt):
        set_elem(bb, x0[bb * t_len:(bb + 1) * t_len, :])
    for i in range(hp.decoder_prenet_layer_size):
        w, b = next_wb()
        dil = hp.decoder_pre_dilation_base ** (i % 4)
        set_slab(causal_conv(w, b, hp.decoder_prenet_conv_width, dil, "none"))

    # --- decoder blocks: residual causal convs + multi-head cross attention -
    k_bf = keys_ref[...].reshape(bt * s_len, -1).astype(jnp.bfloat16)
    v_bf = values_ref[...].reshape(bt * s_len, -1).astype(jnp.bfloat16)
    scale = 1.0 / math.sqrt(dh)

    for li in range(hp.decoder_layer_size):
        for j in range(hp.decoder_conv_layer_size[li]):
            w, b = next_wb()
            dil = hp.decoder_dilation_base ** j
            h = causal_conv(w, b, hp.decoder_conv_width, dil, "relu")
            set_slab((get_slab() + h) * _SQRT_HALF)

        wq, bq = next_wb()
        wk, bk = next_wb()
        wv, bv = next_wb()
        wo, bo = next_wb()

        x_slab = get_slab()                       # (m_rows, A) fp32
        x_bf = x_slab.astype(jnp.bfloat16)

        # Per-head projections via static COLUMN slices of the weight refs
        # (free) — no lane-slicing of computed activations.
        q_heads, k_heads, v_heads = [], [], []
        for hd in range(nh):
            c0, c1 = hd * dh, (hd + 1) * dh
            q_heads.append(jnp.dot(x_bf, wq[:, c0:c1],
                                   preferred_element_type=jnp.float32)
                           + bq[:, c0:c1])
            k_heads.append(jnp.dot(k_bf, wk[:, c0:c1],
                                   preferred_element_type=jnp.float32)
                           + bk[:, c0:c1])
            v_heads.append(jnp.dot(v_bf, wv[:, c0:c1],
                                   preferred_element_type=jnp.float32)
                           + bv[:, c0:c1])

        for bb in range(bt):
            r0 = bb * blk
            x_b = x_slab[r0:r0 + t_len, :]
            ctxs, attns = [], []
            for hd in range(nh):
                qh = q_heads[hd][r0:r0 + t_len, :].astype(jnp.bfloat16)
                kh = k_heads[hd][bb * s_len:(bb + 1) * s_len, :].astype(
                    jnp.bfloat16)
                vh = v_heads[hd][bb * s_len:(bb + 1) * s_len, :].astype(
                    jnp.bfloat16)
                # contract last dims directly -> no explicit transpose of K
                s = lax.dot_general(qh, kh, (((1,), (1,)), ((), ())),
                                    preferred_element_type=jnp.float32) * scale
                m = jnp.max(s, axis=-1, keepdims=True)
                p = jnp.exp(s - m)
                attn = p * pl.reciprocal(jnp.sum(p, axis=-1, keepdims=True),
                                         approx=True)
                attns.append(attn)
                ctxs.append(jnp.dot(attn.astype(jnp.bfloat16), vh,
                                    preferred_element_type=jnp.float32))
            # merge heads -> ONE output projection per element
            ctx = jnp.concatenate(ctxs, axis=-1).astype(jnp.bfloat16)
            out_b = jnp.dot(ctx, wo[...],
                            preferred_element_type=jnp.float32) + bo[...]
            set_elem(bb, (x_b + out_b) * _SQRT_HALF)
            # one batched attention-map write per layer per element
            attn_ref[bb, li * nh:(li + 1) * nh, :, :] = jnp.stack(attns, 0)

    # --- postnet -------------------------------------------------------------
    w, b = next_wb()
    set_slab(dense(get_slab(), w, b, act="relu"))
    for i in range(hp.decoder_postnet_layer_size):
        w, b = next_wb()
        dil = hp.decoder_post_dilation_base ** (i % 4)
        set_slab(causal_conv(w, b, hp.decoder_postnet_conv_width, dil, "none"))
    w, b = next_wb()
    set_slab(causal_conv(w, b, hp.decoder_postnet_conv_width, 1, "relu"))

    # --- output heads: mel + done fused into one lane-dense matmul ----------
    x_fin = get_slab()
    w, b = next_wb()
    md = dense(x_fin, w, b, act="sigmoid")        # (m_rows, mel_bands + 1)
    for bb in range(bt):
        r0 = bb * blk
        xout_ref[bb, :, :] = x_fin[r0:r0 + t_len, :]
        meldone_ref[bb, :, :] = md[r0:r0 + t_len, :]


# ---------------------------------------------------------------------------
# Parameter construction (deterministic)
# ---------------------------------------------------------------------------
def _conv_params(key, K, cin, cout):
    kw, kb = jax.random.split(key)
    std = 1.0 / math.sqrt(K * cin)
    w = jax.random.normal(kw, (K, cin, cout), jnp.float32) * std
    b = jax.random.normal(kb, (cout,), jnp.float32) * 0.01
    return {"w": w, "b": b}


def init_params(key):
    keys = iter(jax.random.split(key, 64))
    p = {}
    A = hp.decoder_prenet_affine_size
    PA = hp.decoder_postnet_affine_size
    H = hp.attention_hidden_size
    E = hp.charactor_embedding_size

    p["prenet0"] = _conv_params(next(keys), 1, hp.mel_bands, A)
    p["prenet_convs"] = [
        _conv_params(next(keys), hp.decoder_prenet_conv_width, A, A)
        for _ in range(hp.decoder_prenet_layer_size)]

    p["decoder_list"] = []
    for i in range(hp.decoder_layer_size):
        lp = {
            "convs": [_conv_params(next(keys), hp.decoder_conv_width, A, A)
                      for _ in range(hp.decoder_conv_layer_size[i])],
            "wq": _conv_params(next(keys), 1, A, H),
            "wk": _conv_params(next(keys), 1, E, H),
            "wv": _conv_params(next(keys), 1, E, H),
            "wo": _conv_params(next(keys), 1, H, A),
        }
        p["decoder_list"].append(lp)

    p["post0"] = _conv_params(next(keys), 1, A, PA)
    p["post_convs"] = [
        _conv_params(next(keys), hp.decoder_postnet_conv_width, PA, PA)
        for _ in range(hp.decoder_postnet_layer_size)]
    p["post_last"] = _conv_params(next(keys), hp.decoder_postnet_conv_width,
                                  PA, PA)
    p["conv_mel"] = _conv_params(next(keys), 1, PA, hp.mel_bands)
    p["fc_done"] = _conv_params(next(keys), 1, PA, 1)
    return p


def _flatten_weights(params):
    """Flat (w, b) list in the exact order the fused kernel consumes them.

    Conv weights are reshaped to (K*Cin, Cout); the kernel takes static row
    slices per tap.  Weights are bf16 (fp32 accumulation), biases fp32.
    The mel and done heads are fused into one (PA, mel_bands+1) matrix.
    """
    flat = []

    def add(w2d, b):
        flat.append(jnp.asarray(w2d, jnp.bfloat16))
        flat.append(jnp.asarray(b, jnp.float32).reshape(1, -1))

    add(params["prenet0"]["w"][0], params["prenet0"]["b"])
    for cp in params["prenet_convs"]:
        K, Cin, Cout = cp["w"].shape
        add(cp["w"].reshape(K * Cin, Cout), cp["b"])
    for lp in params["decoder_list"]:
        for cp in lp["convs"]:
            K, Cin, Cout = cp["w"].shape
            add(cp["w"].reshape(K * Cin, Cout), cp["b"])
        for name in ("wq", "wk", "wv", "wo"):
            add(lp[name]["w"][0], lp[name]["b"])
    add(params["post0"]["w"][0], params["post0"]["b"])
    for cp in params["post_convs"]:
        K, Cin, Cout = cp["w"].shape
        add(cp["w"].reshape(K * Cin, Cout), cp["b"])
    K, Cin, Cout = params["post_last"]["w"].shape
    add(params["post_last"]["w"].reshape(K * Cin, Cout),
        params["post_last"]["b"])
    # fused mel|done head
    w_md = jnp.concatenate([params["conv_mel"]["w"][0],
                            params["fc_done"]["w"][0]], axis=-1)
    b_md = jnp.concatenate([params["conv_mel"]["b"],
                            params["fc_done"]["b"]], axis=-1)
    add(w_md, b_md)
    return flat


# ---------------------------------------------------------------------------
# Forward pass (single fused pallas_call, batch folded onto the grid)
# ---------------------------------------------------------------------------
def decoder_forward(params, inp, keys, values, timestep,
                    target_mask=None, src_mask=None, speaker_embedding=None):
    # TODO(synk): target_mask / src_mask / timestep-incremental decoding and
    # speaker_embedding have no clean static-Pallas equivalent here; this is
    # the full-sequence (training-style) pass with unmasked attention.
    del timestep, target_mask, src_mask, speaker_embedding

    B, T, _ = inp.shape
    S = keys.shape[1]
    E = keys.shape[2]
    L = hp.decoder_layer_size
    nh = hp.attention_num_head
    A = hp.decoder_prenet_affine_size
    PA = hp.decoder_postnet_affine_size
    MD = hp.mel_bands + 1
    assert A == PA, "shared activation buffer assumes equal pre/post widths"

    # Causal pad rounded up to a sublane multiple so slab accesses are aligned.
    pad = max(8, -(-_pad_max() // 8) * 8)

    # Batch folding: pack as many elements per grid step as possible while
    # keeping >= 2 grid steps (both v7x TensorCores busy).
    if B >= 2 and B % 2 == 0:
        grid_steps = 2
    else:
        grid_steps = B
    bt = B // grid_steps

    flat_w = _flatten_weights(params)
    n_w = len(flat_w)

    kern = functools.partial(_fused_decoder_kernel, n_w=n_w, bt=bt,
                             pad=pad, t_len=T, s_len=S)

    in_specs = [
        pl.BlockSpec((bt, T, hp.mel_bands), lambda g: (g, 0, 0)),
        pl.BlockSpec((bt, S, E), lambda g: (g, 0, 0)),
        pl.BlockSpec((bt, S, E), lambda g: (g, 0, 0)),
    ]
    for w in flat_w:                              # all weights/biases are 2D
        in_specs.append(pl.BlockSpec(w.shape, lambda g: (0, 0)))

    out_shape = (
        jax.ShapeDtypeStruct((B, T, MD), jnp.float32),         # mel | done
        jax.ShapeDtypeStruct((B, T, PA), jnp.float32),         # x
        jax.ShapeDtypeStruct((B, L * nh, T, S), jnp.float32),  # attention
    )
    out_specs = (
        pl.BlockSpec((bt, T, MD), lambda g: (g, 0, 0)),
        pl.BlockSpec((bt, T, PA), lambda g: (g, 0, 0)),
        pl.BlockSpec((bt, L * nh, T, S), lambda g: (g, 0, 0, 0)),
    )

    # VMEM budget (per step, generous double-buffer estimate): weights ~40 KiB,
    # in/out blocks + scratch a few tens of KiB — far below the 32 MiB scoped
    # limit on every generation (v5e/v6e 128 MiB, v7x 64 MiB physical).
    meldone, x, attn_all = pl.pallas_call(
        kern,
        out_shape=out_shape,
        grid=(grid_steps,),
        in_specs=in_specs,
        out_specs=out_specs,
        scratch_shapes=[pltpu.VMEM((bt * (pad + T), A), jnp.float32)],
        compiler_params=pltpu.CompilerParams(
            dimension_semantics=("parallel",),     # shard steps on v7x's 2 TCs
            vmem_limit_bytes=32 * 1024 * 1024),
    )(inp, keys, values, *flat_w)

    mel = meldone[..., :hp.mel_bands]
    done = meldone[..., hp.mel_bands:]
    attention_list = [attn_all[:, li * nh:(li + 1) * nh] for li in range(L)]
    return done, mel, x, attention_list


# ---------------------------------------------------------------------------
if __name__ == "__main__":
    key = jax.random.PRNGKey(0)
    kp, ki, kk, kv = jax.random.split(key, 4)

    B, T, S = 4, 16, 8
    inp = jax.random.normal(ki, (B, T, hp.mel_bands), jnp.float32)
    keys = jax.random.normal(kk, (B, S, hp.charactor_embedding_size),
                             jnp.float32)
    values = jax.random.normal(kv, (B, S, hp.charactor_embedding_size),
                               jnp.float32)

    params = init_params(kp)

    done, mel, x, attn_list = jax.jit(decoder_forward)(
        params, inp, keys, values, 0)
    jax.block_until_ready((done, mel, x, attn_list))

    assert done.shape == (B, T, 1)
    assert mel.shape == (B, T, hp.mel_bands)
    assert x.shape == (B, T, hp.decoder_postnet_affine_size)
    assert len(attn_list) == hp.decoder_layer_size
    assert attn_list[0].shape == (B, hp.attention_num_head, T, S)
    assert bool(jnp.all(jnp.isfinite(done)))
    assert bool(jnp.all(jnp.isfinite(mel)))
    assert bool(jnp.all(jnp.isfinite(x)))
    assert bool(jnp.all(jnp.isfinite(attn_list[0])))
    print("KERNEL_OK")
</pallas_src>

<mosaic_0001>
module attributes {stable_mosaic.version = 11 : i64} {
  func.func @_fused_decoder_kernel(%arg0: i32, %arg1: memref<2x16x8xf32, #tpu.memory_space<vmem>>, %arg2: memref<2x8x32xf32, #tpu.memory_space<vmem>>, %arg3: memref<2x8x32xf32, #tpu.memory_space<vmem>>, %arg4: memref<8x32xbf16, #tpu.memory_space<vmem>>, %arg5: memref<1x32xf32, #tpu.memory_space<vmem>>, %arg6: memref<96x32xbf16, #tpu.memory_space<vmem>>, %arg7: memref<1x32xf32, #tpu.memory_space<vmem>>, %arg8: memref<96x32xbf16, #tpu.memory_space<vmem>>, %arg9: memref<1x32xf32, #tpu.memory_space<vmem>>, %arg10: memref<96x32xbf16, #tpu.memory_space<vmem>>, %arg11: memref<1x32xf32, #tpu.memory_space<vmem>>, %arg12: memref<96x32xbf16, #tpu.memory_space<vmem>>, %arg13: memref<1x32xf32, #tpu.memory_space<vmem>>, %arg14: memref<32x32xbf16, #tpu.memory_space<vmem>>, %arg15: memref<1x32xf32, #tpu.memory_space<vmem>>, %arg16: memref<32x32xbf16, #tpu.memory_space<vmem>>, %arg17: memref<1x32xf32, #tpu.memory_space<vmem>>, %arg18: memref<32x32xbf16, #tpu.memory_space<vmem>>, %arg19: memref<1x32xf32, #tpu.memory_space<vmem>>, %arg20: memref<32x32xbf16, #tpu.memory_space<vmem>>, %arg21: memref<1x32xf32, #tpu.memory_space<vmem>>, %arg22: memref<32x32xbf16, #tpu.memory_space<vmem>>, %arg23: memref<1x32xf32, #tpu.memory_space<vmem>>, %arg24: memref<96x32xbf16, #tpu.memory_space<vmem>>, %arg25: memref<1x32xf32, #tpu.memory_space<vmem>>, %arg26: memref<96x32xbf16, #tpu.memory_space<vmem>>, %arg27: memref<1x32xf32, #tpu.memory_space<vmem>>, %arg28: memref<96x32xbf16, #tpu.memory_space<vmem>>, %arg29: memref<1x32xf32, #tpu.memory_space<vmem>>, %arg30: memref<32x9xbf16, #tpu.memory_space<vmem>>, %arg31: memref<1x9xf32, #tpu.memory_space<vmem>>, %arg32: memref<2x16x9xf32, #tpu.memory_space<vmem>>, %arg33: memref<2x16x32xf32, #tpu.memory_space<vmem>>, %arg34: memref<2x2x16x8xf32, #tpu.memory_space<vmem>>, %arg35: memref<48x32xf32, #tpu.memory_space<vmem>>) attributes {dimension_semantics = [#tpu.dimension_semantics<parallel>], iteration_bounds = array<i64: 2>, scalar_prefetch = 0 : i64, scratch_operands = 1 : i64, tpu.core_type = #tpu.core_type<tc>, window_params = [{transform_indices = @transform_0, window_bounds = array<i64: 2, 16, 8>}, {transform_indices = @transform_1, window_bounds = array<i64: 2, 8, 32>}, {transform_indices = @transform_2, window_bounds = array<i64: 2, 8, 32>}, {pipeline_mode = #tpu.pipeline_mode<synchronous>, transform_indices = @transform_3, window_bounds = array<i64: 8, 32>}, {pipeline_mode = #tpu.pipeline_mode<synchronous>, transform_indices = @transform_4, window_bounds = array<i64: 1, 32>}, {pipeline_mode = #tpu.pipeline_mode<synchronous>, transform_indices = @transform_5, window_bounds = array<i64: 96, 32>}, {pipeline_mode = #tpu.pipeline_mode<synchronous>, transform_indices = @transform_6, window_bounds = array<i64: 1, 32>}, {pipeline_mode = #tpu.pipeline_mode<synchronous>, transform_indices = @transform_7, window_bounds = array<i64: 96, 32>}, {pipeline_mode = #tpu.pipeline_mode<synchronous>, transform_indices = @transform_8, window_bounds = array<i64: 1, 32>}, {pipeline_mode = #tpu.pipeline_mode<synchronous>, transform_indices = @transform_9, window_bounds = array<i64: 96, 32>}, {pipeline_mode = #tpu.pipeline_mode<synchronous>, transform_indices = @transform_10, window_bounds = array<i64: 1, 32>}, {pipeline_mode = #tpu.pipeline_mode<synchronous>, transform_indices = @transform_11, window_bounds = array<i64: 96, 32>}, {pipeline_mode = #tpu.pipeline_mode<synchronous>, transform_indices = @transform_12, window_bounds = array<i64: 1, 32>}, {pipeline_mode = #tpu.pipeline_mode<synchronous>, transform_indices = @transform_13, window_bounds = array<i64: 32, 32>}, {pipeline_mode = #tpu.pipeline_mode<synchronous>, transform_indices = @transform_14, window_bounds = array<i64: 1, 32>}, {pipeline_mode = #tpu.pipeline_mode<synchronous>, transform_indices = @transform_15, window_bounds = array<i64: 32, 32>}, {pipeline_mode = #tpu.pipeline_mode<synchronous>, transform_indices = @transform_16, window_bounds = array<i64: 1, 32>}, {pipeline_mode = #tpu.pipeline_mode<synchronous>, transform_indices = @transform_17, window_bounds = array<i64: 32, 32>}, {pipeline_mode = #tpu.pipeline_mode<synchronous>, transform_indices = @transform_18, window_bounds = array<i64: 1, 32>}, {pipeline_mode = #tpu.pipeline_mode<synchronous>, transform_indices = @transform_19, window_bounds = array<i64: 32, 32>}, {pipeline_mode = #tpu.pipeline_mode<synchronous>, transform_indices = @transform_20, window_bounds = array<i64: 1, 32>}, {pipeline_mode = #tpu.pipeline_mode<synchronous>, transform_indices = @transform_21, window_bounds = array<i64: 32, 32>}, {pipeline_mode = #tpu.pipeline_mode<synchronous>, transform_indices = @transform_22, window_bounds = array<i64: 1, 32>}, {pipeline_mode = #tpu.pipeline_mode<synchronous>, transform_indices = @transform_23, window_bounds = array<i64: 96, 32>}, {pipeline_mode = #tpu.pipeline_mode<synchronous>, transform_indices = @transform_24, window_bounds = array<i64: 1, 32>}, {pipeline_mode = #tpu.pipeline_mode<synchronous>, transform_indices = @transform_25, window_bounds = array<i64: 96, 32>}, {pipeline_mode = #tpu.pipeline_mode<synchronous>, transform_indices = @transform_26, window_bounds = array<i64: 1, 32>}, {pipeline_mode = #tpu.pipeline_mode<synchronous>, transform_indices = @transform_27, window_bounds = array<i64: 96, 32>}, {pipeline_mode = #tpu.pipeline_mode<synchronous>, transform_indices = @transform_28, window_bounds = array<i64: 1, 32>}, {pipeline_mode = #tpu.pipeline_mode<synchronous>, transform_indices = @transform_29, window_bounds = array<i64: 32, 9>}, {pipeline_mode = #tpu.pipeline_mode<synchronous>, transform_indices = @transform_30, window_bounds = array<i64: 1, 9>}, {transform_indices = @transform_31, window_bounds = array<i64: 2, 16, 9>}, {transform_indices = @transform_32, window_bounds = array<i64: 2, 16, 32>}, {transform_indices = @transform_33, window_bounds = array<i64: 2, 2, 16, 8>}]} {
    %0 = tpu.iota {dimensions = array<i32: 0>} : vector<40x1xi32>
    %c8_i32 = arith.constant 8 : i32
    %1 = vector.broadcast %c8_i32 : i32 to vector<40x1xi32>
    %2 = arith.addi %0, %1 : vector<40x1xi32>
    %c24_i32 = arith.constant 24 : i32
    %c0_i32 = arith.constant 0 : i32
    %3 = arith.cmpi eq, %c24_i32, %c0_i32 : i32
    %c1_i32 = arith.constant 1 : i32
    %4 = arith.select %3, %c1_i32, %c24_i32 : i32
    %5 = vector.broadcast %4 : i32 to vector<40x1xi32>
    %6 = arith.remsi %2, %5 : vector<40x1xi32>
    %c0_i32_0 = arith.constant 0 : i32
    %7 = vector.broadcast %c0_i32_0 : i32 to vector<40x1xi32>
    %8 = arith.cmpi ne, %6, %7 : vector<40x1xi32>
    %c0_i32_1 = arith.constant 0 : i32
    %9 = vector.broadcast %c0_i32_1 : i32 to vector<40x1xi32>
    %10 = arith.cmpi slt, %6, %9 : vector<40x1xi32>
    %c0_i32_2 = arith.constant 0 : i32
    %11 = arith.cmpi slt, %4, %c0_i32_2 : i32
    %12 = vector.broadcast %11 : i1 to vector<40x1xi1>
    %13 = vector.broadcast %12 : vector<40x1xi1> to vector<40x1xi1>
    %14 = arith.xori %10, %13 : vector<40x1xi1>
    %15 = arith.andi %14, %8 : vector<40x1xi1>
    %16 = vector.broadcast %4 : i32 to vector<40x1xi32>
    %17 = arith.addi %6, %16 : vector<40x1xi32>
    %18 = arith.select %15, %17, %6 : vector<40x1xi1>, vector<40x1xi32>
    %c8_i32_3 = arith.constant 8 : i32
    %19 = vector.broadcast %c8_i32_3 : i32 to vector<40x1xi32>
    %20 = arith.cmpi sge, %18, %19 : vector<40x1xi32>
    %21 = arith.extui %20 : vector<40x1xi1> to vector<40x1xi32>
    %22 = arith.sitofp %21 : vector<40x1xi32> to vector<40x1xf32>
    %cst = arith.constant 0.000000e+00 : f32
    %23 = vector.broadcast %cst : f32 to vector<8x32xf32>
    %c0 = arith.constant 0 : index
    %c0_4 = arith.constant 0 : index
    %24 = vector.load %arg35[%c0, %c0_4] : memref<48x32xf32, #tpu.memory_space<vmem>>, vector<8x32xf32>
    tpu.vector_store %arg35[%c0, %c0_4], %23 {strides = array<i32>} : memref<48x32xf32, #tpu.memory_space<vmem>>, vector<8x32xf32>,
    %c24 = arith.constant 24 : index
    %c0_5 = arith.constant 0 : index
    %25 = vector.load %arg35[%c24, %c0_5] : memref<48x32xf32, #tpu.memory_space<vmem>>, vector<8x32xf32>
    tpu.vector_store %arg35[%c24, %c0_5], %23 {strides = array<i32>} : memref<48x32xf32, #tpu.memory_space<vmem>>, vector<8x32xf32>,
    %c0_6 = arith.constant 0 : index
    %c0_7 = arith.constant 0 : index
    %c0_8 = arith.constant 0 : index
    %26 = vector.load %arg1[%c0_6, %c0_7, %c0_8] : memref<2x16x8xf32, #tpu.memory_space<vmem>>, vector<2x16x8xf32>
    %27 = vector.shape_cast %26 : vector<2x16x8xf32> to vector<32x8xf32>
    %28 = arith.truncf %27 : vector<32x8xf32> to vector<32x8xbf16>
    %c0_9 = arith.constant 0 : index
    %c0_10 = arith.constant 0 : index
    %29 = vector.load %arg4[%c0_9, %c0_10] : memref<8x32xbf16, #tpu.memory_space<vmem>>, vector<8x32xbf16>
    %cst_11 = arith.constant dense<0.000000e+00> : vector<32x32xf32>
    %30 = tpu.matmul %28, %29, %cst_11 {dimension_numbers = #tpu.dot_dimension_numbers<[1], [0], [0], [1], [0, 0, 1, 1], [], []>} : vector<32x8xbf16>, vector<8x32xbf16>, vector<32x32xf32> -> vector<32x32xf32>
    %c0_12 = arith.constant 0 : index
    %c0_13 = arith.constant 0 : index
    %31 = vector.load %arg5[%c0_12, %c0_13] : memref<1x32xf32, #tpu.memory_space<vmem>>, vector<1x32xf32>
    %32 = vector.broadcast %31 : vector<1x32xf32> to vector<32x32xf32>
    %33 = arith.addf %30, %32 : vector<32x32xf32>
    %cst_14 = arith.constant 0.000000e+00 : f32
    %34 = vector.broadcast %cst_14 : f32 to vector<32x32xf32>
    %35 = arith.maximumf %33, %34 : vector<32x32xf32>
    %36 = vector.extract_strided_slice %35 {offsets = [0, 0], sizes = [16, 32], strides = [1, 1]} : vector<32x32xf32> to vector<16x32xf32>
    %c8 = arith.constant 8 : index
    %c0_15 = arith.constant 0 : index
    %37 = vector.load %arg35[%c8, %c0_15] : memref<48x32xf32, #tpu.memory_space<vmem>>, vector<16x32xf32>
    tpu.vector_store %arg35[%c8, %c0_15], %36 {strides = array<i32>} : memref<48x32xf32, #tpu.memory_space<vmem>>, vector<16x32xf32>,
    %38 = vector.extract_strided_slice %35 {offsets = [16, 0], sizes = [16, 32], strides = [1, 1]} : vector<32x32xf32> to vector<16x32xf32>
    %c32 = arith.constant 32 : index
    %c0_16 = arith.constant 0 : index
    %39 = vector.load %arg35[%c32, %c0_16] : memref<48x32xf32, #tpu.memory_space<vmem>>, vector<16x32xf32>
    tpu.vector_store %arg35[%c32, %c0_16], %38 {strides = array<i32>} : memref<48x32xf32, #tpu.memory_space<vmem>>, vector<16x32xf32>,
    %c0_17 = arith.constant 0 : index
    %c0_18 = arith.constant 0 : index
    %40 = vector.load %arg7[%c0_17, %c0_18] : memref<1x32xf32, #tpu.memory_space<vmem>>, vector<1x32xf32>
    %c6 = arith.constant 6 : index
    %c0_19 = arith.constant 0 : index
    %41 = vector.load %arg35[%c6, %c0_19] : memref<48x32xf32, #tpu.memory_space<vmem>>, vector<40x32xf32>
    %42 = arith.truncf %41 : vector<40x32xf32> to vector<40x32xbf16>
    %c0_20 = arith.constant 0 : index
    %c0_21 = arith.constant 0 : index
    %43 = vector.load %arg6[%c0_20, %c0_21] : memref<96x32xbf16, #tpu.memory_space<vmem>>, vector<32x32xbf16>
    %cst_22 = arith.constant dense<0.000000e+00> : vector<40x32xf32>
    %44 = tpu.matmul %42, %43, %cst_22 {dimension_numbers = #tpu.dot_dimension_numbers<[1], [0], [0], [1], [0, 0, 1, 1], [], []>} : vector<40x32xbf16>, vector<32x32xbf16>, vector<40x32xf32> -> vector<40x32xf32>
    %45 = vector.broadcast %40 : vector<1x32xf32> to vector<40x32xf32>
    %46 = arith.addf %45, %44 : vector<40x32xf32>
    %c7 = arith.constant 7 : index
    %c0_23 = arith.constant 0 : index
    %47 = vector.load %arg35[%c7, %c0_23] : memref<48x32xf32, #tpu.memory_space<vmem>>, vector<40x32xf32>
    %48 = arith.truncf %47 : vector<40x32xf32> to vector<40x32xbf16>
    %c32_24 = arith.constant 32 : index
    %c0_25 = arith.constant 0 : index
    %49 = vector.load %arg6[%c32_24, %c0_25] : memref<96x32xbf16, #tpu.memory_space<vmem>>, vector<32x32xbf16>
    %cst_26 = arith.constant dense<0.000000e+00> : vector<40x32xf32>
    %50 = tpu.matmul %48, %49, %cst_26 {dimension_numbers = #tpu.dot_dimension_numbers<[1], [0], [0], [1], [0, 0, 1, 1], [], []>} : vector<40x32xbf16>, vector<32x32xbf16>, vector<40x32xf32> -> vector<40x32xf32>
    %51 = arith.addf %46, %50 : vector<40x32xf32>
    %c8_27 = arith.constant 8 : index
    %c0_28 = arith.constant 0 : index
    %52 = vector.load %arg35[%c8_27, %c0_28] : memref<48x32xf32, #tpu.memory_space<vmem>>, vector<40x32xf32>
    %53 = arith.truncf %52 : vector<40x32xf32> to vector<40x32xbf16>
    %c64 = arith.constant 64 : index
    %c0_29 = arith.constant 0 : index
    %54 = vector.load %arg6[%c64, %c0_29] : memref<96x32xbf16, #tpu.memory_space<vmem>>, vector<32x32xbf16>
    %cst_30 = arith.constant dense<0.000000e+00> : vector<40x32xf32>
    %55 = tpu.matmul %53, %54, %cst_30 {dimension_numbers = #tpu.dot_dimension_numbers<[1], [0], [0], [1], [0, 0, 1, 1], [], []>} : vector<40x32xbf16>, vector<32x32xbf16>, vector<40x32xf32> -> vector<40x32xf32>
    %56 = arith.addf %51, %55 : vector<40x32xf32>
    %57 = vector.broadcast %22 : vector<40x1xf32> to vector<40x32xf32>
    %58 = arith.mulf %56, %57 : vector<40x32xf32>
    %c8_31 = arith.constant 8 : index
    %c0_32 = arith.constant 0 : index
    %59 = vector.load %arg35[%c8_31, %c0_32] : memref<48x32xf32, #tpu.memory_space<vmem>>, vector<40x32xf32>
    tpu.vector_store %arg35[%c8_31, %c0_32], %58 {strides = array<i32>} : memref<48x32xf32, #tpu.memory_space<vmem>>, vector<40x32xf32>,
    %c0_33 = arith.constant 0 : index
    %c0_34 = arith.constant 0 : index
    %60 = vector.load %arg9[%c0_33, %c0_34] : memref<1x32xf32, #tpu.memory_space<vmem>>, vector<1x32xf32>
    %c4 = arith.constant 4 : index
    %c0_35 = arith.constant 0 : index
    %61 = vector.load %arg35[%c4, %c0_35] : memref<48x32xf32, #tpu.memory_space<vmem>>, vector<40x32xf32>
    %62 = arith.truncf %61 : vector<40x32xf32> to vector<40x32xbf16>
    %c0_36 = arith.constant 0 : index
    %c0_37 = arith.constant 0 : index
    %63 = vector.load %arg8[%c0_36, %c0_37] : memref<96x32xbf16, #tpu.memory_space<vmem>>, vector<32x32xbf16>
    %cst_38 = arith.constant dense<0.000000e+00> : vector<40x32xf32>
    %64 = tpu.matmul %62, %63, %cst_38 {dimension_numbers = #tpu.dot_dimension_numbers<[1], [0], [0], [1], [0, 0, 1, 1], [], []>} : vector<40x32xbf16>, vector<32x32xbf16>, vector<40x32xf32> -> vector<40x32xf32>
    %65 = vector.broadcast %60 : vector<1x32xf32> to vector<40x32xf32>
    %66 = arith.addf %65, %64 : vector<40x32xf32>
    %c6_39 = arith.constant 6 : index
    %c0_40 = arith.constant 0 : index
    %67 = vector.load %arg35[%c6_39, %c0_40] : memref<48x32xf32, #tpu.memory_space<vmem>>, vector<40x32xf32>
    %68 = arith.truncf %67 : vector<40x32xf32> to vector<40x32xbf16>
    %c32_41 = arith.constant 32 : index
    %c0_42 = arith.constant 0 : index
    %69 = vector.load %arg8[%c32_41, %c0_42] : memref<96x32xbf16, #tpu.memory_space<vmem>>, vector<32x32xbf16>
    %cst_43 = arith.constant dense<0.000000e+00> : vector<40x32xf32>
    %70 = tpu.matmul %68, %69, %cst_43 {dimension_numbers = #tpu.dot_dimension_numbers<[1], [0], [0], [1], [0, 0, 1, 1], [], []>} : vector<40x32xbf16>, vector<32x32xbf16>, vector<40x32xf32> -> vector<40x32xf32>
    %71 = arith.addf %66, %70 : vector<40x32xf32>
    %c8_44 = arith.constant 8 : index
    %c0_45 = arith.constant 0 : index
    %72 = vector.load %arg35[%c8_44, %c0_45] : memref<48x32xf32, #tpu.memory_space<vmem>>, vector<40x32xf32>
    %73 = arith.truncf %72 : vector<40x32xf32> to vector<40x32xbf16>
    %c64_46 = arith.constant 64 : index
    %c0_47 = arith.constant 0 : index
    %74 = vector.load %arg8[%c64_46, %c0_47] : memref<96x32xbf16, #tpu.memory_space<vmem>>, vector<32x32xbf16>
    %cst_48 = arith.constant dense<0.000000e+00> : vector<40x32xf32>
    %75 = tpu.matmul %73, %74, %cst_48 {dimension_numbers = #tpu.dot_dimension_numbers<[1], [0], [0], [1], [0, 0, 1, 1], [], []>} : vector<40x32xbf16>, vector<32x32xbf16>, vector<40x32xf32> -> vector<40x32xf32>
    %76 = arith.addf %71, %75 : vector<40x32xf32>
    %77 = vector.broadcast %22 : vector<40x1xf32> to vector<40x32xf32>
    %78 = arith.mulf %76, %77 : vector<40x32xf32>
    %c8_49 = arith.constant 8 : index
    %c0_50 = arith.constant 0 : index
    %79 = vector.load %arg35[%c8_49, %c0_50] : memref<48x32xf32, #tpu.memory_space<vmem>>, vector<40x32xf32>
    tpu.vector_store %arg35[%c8_49, %c0_50], %78 {strides = array<i32>} : memref<48x32xf32, #tpu.memory_space<vmem>>, vector<40x32xf32>,
    %c0_51 = arith.constant 0 : index
    %c0_52 = arith.constant 0 : index
    %c0_53 = arith.constant 0 : index
    %80 = vector.load %arg2[%c0_51, %c0_52, %c0_53] : memref<2x8x32xf32, #tpu.memory_space<vmem>>, vector<2x8x32xf32>
    %81 = vector.shape_cast %80 : vector<2x8x32xf32> to vector<16x32xf32>
    %82 = arith.truncf %81 : vector<16x32xf32> to vector<16x32xbf16>
    %c0_54 = arith.constant 0 : index
    %c0_55 = arith.constant 0 : index
    %c0_56 = arith.constant 0 : index
    %83 = vector.load %arg3[%c0_54, %c0_55, %c0_56] : memref<2x8x32xf32, #tpu.memory_space<vmem>>, vector<2x8x32xf32>
    %84 = vector.shape_cast %83 : vector<2x8x32xf32> to vector<16x32xf32>
    %85 = arith.truncf %84 : vector<16x32xf32> to vector<16x32xbf16>
    %c0_57 = arith.constant 0 : index
    %c0_58 = arith.constant 0 : index
    %86 = vector.load %arg11[%c0_57, %c0_58] : memref<1x32xf32, #tpu.memory_space<vmem>>, vector<1x32xf32>
    %c6_59 = arith.constant 6 : index
    %c0_60 = arith.constant 0 : index
    %87 = vector.load %arg35[%c6_59, %c0_60] : memref<48x32xf32, #tpu.memory_space<vmem>>, vector<40x32xf32>
    %88 = arith.truncf %87 : vector<40x32xf32> to vector<40x32xbf16>
    %c0_61 = arith.constant 0 : index
    %c0_62 = arith.constant 0 : index
    %89 = vector.load %arg10[%c0_61, %c0_62] : memref<96x32xbf16, #tpu.memory_space<vmem>>, vector<32x32xbf16>
    %cst_63 = arith.constant dense<0.000000e+00> : vector<40x32xf32>
    %90 = tpu.matmul %88, %89, %cst_63 {dimension_numbers = #tpu.dot_dimension_numbers<[1], [0], [0], [1], [0, 0, 1, 1], [], []>} : vector<40x32xbf16>, vector<32x32xbf16>, vector<40x32xf32> -> vector<40x32xf32>
    %91 = vector.broadcast %86 : vector<1x32xf32> to vector<40x32xf32>
    %92 = arith.addf %91, %90 : vector<40x32xf32>
    %c7_64 = arith.constant 7 : index
    %c0_65 = arith.constant 0 : index
    %93 = vector.load %arg35[%c7_64, %c0_65] : memref<48x32xf32, #tpu.memory_space<vmem>>, vector<40x32xf32>
    %94 = arith.truncf %93 : vector<40x32xf32> to vector<40x32xbf16>
    %c32_66 = arith.constant 32 : index
    %c0_67 = arith.constant 0 : index
    %95 = vector.load %arg10[%c32_66, %c0_67] : memref<96x32xbf16, #tpu.memory_space<vmem>>, vector<32x32xbf16>
    %cst_68 = arith.constant dense<0.000000e+00> : vector<40x32xf32>
    %96 = tpu.matmul %94, %95, %cst_68 {dimension_numbers = #tpu.dot_dimension_numbers<[1], [0], [0], [1], [0, 0, 1, 1], [], []>} : vector<40x32xbf16>, vector<32x32xbf16>, vector<40x32xf32> -> vector<40x32xf32>
    %97 = arith.addf %92, %96 : vector<40x32xf32>
    %c8_69 = arith.constant 8 : index
    %c0_70 = arith.constant 0 : index
    %98 = vector.load %arg35[%c8_69, %c0_70] : memref<48x32xf32, #tpu.memory_space<vmem>>, vector<40x32xf32>
    %99 = arith.truncf %98 : vector<40x32xf32> to vector<40x32xbf16>
    %c64_71 = arith.constant 64 : index
    %c0_72 = arith.constant 0 : index
    %100 = vector.load %arg10[%c64_71, %c0_72] : memref<96x32xbf16, #tpu.memory_space<vmem>>, vector<32x32xbf16>
    %cst_73 = arith.constant dense<0.000000e+00> : vector<40x32xf32>
    %101 = tpu.matmul %99, %100, %cst_73 {dimension_numbers = #tpu.dot_dimension_numbers<[1], [0], [0], [1], [0, 0, 1, 1], [], []>} : vector<40x32xbf16>, vector<32x32xbf16>, vector<40x32xf32> -> vector<40x32xf32>
    %102 = arith.addf %97, %101 : vector<40x32xf32>
    %cst_74 = arith.constant 0.000000e+00 : f32
    %103 = vector.broadcast %cst_74 : f32 to vector<40x32xf32>
    %104 = arith.maximumf %102, %103 : vector<40x32xf32>
    %c8_75 = arith.constant 8 : index
    %c0_76 = arith.constant 0 : index
    %105 = vector.load %arg35[%c8_75, %c0_76] : memref<48x32xf32, #tpu.memory_space<vmem>>, vector<40x32xf32>
    %106 = arith.addf %105, %104 : vector<40x32xf32>
    %cst_77 = arith.constant 0.707106769 : f32
    %107 = vector.broadcast %cst_77 : f32 to vector<40x32xf32>
    %108 = arith.mulf %106, %107 : vector<40x32xf32>
    %109 = vector.broadcast %22 : vector<40x1xf32> to vector<40x32xf32>
    %110 = arith.mulf %108, %109 : vector<40x32xf32>
    %c8_78 = arith.constant 8 : index
    %c0_79 = arith.constant 0 : index
    %111 = vector.load %arg35[%c8_78, %c0_79] : memref<48x32xf32, #tpu.memory_space<vmem>>, vector<40x32xf32>
    tpu.vector_store %arg35[%c8_78, %c0_79], %110 {strides = array<i32>} : memref<48x32xf32, #tpu.memory_space<vmem>>, vector<40x32xf32>,
    %c0_80 = arith.constant 0 : index
    %c0_81 = arith.constant 0 : index
    %112 = vector.load %arg13[%c0_80, %c0_81] : memref<1x32xf32, #tpu.memory_space<vmem>>, vector<1x32xf32>
    %c4_82 = arith.constant 4 : index
    %c0_83 = arith.constant 0 : index
    %113 = vector.load %arg35[%c4_82, %c0_83] : memref<48x32xf32, #tpu.memory_space<vmem>>, vector<40x32xf32>
    %114 = arith.truncf %113 : vector<40x32xf32> to vector<40x32xbf16>
    %c0_84 = arith.constant 0 : index
    %c0_85 = arith.constant 0 : index
    %115 = vector.load %arg12[%c0_84, %c0_85] : memref<96x32xbf16, #tpu.memory_space<vmem>>, vector<32x32xbf16>
    %cst_86 = arith.constant dense<0.000000e+00> : vector<40x32xf32>
    %116 = tpu.matmul %114, %115, %cst_86 {dimension_numbers = #tpu.dot_dimension_numbers<[1], [0], [0], [1], [0, 0, 1, 1], [], []>} : vector<40x32xbf16>, vector<32x32xbf16>, vector<40x32xf32> -> vector<40x32xf32>
    %117 = vector.broadcast %112 : vector<1x32xf32> to vector<40x32xf32>
    %118 = arith.addf %117, %116 : vector<40x32xf32>
    %c6_87 = arith.constant 6 : index
    %c0_88 = arith.constant 0 : index
    %119 = vector.load %arg35[%c6_87, %c0_88] : memref<48x32xf32, #tpu.memory_space<vmem>>, vector<40x32xf32>
    %120 = arith.truncf %119 : vector<40x32xf32> to vector<40x32xbf16>
    %c32_89 = arith.constant 32 : index
    %c0_90 = arith.constant 0 : index
    %121 = vector.load %arg12[%c32_89, %c0_90] : memref<96x32xbf16, #tpu.memory_space<vmem>>, vector<32x32xbf16>
    %cst_91 = arith.constant dense<0.000000e+00> : vector<40x32xf32>
    %122 = tpu.matmul %120, %121, %cst_91 {dimension_numbers = #tpu.dot_dimension_numbers<[1], [0], [0], [1], [0, 0, 1, 1], [], []>} : vector<40x32xbf16>, vector<32x32xbf16>, vector<40x32xf32> -> vector<40x32xf32>
    %123 = arith.addf %118, %122 : vector<40x32xf32>
    %c8_92 = arith.constant 8 : index
    %c0_93 = arith.constant 0 : index
    %124 = vector.load %arg35[%c8_92, %c0_93] : memref<48x32xf32, #tpu.memory_space<vmem>>, vector<40x32xf32>
    %125 = arith.truncf %124 : vector<40x32xf32> to vector<40x32xbf16>
    %c64_94 = arith.constant 64 : index
    %c0_95 = arith.constant 0 : index
    %126 = vector.load %arg12[%c64_94, %c0_95] : memref<96x32xbf16, #tpu.memory_space<vmem>>, vector<32x32xbf16>
    %cst_96 = arith.constant dense<0.000000e+00> : vector<40x32xf32>
    %127 = tpu.matmul %125, %126, %cst_96 {dimension_numbers = #tpu.dot_dimension_numbers<[1], [0], [0], [1], [0, 0, 1, 1], [], []>} : vector<40x32xbf16>, vector<32x32xbf16>, vector<40x32xf32> -> vector<40x32xf32>
    %128 = arith.addf %123, %127 : vector<40x32xf32>
    %cst_97 = arith.constant 0.000000e+00 : f32
    %129 = vector.broadcast %cst_97 : f32 to vector<40x32xf32>
    %130 = arith.maximumf %128, %129 : vector<40x32xf32>
    %c8_98 = arith.constant 8 : index
    %c0_99 = arith.constant 0 : index
    %131 = vector.load %arg35[%c8_98, %c0_99] : memref<48x32xf32, #tpu.memory_space<vmem>>, vector<40x32xf32>
    %132 = arith.addf %131, %130 : vector<40x32xf32>
    %cst_100 = arith.constant 0.707106769 : f32
    %133 = vector.broadcast %cst_100 : f32 to vector<40x32xf32>
    %134 = arith.mulf %132, %133 : vector<40x32xf32>
    %135 = vector.broadcast %22 : vector<40x1xf32> to vector<40x32xf32>
    %136 = arith.mulf %134, %135 : vector<40x32xf32>
    %c8_101 = arith.constant 8 : index
    %c0_102 = arith.constant 0 : index
    %137 = vector.load %arg35[%c8_101, %c0_102] : memref<48x32xf32, #tpu.memory_space<vmem>>, vector<40x32xf32>
    tpu.vector_store %arg35[%c8_101, %c0_102], %136 {strides = array<i32>} : memref<48x32xf32, #tpu.memory_space<vmem>>, vector<40x32xf32>,
    %c8_103 = arith.constant 8 : index
    %c0_104 = arith.constant 0 : index
    %138 = vector.load %arg35[%c8_103, %c0_104] : memref<48x32xf32, #tpu.memory_space<vmem>>, vector<40x32xf32>
    %139 = arith.truncf %138 : vector<40x32xf32> to vector<40x32xbf16>
    %c0_105 = arith.constant 0 : index
    %c0_106 = arith.constant 0 : index
    %140 = vector.load %arg14[%c0_105, %c0_106] : memref<32x32xbf16, #tpu.memory_space<vmem>>, vector<32x16xbf16>
    %cst_107 = arith.constant dense<0.000000e+00> : vector<40x16xf32>
    %141 = tpu.matmul %139, %140, %cst_107 {dimension_numbers = #tpu.dot_dimension_numbers<[1], [0], [0], [1], [0, 0, 1, 1], [], []>} : vector<40x32xbf16>, vector<32x16xbf16>, vector<40x16xf32> -> vector<40x16xf32>
    %c0_108 = arith.constant 0 : index
    %c0_109 = arith.constant 0 : index
    %142 = vector.load %arg15[%c0_108, %c0_109] : memref<1x32xf32, #tpu.memory_space<vmem>>, vector<1x16xf32>
    %143 = vector.broadcast %142 : vector<1x16xf32> to vector<40x16xf32>
    %144 = arith.addf %141, %143 : vector<40x16xf32>
    %c0_110 = arith.constant 0 : index
    %c0_111 = arith.constant 0 : index
    %145 = vector.load %arg16[%c0_110, %c0_111] : memref<32x32xbf16, #tpu.memory_space<vmem>>, vector<32x16xbf16>
    %cst_112 = arith.constant dense<0.000000e+00> : vector<16x16xf32>
    %146 = tpu.matmul %82, %145, %cst_112 {dimension_numbers = #tpu.dot_dimension_numbers<[1], [0], [0], [1], [0, 0, 1, 1], [], []>} : vector<16x32xbf16>, vector<32x16xbf16>, vector<16x16xf32> -> vector<16x16xf32>
    %c0_113 = arith.constant 0 : index
    %c0_114 = arith.constant 0 : index
    %147 = vector.load %arg17[%c0_113, %c0_114] : memref<1x32xf32, #tpu.memory_space<vmem>>, vector<1x16xf32>
    %148 = vector.broadcast %147 : vector<1x16xf32> to vector<16x16xf32>
    %149 = arith.addf %146, %148 : vector<16x16xf32>
    %c0_115 = arith.constant 0 : index
    %c0_116 = arith.constant 0 : index
    %150 = vector.load %arg18[%c0_115, %c0_116] : memref<32x32xbf16, #tpu.memory_space<vmem>>, vector<32x16xbf16>
    %cst_117 = arith.constant dense<0.000000e+00> : vector<16x16xf32>
    %151 = tpu.matmul %85, %150, %cst_117 {dimension_numbers = #tpu.dot_dimension_numbers<[1], [0], [0], [1], [0, 0, 1, 1], [], []>} : vector<16x32xbf16>, vector<32x16xbf16>, vector<16x16xf32> -> vector<16x16xf32>
    %c0_118 = arith.constant 0 : index
    %c0_119 = arith.constant 0 : index
    %152 = vector.load %arg19[%c0_118, %c0_119] : memref<1x32xf32, #tpu.memory_space<vmem>>, vector<1x16xf32>
    %153 = vector.broadcast %152 : vector<1x16xf32> to vector<16x16xf32>
    %154 = arith.addf %151, %153 : vector<16x16xf32>
    %c0_120 = arith.constant 0 : index
    %c16 = arith.constant 16 : index
    %155 = vector.load %arg14[%c0_120, %c16] : memref<32x32xbf16, #tpu.memory_space<vmem>>, vector<32x16xbf16>
    %cst_121 = arith.constant dense<0.000000e+00> : vector<40x16xf32>
    %156 = tpu.matmul %139, %155, %cst_121 {dimension_numbers = #tpu.dot_dimension_numbers<[1], [0], [0], [1], [0, 0, 1, 1], [], []>} : vector<40x32xbf16>, vector<32x16xbf16>, vector<40x16xf32> -> vector<40x16xf32>
    %c0_122 = arith.constant 0 : index
    %c16_123 = arith.constant 16 : index
    %157 = vector.load %arg15[%c0_122, %c16_123] : memref<1x32xf32, #tpu.memory_space<vmem>>, vector<1x16xf32>
    %158 = vector.broadcast %157 : vector<1x16xf32> to vector<40x16xf32>
    %159 = arith.addf %156, %158 : vector<40x16xf32>
    %c0_124 = arith.constant 0 : index
    %c16_125 = arith.constant 16 : index
    %160 = vector.load %arg16[%c0_124, %c16_125] : memref<32x32xbf16, #tpu.memory_space<vmem>>, vector<32x16xbf16>
    %cst_126 = arith.constant dense<0.000000e+00> : vector<16x16xf32>
    %161 = tpu.matmul %82, %160, %cst_126 {dimension_numbers = #tpu.dot_dimension_numbers<[1], [0], [0], [1], [0, 0, 1, 1], [], []>} : vector<16x32xbf16>, vector<32x16xbf16>, vector<16x16xf32> -> vector<16x16xf32>
    %c0_127 = arith.constant 0 : index
    %c16_128 = arith.constant 16 : index
    %162 = vector.load %arg17[%c0_127, %c16_128] : memref<1x32xf32, #tpu.memory_space<vmem>>, vector<1x16xf32>
    %163 = vector.broadcast %162 : vector<1x16xf32> to vector<16x16xf32>
    %164 = arith.addf %161, %163 : vector<16x16xf32>
    %c0_129 = arith.constant 0 : index
    %c16_130 = arith.constant 16 : index
    %165 = vector.load %arg18[%c0_129, %c16_130] : memref<32x32xbf16, #tpu.memory_space<vmem>>, vector<32x16xbf16>
    %cst_131 = arith.constant dense<0.000000e+00> : vector<16x16xf32>
    %166 = tpu.matmul %85, %165, %cst_131 {dimension_numbers = #tpu.dot_dimension_numbers<[1], [0], [0], [1], [0, 0, 1, 1], [], []>} : vector<16x32xbf16>, vector<32x16xbf16>, vector<16x16xf32> -> vector<16x16xf32>
    %c0_132 = arith.constant 0 : index
    %c16_133 = arith.constant 16 : index
    %167 = vector.load %arg19[%c0_132, %c16_133] : memref<1x32xf32, #tpu.memory_space<vmem>>, vector<1x16xf32>
    %168 = vector.broadcast %167 : vector<1x16xf32> to vector<16x16xf32>
    %169 = arith.addf %166, %168 : vector<16x16xf32>
    %170 = vector.extract_strided_slice %138 {offsets = [0, 0], sizes = [16, 32], strides = [1, 1]} : vector<40x32xf32> to vector<16x32xf32>
    %171 = vector.extract_strided_slice %144 {offsets = [0, 0], sizes = [16, 16], strides = [1, 1]} : vector<40x16xf32> to vector<16x16xf32>
    %172 = arith.truncf %171 : vector<16x16xf32> to vector<16x16xbf16>
    %173 = vector.extract_strided_slice %149 {offsets = [0, 0], sizes = [8, 16], strides = [1, 1]} : vector<16x16xf32> to vector<8x16xf32>
    %174 = arith.truncf %173 : vector<8x16xf32> to vector<8x16xbf16>
    %175 = vector.extract_strided_slice %154 {offsets = [0, 0], sizes = [8, 16], strides = [1, 1]} : vector<16x16xf32> to vector<8x16xf32>
    %176 = arith.truncf %175 : vector<8x16xf32> to vector<8x16xbf16>
    %cst_134 = arith.constant dense<0.000000e+00> : vector<16x8xf32>
    %177 = tpu.matmul %172, %174, %cst_134 {dimension_numbers = #tpu.dot_dimension_numbers<[1], [1], [0], [0], [0, 0, 1, 0], [], []>} : vector<16x16xbf16>, vector<8x16xbf16>, vector<16x8xf32> -> vector<16x8xf32>
    %cst_135 = arith.constant 2.500000e-01 : f32
    %178 = vector.broadcast %cst_135 : f32 to vector<16x8xf32>
    %179 = arith.mulf %177, %178 : vector<16x8xf32>
    %cst_136 = arith.constant dense<0xFF800000> : vector<16xf32>
    %180 = vector.multi_reduction <maximumf>, %179, %cst_136 [1] : vector<16x8xf32> to vector<16xf32>
    %181 = vector.shape_cast %180 : vector<16xf32> to vector<16x1xf32>
    %182 = vector.broadcast %181 : vector<16x1xf32> to vector<16x8xf32>
    %183 = arith.subf %179, %182 : vector<16x8xf32>
    %184 = math.exp %183 : vector<16x8xf32>
    %cst_137 = arith.constant dense<0.000000e+00> : vector<16xf32>
    %185 = vector.multi_reduction <add>, %184, %cst_137 [1] : vector<16x8xf32> to vector<16xf32>
    %186 = vector.shape_cast %185 : vector<16xf32> to vector<16x1xf32>
    %187 = tpu.reciprocal %186 {approx = true} : vector<16x1xf32> -> vector<16x1xf32>
    %188 = vector.broadcast %187 : vector<16x1xf32> to vector<16x8xf32>
    %189 = arith.mulf %184, %188 : vector<16x8xf32>
    %190 = arith.truncf %189 : vector<16x8xf32> to vector<16x8xbf16>
    %cst_138 = arith.constant dense<0.000000e+00> : vector<16x16xf32>
    %191 = tpu.matmul %190, %176, %cst_138 {dimension_numbers = #tpu.dot_dimension_numbers<[1], [0], [0], [1], [0, 0, 1, 1], [], []>} : vector<16x8xbf16>, vector<8x16xbf16>, vector<16x16xf32> -> vector<16x16xf32>
    %192 = vector.extract_strided_slice %159 {offsets = [0, 0], sizes = [16, 16], strides = [1, 1]} : vector<40x16xf32> to vector<16x16xf32>
    %193 = arith.truncf %192 : vector<16x16xf32> to vector<16x16xbf16>
    %194 = vector.extract_strided_slice %164 {offsets = [0, 0], sizes = [8, 16], strides = [1, 1]} : vector<16x16xf32> to vector<8x16xf32>
    %195 = arith.truncf %194 : vector<8x16xf32> to vector<8x16xbf16>
    %196 = vector.extract_strided_slice %169 {offsets = [0, 0], sizes = [8, 16], strides = [1, 1]} : vector<16x16xf32> to vector<8x16xf32>
    %197 = arith.truncf %196 : vector<8x16xf32> to vector<8x16xbf16>
    %cst_139 = arith.constant dense<0.000000e+00> : vector<16x8xf32>
    %198 = tpu.matmul %193, %195, %cst_139 {dimension_numbers = #tpu.dot_dimension_numbers<[1], [1], [0], [0], [0, 0, 1, 0], [], []>} : vector<16x16xbf16>, vector<8x16xbf16>, vector<16x8xf32> -> vector<16x8xf32>
    %cst_140 = arith.constant 2.500000e-01 : f32
    %199 = vector.broadcast %cst_140 : f32 to vector<16x8xf32>
    %200 = arith.mulf %198, %199 : vector<16x8xf32>
    %cst_141 = arith.constant dense<0xFF800000> : vector<16xf32>
    %201 = vector.multi_reduction <maximumf>, %200, %cst_141 [1] : vector<16x8xf32> to vector<16xf32>
    %202 = vector.shape_cast %201 : vector<16xf32> to vector<16x1xf32>
    %203 = vector.broadcast %202 : vector<16x1xf32> to vector<16x8xf32>
    %204 = arith.subf %200, %203 : vector<16x8xf32>
    %205 = math.exp %204 : vector<16x8xf32>
    %cst_142 = arith.constant dense<0.000000e+00> : vector<16xf32>
    %206 = vector.multi_reduction <add>, %205, %cst_142 [1] : vector<16x8xf32> to vector<16xf32>
    %207 = vector.shape_cast %206 : vector<16xf32> to vector<16x1xf32>
    %208 = tpu.reciprocal %207 {approx = true} : vector<16x1xf32> -> vector<16x1xf32>
    %209 = vector.broadcast %208 : vector<16x1xf32> to vector<16x8xf32>
    %210 = arith.mulf %205, %209 : vector<16x8xf32>
    %211 = arith.truncf %210 : vector<16x8xf32> to vector<16x8xbf16>
    %cst_143 = arith.constant dense<0.000000e+00> : vector<16x16xf32>
    %212 = tpu.matmul %211, %197, %cst_143 {dimension_numbers = #tpu.dot_dimension_numbers<[1], [0], [0], [1], [0, 0, 1, 1], [], []>} : vector<16x8xbf16>, vector<8x16xbf16>, vector<16x16xf32> -> vector<16x16xf32>
    %213 = tpu.concatenate %191, %212 in 1 : vector<16x16xf32>, vector<16x16xf32> -> vector<16x32xf32>
    %214 = arith.truncf %213 : vector<16x32xf32> to vector<16x32xbf16>
    %c0_144 = arith.constant 0 : index
    %c0_145 = arith.constant 0 : index
    %215 = vector.load %arg20[%c0_144, %c0_145] : memref<32x32xbf16, #tpu.memory_space<vmem>>, vector<32x32xbf16>
    %cst_146 = arith.constant dense<0.000000e+00> : vector<16x32xf32>
    %216 = tpu.matmul %214, %215, %cst_146 {dimension_numbers = #tpu.dot_dimension_numbers<[1], [0], [0], [1], [0, 0, 1, 1], [], []>} : vector<16x32xbf16>, vector<32x32xbf16>, vector<16x32xf32> -> vector<16x32xf32>
    %c0_147 = arith.constant 0 : index
    %c0_148 = arith.constant 0 : index
    %217 = vector.load %arg21[%c0_147, %c0_148] : memref<1x32xf32, #tpu.memory_space<vmem>>, vector<1x32xf32>
    %218 = vector.broadcast %217 : vector<1x32xf32> to vector<16x32xf32>
    %219 = arith.addf %216, %218 : vector<16x32xf32>
    %220 = arith.addf %170, %219 : vector<16x32xf32>
    %cst_149 = arith.constant 0.707106769 : f32
    %221 = vector.broadcast %cst_149 : f32 to vector<16x32xf32>
    %222 = arith.mulf %220, %221 : vector<16x32xf32>
    %c8_150 = arith.constant 8 : index
    %c0_151 = arith.constant 0 : index
    %223 = vector.load %arg35[%c8_150, %c0_151] : memref<48x32xf32, #tpu.memory_space<vmem>>, vector<16x32xf32>
    tpu.vector_store %arg35[%c8_150, %c0_151], %222 {strides = array<i32>} : memref<48x32xf32, #tpu.memory_space<vmem>>, vector<16x32xf32>,
    %224 = vector.shape_cast %189 : vector<16x8xf32> to vector<1x16x8xf32>
    %225 = vector.shape_cast %210 : vector<16x8xf32> to vector<1x16x8xf32>
    %226 = tpu.concatenate %224, %225 in 0 : vector<1x16x8xf32>, vector<1x16x8xf32> -> vector<2x16x8xf32>
    %c0_152 = arith.constant 0 : index
    %c0_153 = arith.constant 0 : index
    %c0_154 = arith.constant 0 : index
    %c0_155 = arith.constant 0 : index
    %227 = vector.load %arg34[%c0_152, %c0_153, %c0_154, %c0_155] : memref<2x2x16x8xf32, #tpu.memory_space<vmem>>, vector<1x2x16x8xf32>
    %228 = vector.shape_cast %227 : vector<1x2x16x8xf32> to vector<2x16x8xf32>
    %229 = vector.shape_cast %226 : vector<2x16x8xf32> to vector<1x2x16x8xf32>
    tpu.vector_store %arg34[%c0_152, %c0_153, %c0_154, %c0_155], %229 {strides = array<i32>} : memref<2x2x16x8xf32, #tpu.memory_space<vmem>>, vector<1x2x16x8xf32>,
    %230 = vector.extract_strided_slice %138 {offsets = [24, 0], sizes = [16, 32], strides = [1, 1]} : vector<40x32xf32> to vector<16x32xf32>
    %231 = vector.extract_strided_slice %144 {offsets = [24, 0], sizes = [16, 16], strides = [1, 1]} : vector<40x16xf32> to vector<16x16xf32>
    %232 = arith.truncf %231 : vector<16x16xf32> to vector<16x16xbf16>
    %233 = vector.extract_strided_slice %149 {offsets = [8, 0], sizes = [8, 16], strides = [1, 1]} : vector<16x16xf32> to vector<8x16xf32>
    %234 = arith.truncf %233 : vector<8x16xf32> to vector<8x16xbf16>
    %235 = vector.extract_strided_slice %154 {offsets = [8, 0], sizes = [8, 16], strides = [1, 1]} : vector<16x16xf32> to vector<8x16xf32>
    %236 = arith.truncf %235 : vector<8x16xf32> to vector<8x16xbf16>
    %cst_156 = arith.constant dense<0.000000e+00> : vector<16x8xf32>
    %237 = tpu.matmul %232, %234, %cst_156 {dimension_numbers = #tpu.dot_dimension_numbers<[1], [1], [0], [0], [0, 0, 1, 0], [], []>} : vector<16x16xbf16>, vector<8x16xbf16>, vector<16x8xf32> -> vector<16x8xf32>
    %cst_157 = arith.constant 2.500000e-01 : f32
    %238 = vector.broadcast %cst_157 : f32 to vector<16x8xf32>
    %239 = arith.mulf %237, %238 : vector<16x8xf32>
    %cst_158 = arith.constant dense<0xFF800000> : vector<16xf32>
    %240 = vector.multi_reduction <maximumf>, %239, %cst_158 [1] : vector<16x8xf32> to vector<16xf32>
    %241 = vector.shape_cast %240 : vector<16xf32> to vector<16x1xf32>
    %242 = vector.broadcast %241 : vector<16x1xf32> to vector<16x8xf32>
    %243 = arith.subf %239, %242 : vector<16x8xf32>
    %244 = math.exp %243 : vector<16x8xf32>
    %cst_159 = arith.constant dense<0.000000e+00> : vector<16xf32>
    %245 = vector.multi_reduction <add>, %244, %cst_159 [1] : vector<16x8xf32> to vector<16xf32>
    %246 = vector.shape_cast %245 : vector<16xf32> to vector<16x1xf32>
    %247 = tpu.reciprocal %246 {approx = true} : vector<16x1xf32> -> vector<16x1xf32>
    %248 = vector.broadcast %247 : vector<16x1xf32> to vector<16x8xf32>
    %249 = arith.mulf %244, %248 : vector<16x8xf32>
    %250 = arith.truncf %249 : vector<16x8xf32> to vector<16x8xbf16>
    %cst_160 = arith.constant dense<0.000000e+00> : vector<16x16xf32>
    %251 = tpu.matmul %250, %236, %cst_160 {dimension_numbers = #tpu.dot_dimension_numbers<[1], [0], [0], [1], [0, 0, 1, 1], [], []>} : vector<16x8xbf16>, vector<8x16xbf16>, vector<16x16xf32> -> vector<16x16xf32>
    %252 = vector.extract_strided_slice %159 {offsets = [24, 0], sizes = [16, 16], strides = [1, 1]} : vector<40x16xf32> to vector<16x16xf32>
    %253 = arith.truncf %252 : vector<16x16xf32> to vector<16x16xbf16>
    %254 = vector.extract_strided_slice %164 {offsets = [8, 0], sizes = [8, 16], strides = [1, 1]} : vector<16x16xf32> to vector<8x16xf32>
    %255 = arith.truncf %254 : vector<8x16xf32> to vector<8x16xbf16>
    %256 = vector.extract_strided_slice %169 {offsets = [8, 0], sizes = [8, 16], strides = [1, 1]} : vector<16x16xf32> to vector<8x16xf32>
    %257 = arith.truncf %256 : vector<8x16xf32> to vector<8x16xbf16>
    %cst_161 = arith.constant dense<0.000000e+00> : vector<16x8xf32>
    %258 = tpu.matmul %253, %255, %cst_161 {dimension_numbers = #tpu.dot_dimension_numbers<[1], [1], [0], [0], [0, 0, 1, 0], [], []>} : vector<16x16xbf16>, vector<8x16xbf16>, vector<16x8xf32> -> vector<16x8xf32>
    %cst_162 = arith.constant 2.500000e-01 : f32
    %259 = vector.broadcast %cst_162 : f32 to vector<16x8xf32>
    %260 = arith.mulf %258, %259 : vector<16x8xf32>
    %cst_163 = arith.constant dense<0xFF800000> : vector<16xf32>
    %261 = vector.multi_reduction <maximumf>, %260, %cst_163 [1] : vector<16x8xf32> to vector<16xf32>
    %262 = vector.shape_cast %261 : vector<16xf32> to vector<16x1xf32>
    %263 = vector.broadcast %262 : vector<16x1xf32> to vector<16x8xf32>
    %264 = arith.subf %260, %263 : vector<16x8xf32>
    %265 = math.exp %264 : vector<16x8xf32>
    %cst_164 = arith.constant dense<0.000000e+00> : vector<16xf32>
    %266 = vector.multi_reduction <add>, %265, %cst_164 [1] : vector<16x8xf32> to vector<16xf32>
    %267 = vector.shape_cast %266 : vector<16xf32> to vector<16x1xf32>
    %268 = tpu.reciprocal %267 {approx = true} : vector<16x1xf32> -> vector<16x1xf32>
    %269 = vector.broadcast %268 : vector<16x1xf32> to vector<16x8xf32>
    %270 = arith.mulf %265, %269 : vector<16x8xf32>
    %271 = arith.truncf %270 : vector<16x8xf32> to vector<16x8xbf16>
    %cst_165 = arith.constant dense<0.000000e+00> : vector<16x16xf32>
    %272 = tpu.matmul %271, %257, %cst_165 {dimension_numbers = #tpu.dot_dimension_numbers<[1], [0], [0], [1], [0, 0, 1, 1], [], []>} : vector<16x8xbf16>, vector<8x16xbf16>, vector<16x16xf32> -> vector<16x16xf32>
    %273 = tpu.concatenate %251, %272 in 1 : vector<16x16xf32>, vector<16x16xf32> -> vector<16x32xf32>
    %274 = arith.truncf %273 : vector<16x32xf32> to vector<16x32xbf16>
    %c0_166 = arith.constant 0 : index
    %c0_167 = arith.constant 0 : index
    %275 = vector.load %arg20[%c0_166, %c0_167] : memref<32x32xbf16, #tpu.memory_space<vmem>>, vector<32x32xbf16>
    %cst_168 = arith.constant dense<0.000000e+00> : vector<16x32xf32>
    %276 = tpu.matmul %274, %275, %cst_168 {dimension_numbers = #tpu.dot_dimension_numbers<[1], [0], [0], [1], [0, 0, 1, 1], [], []>} : vector<16x32xbf16>, vector<32x32xbf16>, vector<16x32xf32> -> vector<16x32xf32>
    %c0_169 = arith.constant 0 : index
    %c0_170 = arith.constant 0 : index
    %277 = vector.load %arg21[%c0_169, %c0_170] : memref<1x32xf32, #tpu.memory_space<vmem>>, vector<1x32xf32>
    %278 = vector.broadcast %277 : vector<1x32xf32> to vector<16x32xf32>
    %279 = arith.addf %276, %278 : vector<16x32xf32>
    %280 = arith.addf %230, %279 : vector<16x32xf32>
    %cst_171 = arith.constant 0.707106769 : f32
    %281 = vector.broadcast %cst_171 : f32 to vector<16x32xf32>
    %282 = arith.mulf %280, %281 : vector<16x32xf32>
    %c32_172 = arith.constant 32 : index
    %c0_173 = arith.constant 0 : index
    %283 = vector.load %arg35[%c32_172, %c0_173] : memref<48x32xf32, #tpu.memory_space<vmem>>, vector<16x32xf32>
    tpu.vector_store %arg35[%c32_172, %c0_173], %282 {strides = array<i32>} : memref<48x32xf32, #tpu.memory_space<vmem>>, vector<16x32xf32>,
    %284 = vector.shape_cast %249 : vector<16x8xf32> to vector<1x16x8xf32>
    %285 = vector.shape_cast %270 : vector<16x8xf32> to vector<1x16x8xf32>
    %286 = tpu.concatenate %284, %285 in 0 : vector<1x16x8xf32>, vector<1x16x8xf32> -> vector<2x16x8xf32>
    %c1 = arith.constant 1 : index
    %c0_174 = arith.constant 0 : index
    %c0_175 = arith.constant 0 : index
    %c0_176 = arith.constant 0 : index
    %287 = vector.load %arg34[%c1, %c0_174, %c0_175, %c0_176] : memref<2x2x16x8xf32, #tpu.memory_space<vmem>>, vector<1x2x16x8xf32>
    %288 = vector.shape_cast %287 : vector<1x2x16x8xf32> to vector<2x16x8xf32>
    %289 = vector.shape_cast %286 : vector<2x16x8xf32> to vector<1x2x16x8xf32>
    tpu.vector_store %arg34[%c1, %c0_174, %c0_175, %c0_176], %289 {strides = array<i32>} : memref<2x2x16x8xf32, #tpu.memory_space<vmem>>, vector<1x2x16x8xf32>,
    %c8_177 = arith.constant 8 : index
    %c0_178 = arith.constant 0 : index
    %290 = vector.load %arg35[%c8_177, %c0_178] : memref<48x32xf32, #tpu.memory_space<vmem>>, vector<40x32xf32>
    %291 = arith.truncf %290 : vector<40x32xf32> to vector<40x32xbf16>
    %c0_179 = arith.constant 0 : index
    %c0_180 = arith.constant 0 : index
    %292 = vector.load %arg22[%c0_179, %c0_180] : memref<32x32xbf16, #tpu.memory_space<vmem>>, vector<32x32xbf16>
    %cst_181 = arith.constant dense<0.000000e+00> : vector<40x32xf32>
    %293 = tpu.matmul %291, %292, %cst_181 {dimension_numbers = #tpu.dot_dimension_numbers<[1], [0], [0], [1], [0, 0, 1, 1], [], []>} : vector<40x32xbf16>, vector<32x32xbf16>, vector<40x32xf32> -> vector<40x32xf32>
    %c0_182 = arith.constant 0 : index
    %c0_183 = arith.constant 0 : index
    %294 = vector.load %arg23[%c0_182, %c0_183] : memref<1x32xf32, #tpu.memory_space<vmem>>, vector<1x32xf32>
    %295 = vector.broadcast %294 : vector<1x32xf32> to vector<40x32xf32>
    %296 = arith.addf %293, %295 : vector<40x32xf32>
    %cst_184 = arith.constant 0.000000e+00 : f32
    %297 = vector.broadcast %cst_184 : f32 to vector<40x32xf32>
    %298 = arith.maximumf %296, %297 : vector<40x32xf32>
    %299 = vector.broadcast %22 : vector<40x1xf32> to vector<40x32xf32>
    %300 = arith.mulf %298, %299 : vector<40x32xf32>
    %c8_185 = arith.constant 8 : index
    %c0_186 = arith.constant 0 : index
    %301 = vector.load %arg35[%c8_185, %c0_186] : memref<48x32xf32, #tpu.memory_space<vmem>>, vector<40x32xf32>
    tpu.vector_store %arg35[%c8_185, %c0_186], %300 {strides = array<i32>} : memref<48x32xf32, #tpu.memory_space<vmem>>, vector<40x32xf32>,
    %c0_187 = arith.constant 0 : index
    %c0_188 = arith.constant 0 : index
    %302 = vector.load %arg25[%c0_187, %c0_188] : memref<1x32xf32, #tpu.memory_space<vmem>>, vector<1x32xf32>
    %c6_189 = arith.constant 6 : index
    %c0_190 = arith.constant 0 : index
    %303 = vector.load %arg35[%c6_189, %c0_190] : memref<48x32xf32, #tpu.memory_space<vmem>>, vector<40x32xf32>
    %304 = arith.truncf %303 : vector<40x32xf32> to vector<40x32xbf16>
    %c0_191 = arith.constant 0 : index
    %c0_192 = arith.constant 0 : index
    %305 = vector.load %arg24[%c0_191, %c0_192] : memref<96x32xbf16, #tpu.memory_space<vmem>>, vector<32x32xbf16>
    %cst_193 = arith.constant dense<0.000000e+00> : vector<40x32xf32>
    %306 = tpu.matmul %304, %305, %cst_193 {dimension_numbers = #tpu.dot_dimension_numbers<[1], [0], [0], [1], [0, 0, 1, 1], [], []>} : vector<40x32xbf16>, vector<32x32xbf16>, vector<40x32xf32> -> vector<40x32xf32>
    %307 = vector.broadcast %302 : vector<1x32xf32> to vector<40x32xf32>
    %308 = arith.addf %307, %306 : vector<40x32xf32>
    %c7_194 = arith.constant 7 : index
    %c0_195 = arith.constant 0 : index
    %309 = vector.load %arg35[%c7_194, %c0_195] : memref<48x32xf32, #tpu.memory_space<vmem>>, vector<40x32xf32>
    %310 = arith.truncf %309 : vector<40x32xf32> to vector<40x32xbf16>
    %c32_196 = arith.constant 32 : index
    %c0_197 = arith.constant 0 : index
    %311 = vector.load %arg24[%c32_196, %c0_197] : memref<96x32xbf16, #tpu.memory_space<vmem>>, vector<32x32xbf16>
    %cst_198 = arith.constant dense<0.000000e+00> : vector<40x32xf32>
    %312 = tpu.matmul %310, %311, %cst_198 {dimension_numbers = #tpu.dot_dimension_numbers<[1], [0], [0], [1], [0, 0, 1, 1], [], []>} : vector<40x32xbf16>, vector<32x32xbf16>, vector<40x32xf32> -> vector<40x32xf32>
    %313 = arith.addf %308, %312 : vector<40x32xf32>
    %c8_199 = arith.constant 8 : index
    %c0_200 = arith.constant 0 : index
    %314 = vector.load %arg35[%c8_199, %c0_200] : memref<48x32xf32, #tpu.memory_space<vmem>>, vector<40x32xf32>
    %315 = arith.truncf %314 : vector<40x32xf32> to vector<40x32xbf16>
    %c64_201 = arith.constant 64 : index
    %c0_202 = arith.constant 0 : index
    %316 = vector.load %arg24[%c64_201, %c0_202] : memref<96x32xbf16, #tpu.memory_space<vmem>>, vector<32x32xbf16>
    %cst_203 = arith.constant dense<0.000000e+00> : vector<40x32xf32>
    %317 = tpu.matmul %315, %316, %cst_203 {dimension_numbers = #tpu.dot_dimension_numbers<[1], [0], [0], [1], [0, 0, 1, 1], [], []>} : vector<40x32xbf16>, vector<32x32xbf16>, vector<40x32xf32> -> vector<40x32xf32>
    %318 = arith.addf %313, %317 : vector<40x32xf32>
    %319 = vector.broadcast %22 : vector<40x1xf32> to vector<40x32xf32>
    %320 = arith.mulf %318, %319 : vector<40x32xf32>
    %c8_204 = arith.constant 8 : index
    %c0_205 = arith.constant 0 : index
    %321 = vector.load %arg35[%c8_204, %c0_205] : memref<48x32xf32, #tpu.memory_space<vmem>>, vector<40x32xf32>
    tpu.vector_store %arg35[%c8_204, %c0_205], %320 {strides = array<i32>} : memref<48x32xf32, #tpu.memory_space<vmem>>, vector<40x32xf32>,
    %c0_206 = arith.constant 0 : index
    %c0_207 = arith.constant 0 : index
    %322 = vector.load %arg27[%c0_206, %c0_207] : memref<1x32xf32, #tpu.memory_space<vmem>>, vector<1x32xf32>
    %c4_208 = arith.constant 4 : index
    %c0_209 = arith.constant 0 : index
    %323 = vector.load %arg35[%c4_208, %c0_209] : memref<48x32xf32, #tpu.memory_space<vmem>>, vector<40x32xf32>
    %324 = arith.truncf %323 : vector<40x32xf32> to vector<40x32xbf16>
    %c0_210 = arith.constant 0 : index
    %c0_211 = arith.constant 0 : index
    %325 = vector.load %arg26[%c0_210, %c0_211] : memref<96x32xbf16, #tpu.memory_space<vmem>>, vector<32x32xbf16>
    %cst_212 = arith.constant dense<0.000000e+00> : vector<40x32xf32>
    %326 = tpu.matmul %324, %325, %cst_212 {dimension_numbers = #tpu.dot_dimension_numbers<[1], [0], [0], [1], [0, 0, 1, 1], [], []>} : vector<40x32xbf16>, vector<32x32xbf16>, vector<40x32xf32> -> vector<40x32xf32>
    %327 = vector.broadcast %322 : vector<1x32xf32> to vector<40x32xf32>
    %328 = arith.addf %327, %326 : vector<40x32xf32>
    %c6_213 = arith.constant 6 : index
    %c0_214 = arith.constant 0 : index
    %329 = vector.load %arg35[%c6_213, %c0_214] : memref<48x32xf32, #tpu.memory_space<vmem>>, vector<40x32xf32>
    %330 = arith.truncf %329 : vector<40x32xf32> to vector<40x32xbf16>
    %c32_215 = arith.constant 32 : index
    %c0_216 = arith.constant 0 : index
    %331 = vector.load %arg26[%c32_215, %c0_216] : memref<96x32xbf16, #tpu.memory_space<vmem>>, vector<32x32xbf16>
    %cst_217 = arith.constant dense<0.000000e+00> : vector<40x32xf32>
    %332 = tpu.matmul %330, %331, %cst_217 {dimension_numbers = #tpu.dot_dimension_numbers<[1], [0], [0], [1], [0, 0, 1, 1], [], []>} : vector<40x32xbf16>, vector<32x32xbf16>, vector<40x32xf32> -> vector<40x32xf32>
    %333 = arith.addf %328, %332 : vector<40x32xf32>
    %c8_218 = arith.constant 8 : index
    %c0_219 = arith.constant 0 : index
    %334 = vector.load %arg35[%c8_218, %c0_219] : memref<48x32xf32, #tpu.memory_space<vmem>>, vector<40x32xf32>
    %335 = arith.truncf %334 : vector<40x32xf32> to vector<40x32xbf16>
    %c64_220 = arith.constant 64 : index
    %c0_221 = arith.constant 0 : index
    %336 = vector.load %arg26[%c64_220, %c0_221] : memref<96x32xbf16, #tpu.memory_space<vmem>>, vector<32x32xbf16>
    %cst_222 = arith.constant dense<0.000000e+00> : vector<40x32xf32>
    %337 = tpu.matmul %335, %336, %cst_222 {dimension_numbers = #tpu.dot_dimension_numbers<[1], [0], [0], [1], [0, 0, 1, 1], [], []>} : vector<40x32xbf16>, vector<32x32xbf16>, vector<40x32xf32> -> vector<40x32xf32>
    %338 = arith.addf %333, %337 : vector<40x32xf32>
    %339 = vector.broadcast %22 : vector<40x1xf32> to vector<40x32xf32>
    %340 = arith.mulf %338, %339 : vector<40x32xf32>
    %c8_223 = arith.constant 8 : index
    %c0_224 = arith.constant 0 : index
    %341 = vector.load %arg35[%c8_223, %c0_224] : memref<48x32xf32, #tpu.memory_space<vmem>>, vector<40x32xf32>
    tpu.vector_store %arg35[%c8_223, %c0_224], %340 {strides = array<i32>} : memref<48x32xf32, #tpu.memory_space<vmem>>, vector<40x32xf32>,
    %c0_225 = arith.constant 0 : index
    %c0_226 = arith.constant 0 : index
    %342 = vector.load %arg29[%c0_225, %c0_226] : memref<1x32xf32, #tpu.memory_space<vmem>>, vector<1x32xf32>
    %c6_227 = arith.constant 6 : index
    %c0_228 = arith.constant 0 : index
    %343 = vector.load %arg35[%c6_227, %c0_228] : memref<48x32xf32, #tpu.memory_space<vmem>>, vector<40x32xf32>
    %344 = arith.truncf %343 : vector<40x32xf32> to vector<40x32xbf16>
    %c0_229 = arith.constant 0 : index
    %c0_230 = arith.constant 0 : index
    %345 = vector.load %arg28[%c0_229, %c0_230] : memref<96x32xbf16, #tpu.memory_space<vmem>>, vector<32x32xbf16>
    %cst_231 = arith.constant dense<0.000000e+00> : vector<40x32xf32>
    %346 = tpu.matmul %344, %345, %cst_231 {dimension_numbers = #tpu.dot_dimension_numbers<[1], [0], [0], [1], [0, 0, 1, 1], [], []>} : vector<40x32xbf16>, vector<32x32xbf16>, vector<40x32xf32> -> vector<40x32xf32>
    %347 = vector.broadcast %342 : vector<1x32xf32> to vector<40x32xf32>
    %348 = arith.addf %347, %346 : vector<40x32xf32>
    %c7_232 = arith.constant 7 : index
    %c0_233 = arith.constant 0 : index
    %349 = vector.load %arg35[%c7_232, %c0_233] : memref<48x32xf32, #tpu.memory_space<vmem>>, vector<40x32xf32>
    %350 = arith.truncf %349 : vector<40x32xf32> to vector<40x32xbf16>
    %c32_234 = arith.constant 32 : index
    %c0_235 = arith.constant 0 : index
    %351 = vector.load %arg28[%c32_234, %c0_235] : memref<96x32xbf16, #tpu.memory_space<vmem>>, vector<32x32xbf16>
    %cst_236 = arith.constant dense<0.000000e+00> : vector<40x32xf32>
    %352 = tpu.matmul %350, %351, %cst_236 {dimension_numbers = #tpu.dot_dimension_numbers<[1], [0], [0], [1], [0, 0, 1, 1], [], []>} : vector<40x32xbf16>, vector<32x32xbf16>, vector<40x32xf32> -> vector<40x32xf32>
    %353 = arith.addf %348, %352 : vector<40x32xf32>
    %c8_237 = arith.constant 8 : index
    %c0_238 = arith.constant 0 : index
    %354 = vector.load %arg35[%c8_237, %c0_238] : memref<48x32xf32, #tpu.memory_space<vmem>>, vector<40x32xf32>
    %355 = arith.truncf %354 : vector<40x32xf32> to vector<40x32xbf16>
    %c64_239 = arith.constant 64 : index
    %c0_240 = arith.constant 0 : index
    %356 = vector.load %arg28[%c64_239, %c0_240] : memref<96x32xbf16, #tpu.memory_space<vmem>>, vector<32x32xbf16>
    %cst_241 = arith.constant dense<0.000000e+00> : vector<40x32xf32>
    %357 = tpu.matmul %355, %356, %cst_241 {dimension_numbers = #tpu.dot_dimension_numbers<[1], [0], [0], [1], [0, 0, 1, 1], [], []>} : vector<40x32xbf16>, vector<32x32xbf16>, vector<40x32xf32> -> vector<40x32xf32>
    %358 = arith.addf %353, %357 : vector<40x32xf32>
    %cst_242 = arith.constant 0.000000e+00 : f32
    %359 = vector.broadcast %cst_242 : f32 to vector<40x32xf32>
    %360 = arith.maximumf %358, %359 : vector<40x32xf32>
    %361 = vector.broadcast %22 : vector<40x1xf32> to vector<40x32xf32>
    %362 = arith.mulf %360, %361 : vector<40x32xf32>
    %c8_243 = arith.constant 8 : index
    %c0_244 = arith.constant 0 : index
    %363 = vector.load %arg35[%c8_243, %c0_244] : memref<48x32xf32, #tpu.memory_space<vmem>>, vector<40x32xf32>
    tpu.vector_store %arg35[%c8_243, %c0_244], %362 {strides = array<i32>} : memref<48x32xf32, #tpu.memory_space<vmem>>, vector<40x32xf32>,
    %c8_245 = arith.constant 8 : index
    %c0_246 = arith.constant 0 : index
    %364 = vector.load %arg35[%c8_245, %c0_246] : memref<48x32xf32, #tpu.memory_space<vmem>>, vector<40x32xf32>
    %365 = arith.truncf %364 : vector<40x32xf32> to vector<40x32xbf16>
    %c0_247 = arith.constant 0 : index
    %c0_248 = arith.constant 0 : index
    %366 = vector.load %arg30[%c0_247, %c0_248] : memref<32x9xbf16, #tpu.memory_space<vmem>>, vector<32x9xbf16>
    %cst_249 = arith.constant dense<0.000000e+00> : vector<40x9xf32>
    %367 = tpu.matmul %365, %366, %cst_249 {dimension_numbers = #tpu.dot_dimension_numbers<[1], [0], [0], [1], [0, 0, 1, 1], [], []>} : vector<40x32xbf16>, vector<32x9xbf16>, vector<40x9xf32> -> vector<40x9xf32>
    %c0_250 = arith.constant 0 : index
    %c0_251 = arith.constant 0 : index
    %368 = vector.load %arg31[%c0_250, %c0_251] : memref<1x9xf32, #tpu.memory_space<vmem>>, vector<1x9xf32>
    %369 = vector.broadcast %368 : vector<1x9xf32> to vector<40x9xf32>
    %370 = arith.addf %367, %369 : vector<40x9xf32>
    %371 = arith.negf %370 : vector<40x9xf32>
    %372 = math.exp %371 : vector<40x9xf32>
    %cst_252 = arith.constant 1.000000e+00 : f32
    %373 = vector.broadcast %cst_252 : f32 to vector<40x9xf32>
    %374 = arith.addf %373, %372 : vector<40x9xf32>
    %375 = arith.divf %373, %374 : vector<40x9xf32>
    %376 = vector.extract_strided_slice %364 {offsets = [0, 0], sizes = [16, 32], strides = [1, 1]} : vector<40x32xf32> to vector<16x32xf32>
    %c0_253 = arith.constant 0 : index
    %c0_254 = arith.constant 0 : index
    %c0_255 = arith.constant 0 : index
    %377 = vector.load %arg33[%c0_253, %c0_254, %c0_255] : memref<2x16x32xf32, #tpu.memory_space<vmem>>, vector<1x16x32xf32>
    %378 = vector.shape_cast %377 : vector<1x16x32xf32> to vector<16x32xf32>
    %379 = vector.shape_cast %376 : vector<16x32xf32> to vector<1x16x32xf32>
    tpu.vector_store %arg33[%c0_253, %c0_254, %c0_255], %379 {strides = array<i32>} : memref<2x16x32xf32, #tpu.memory_space<vmem>>, vector<1x16x32xf32>,
    %380 = vector.extract_strided_slice %375 {offsets = [0, 0], sizes = [16, 9], strides = [1, 1]} : vector<40x9xf32> to vector<16x9xf32>
    %c0_256 = arith.constant 0 : index
    %c0_257 = arith.constant 0 : index
    %c0_258 = arith.constant 0 : index
    %381 = vector.load %arg32[%c0_256, %c0_257, %c0_258] : memref<2x16x9xf32, #tpu.memory_space<vmem>>, vector<1x16x9xf32>
    %382 = vector.shape_cast %381 : vector<1x16x9xf32> to vector<16x9xf32>
    %383 = vector.shape_cast %380 : vector<16x9xf32> to vector<1x16x9xf32>
    tpu.vector_store %arg32[%c0_256, %c0_257, %c0_258], %383 {strides = array<i32>} : memref<2x16x9xf32, #tpu.memory_space<vmem>>, vector<1x16x9xf32>,
    %384 = vector.extract_strided_slice %364 {offsets = [24, 0], sizes = [16, 32], strides = [1, 1]} : vector<40x32xf32> to vector<16x32xf32>
    %c1_259 = arith.constant 1 : index
    %c0_260 = arith.constant 0 : index
    %c0_261 = arith.constant 0 : index
    %385 = vector.load %arg33[%c1_259, %c0_260, %c0_261] : memref<2x16x32xf32, #tpu.memory_space<vmem>>, vector<1x16x32xf32>
    %386 = vector.shape_cast %385 : vector<1x16x32xf32> to vector<16x32xf32>
    %387 = vector.shape_cast %384 : vector<16x32xf32> to vector<1x16x32xf32>
    tpu.vector_store %arg33[%c1_259, %c0_260, %c0_261], %387 {strides = array<i32>} : memref<2x16x32xf32, #tpu.memory_space<vmem>>, vector<1x16x32xf32>,
    %388 = vector.extract_strided_slice %375 {offsets = [24, 0], sizes = [16, 9], strides = [1, 1]} : vector<40x9xf32> to vector<16x9xf32>
    %c1_262 = arith.constant 1 : index
    %c0_263 = arith.constant 0 : index
    %c0_264 = arith.constant 0 : index
    %389 = vector.load %arg32[%c1_262, %c0_263, %c0_264] : memref<2x16x9xf32, #tpu.memory_space<vmem>>, vector<1x16x9xf32>
    %390 = vector.shape_cast %389 : vector<1x16x9xf32> to vector<16x9xf32>
    %391 = vector.shape_cast %388 : vector<16x9xf32> to vector<1x16x9xf32>
    tpu.vector_store %arg32[%c1_262, %c0_263, %c0_264], %391 {strides = array<i32>} : memref<2x16x9xf32, #tpu.memory_space<vmem>>, vector<1x16x9xf32>,
    return
  }
  func.func @transform_0(%arg0: i32) -> (i32, i32, i32) {
    %c0_i32 = arith.constant 0 : i32
    %c0_i32_0 = arith.constant 0 : i32
    %c0_i32_1 = arith.constant 0 : i32
    return %arg0, %c0_i32, %c0_i32_0 : i32, i32, i32
  }
  func.func @transform_1(%arg0: i32) -> (i32, i32, i32) {
    %c0_i32 = arith.constant 0 : i32
    %c0_i32_0 = arith.constant 0 : i32
    %c0_i32_1 = arith.constant 0 : i32
    return %arg0, %c0_i32, %c0_i32_0 : i32, i32, i32
  }
  func.func @transform_2(%arg0: i32) -> (i32, i32, i32) {
    %c0_i32 = arith.constant 0 : i32
    %c0_i32_0 = arith.constant 0 : i32
    %c0_i32_1 = arith.constant 0 : i32
    return %arg0, %c0_i32, %c0_i32_0 : i32, i32, i32
  }
  func.func @transform_3(%arg0: i32) -> (i32, i32) {
    %c0_i32 = arith.constant 0 : i32
    %c0_i32_0 = arith.constant 0 : i32
    %c0_i32_1 = arith.constant 0 : i32
    return %c0_i32, %c0_i32_0 : i32, i32
  }
  func.func @transform_4(%arg0: i32) -> (i32, i32) {
    %c0_i32 = arith.constant 0 : i32
    %c0_i32_0 = arith.constant 0 : i32
    %c0_i32_1 = arith.constant 0 : i32
    return %c0_i32, %c0_i32_0 : i32, i32
  }
  func.func @transform_5(%arg0: i32) -> (i32, i32) {
    %c0_i32 = arith.constant 0 : i32
    %c0_i32_0 = arith.constant 0 : i32
    %c0_i32_1 = arith.constant 0 : i32
    return %c0_i32, %c0_i32_0 : i32, i32
  }
  func.func @transform_6(%arg0: i32) -> (i32, i32) {
    %c0_i32 = arith.constant 0 : i32
    %c0_i32_0 = arith.constant 0 : i32
    %c0_i32_1 = arith.constant 0 : i32
    return %c0_i32, %c0_i32_0 : i32, i32
  }
  func.func @transform_7(%arg0: i32) -> (i32, i32) {
    %c0_i32 = arith.constant 0 : i32
    %c0_i32_0 = arith.constant 0 : i32
    %c0_i32_1 = arith.constant 0 : i32
    return %c0_i32, %c0_i32_0 : i32, i32
  }
  func.func @transform_8(%arg0: i32) -> (i32, i32) {
    %c0_i32 = arith.constant 0 : i32
    %c0_i32_0 = arith.constant 0 : i32
    %c0_i32_1 = arith.constant 0 : i32
    return %c0_i32, %c0_i32_0 : i32, i32
  }
  func.func @transform_9(%arg0: i32) -> (i32, i32) {
    %c0_i32 = arith.constant 0 : i32
    %c0_i32_0 = arith.constant 0 : i32
    %c0_i32_1 = arith.constant 0 : i32
    return %c0_i32, %c0_i32_0 : i32, i32
  }
  func.func @transform_10(%arg0: i32) -> (i32, i32) {
    %c0_i32 = arith.constant 0 : i32
    %c0_i32_0 = arith.constant 0 : i32
    %c0_i32_1 = arith.constant 0 : i32
    return %c0_i32, %c0_i32_0 : i32, i32
  }
  func.func @transform_11(%arg0: i32) -> (i32, i32) {
    %c0_i32 = arith.constant 0 : i32
    %c0_i32_0 = arith.constant 0 : i32
    %c0_i32_1 = arith.constant 0 : i32
    return %c0_i32, %c0_i32_0 : i32, i32
  }
  func.func @transform_12(%arg0: i32) -> (i32, i32) {
    %c0_i32 = arith.constant 0 : i32
    %c0_i32_0 = arith.constant 0 : i32
    %c0_i32_1 = arith.constant 0 : i32
    return %c0_i32, %c0_i32_0 : i32, i32
  }
  func.func @transform_13(%arg0: i32) -> (i32, i32) {
    %c0_i32 = arith.constant 0 : i32
    %c0_i32_0 = arith.constant 0 : i32
    %c0_i32_1 = arith.constant 0 : i32
    return %c0_i32, %c0_i32_0 : i32, i32
  }
  func.func @transform_14(%arg0: i32) -> (i32, i32) {
    %c0_i32 = arith.constant 0 : i32
    %c0_i32_0 = arith.constant 0 : i32
    %c0_i32_1 = arith.constant 0 : i32
    return %c0_i32, %c0_i32_0 : i32, i32
  }
  func.func @transform_15(%arg0: i32) -> (i32, i32) {
    %c0_i32 = arith.constant 0 : i32
    %c0_i32_0 = arith.constant 0 : i32
    %c0_i32_1 = arith.constant 0 : i32
    return %c0_i32, %c0_i32_0 : i32, i32
  }
  func.func @transform_16(%arg0: i32) -> (i32, i32) {
    %c0_i32 = arith.constant 0 : i32
    %c0_i32_0 = arith.constant 0 : i32
    %c0_i32_1 = arith.constant 0 : i32
    return %c0_i32, %c0_i32_0 : i32, i32
  }
  func.func @transform_17(%arg0: i32) -> (i32, i32) {
    %c0_i32 = arith.constant 0 : i32
    %c0_i32_0 = arith.constant 0 : i32
    %c0_i32_1 = arith.constant 0 : i32
    return %c0_i32, %c0_i32_0 : i32, i32
  }
  func.func @transform_18(%arg0: i32) -> (i32, i32) {
    %c0_i32 = arith.constant 0 : i32
    %c0_i32_0 = arith.constant 0 : i32
    %c0_i32_1 = arith.constant 0 : i32
    return %c0_i32, %c0_i32_0 : i32, i32
  }
  func.func @transform_19(%arg0: i32) -> (i32, i32) {
    %c0_i32 = arith.constant 0 : i32
    %c0_i32_0 = arith.constant 0 : i32
    %c0_i32_1 = arith.constant 0 : i32
    return %c0_i32, %c0_i32_0 : i32, i32
  }
  func.func @transform_20(%arg0: i32) -> (i32, i32) {
    %c0_i32 = arith.constant 0 : i32
    %c0_i32_0 = arith.constant 0 : i32
    %c0_i32_1 = arith.constant 0 : i32
    return %c0_i32, %c0_i32_0 : i32, i32
  }
  func.func @transform_21(%arg0: i32) -> (i32, i32) {
    %c0_i32 = arith.constant 0 : i32
    %c0_i32_0 = arith.constant 0 : i32
    %c0_i32_1 = arith.constant 0 : i32
    return %c0_i32, %c0_i32_0 : i32, i32
  }
  func.func @transform_22(%arg0: i32) -> (i32, i32) {
    %c0_i32 = arith.constant 0 : i32
    %c0_i32_0 = arith.constant 0 : i32
    %c0_i32_1 = arith.constant 0 : i32
    return %c0_i32, %c0_i32_0 : i32, i32
  }
  func.func @transform_23(%arg0: i32) -> (i32, i32) {
    %c0_i32 = arith.constant 0 : i32
    %c0_i32_0 = arith.constant 0 : i32
    %c0_i32_1 = arith.constant 0 : i32
    return %c0_i32, %c0_i32_0 : i32, i32
  }
  func.func @transform_24(%arg0: i32) -> (i32, i32) {
    %c0_i32 = arith.constant 0 : i32
    %c0_i32_0 = arith.constant 0 : i32
    %c0_i32_1 = arith.constant 0 : i32
    return %c0_i32, %c0_i32_0 : i32, i32
  }
  func.func @transform_25(%arg0: i32) -> (i32, i32) {
    %c0_i32 = arith.constant 0 : i32
    %c0_i32_0 = arith.constant 0 : i32
    %c0_i32_1 = arith.constant 0 : i32
    return %c0_i32, %c0_i32_0 : i32, i32
  }
  func.func @transform_26(%arg0: i32) -> (i32, i32) {
    %c0_i32 = arith.constant 0 : i32
    %c0_i32_0 = arith.constant 0 : i32
    %c0_i32_1 = arith.constant 0 : i32
    return %c0_i32, %c0_i32_0 : i32, i32
  }
  func.func @transform_27(%arg0: i32) -> (i32, i32) {
    %c0_i32 = arith.constant 0 : i32
    %c0_i32_0 = arith.constant 0 : i32
    %c0_i32_1 = arith.constant 0 : i32
    return %c0_i32, %c0_i32_0 : i32, i32
  }
  func.func @transform_28(%arg0: i32) -> (i32, i32) {
    %c0_i32 = arith.constant 0 : i32
    %c0_i32_0 = arith.constant 0 : i32
    %c0_i32_1 = arith.constant 0 : i32
    return %c0_i32, %c0_i32_0 : i32, i32
  }
  func.func @transform_29(%arg0: i32) -> (i32, i32) {
    %c0_i32 = arith.constant 0 : i32
    %c0_i32_0 = arith.constant 0 : i32
    %c0_i32_1 = arith.constant 0 : i32
    return %c0_i32, %c0_i32_0 : i32, i32
  }
  func.func @transform_30(%arg0: i32) -> (i32, i32) {
    %c0_i32 = arith.constant 0 : i32
    %c0_i32_0 = arith.constant 0 : i32
    %c0_i32_1 = arith.constant 0 : i32
    return %c0_i32, %c0_i32_0 : i32, i32
  }
  func.func @transform_31(%arg0: i32) -> (i32, i32, i32) {
    %c0_i32 = arith.constant 0 : i32
    %c0_i32_0 = arith.constant 0 : i32
    %c0_i32_1 = arith.constant 0 : i32
    return %arg0, %c0_i32, %c0_i32_0 : i32, i32, i32
  }
  func.func @transform_32(%arg0: i32) -> (i32, i32, i32) {
    %c0_i32 = arith.constant 0 : i32
    %c0_i32_0 = arith.constant 0 : i32
    %c0_i32_1 = arith.constant 0 : i32
    return %arg0, %c0_i32, %c0_i32_0 : i32, i32, i32
  }
  func.func @transform_33(%arg0: i32) -> (i32, i32, i32, i32) {
    %c0_i32 = arith.constant 0 : i32
    %c0_i32_0 = arith.constant 0 : i32
    %c0_i32_1 = arith.constant 0 : i32
    %c0_i32_2 = arith.constant 0 : i32
    return %arg0, %c0_i32, %c0_i32_0, %c0_i32_1 : i32, i32, i32, i32
  }
}

</mosaic_0001>

<llo_original>
// kernel: decoder_forward.1
$region0: #{decoder_forward.1}
  #allocation0 [shape = 'u32[]', space=smem, size = 0x4, offset = 0x4, fixed_abs, tag = 'smem constant byte address 0x4 - core index']
  #allocation1 [shape = 'u32[72,128]{1,0:T(1,128)}', space=vmem, size = 0x9000, scoped, tag = 'internal scratch']
  #allocation2 [shape = 'f32[48,32]{1,0:T(8,128)}', space=vmem, size = 0x6000, scoped, tag = 'scratch operand']
  %s0 = inlined_call_operand.smem [shape: u32[34], index: -1, kind: input, shape index: {}]
  %s1 = sld [smem:[%s0]]
  %s2 = scalar_lea.smem %s0, 1
  %s3 = sld [smem:[%s2]]
  %s4 = scalar_lea.smem %s0, 2
  %s5 = sld [smem:[%s4]]
  %s6 = scalar_lea.smem %s0, 3
  %s7 = sld [smem:[%s6]]
  %s8 = scalar_lea.smem %s0, 4
  %s9 = sld [smem:[%s8]]
  %s10 = scalar_lea.smem %s0, 5
  %s11 = sld [smem:[%s10]]
  %s12 = scalar_lea.smem %s0, 6
  %s13 = sld [smem:[%s12]]
  %s14 = scalar_lea.smem %s0, 7
  %s15 = sld [smem:[%s14]]
  %s16 = scalar_lea.smem %s0, 8
  %s17 = sld [smem:[%s16]]
  %s18 = scalar_lea.smem %s0, 9
  %s19 = sld [smem:[%s18]]
  %s20 = scalar_lea.smem %s0, 10
  %s21 = sld [smem:[%s20]]
  %s22 = scalar_lea.smem %s0, 11
  %s23 = sld [smem:[%s22]]
  %s24 = scalar_lea.smem %s0, 12
  %s25 = sld [smem:[%s24]]
  %s26 = scalar_lea.smem %s0, 13
  %s27 = sld [smem:[%s26]]
  %s28 = scalar_lea.smem %s0, 14
  %s29 = sld [smem:[%s28]]
  %s30 = scalar_lea.smem %s0, 15
  %s31 = sld [smem:[%s30]]
  %s32 = scalar_lea.smem %s0, 16
  %s33 = sld [smem:[%s32]]
  %s34 = scalar_lea.smem %s0, 17
  %s35 = sld [smem:[%s34]]
  %s36 = scalar_lea.smem %s0, 18
  %s37 = sld [smem:[%s36]]
  %s38 = scalar_lea.smem %s0, 19
  %s39 = sld [smem:[%s38]]
  %s40 = scalar_lea.smem %s0, 20
  %s41 = sld [smem:[%s40]]
  %s42 = scalar_lea.smem %s0, 21
  %s43 = sld [smem:[%s42]]
  %s44 = scalar_lea.smem %s0, 22
  %s45 = sld [smem:[%s44]]
  %s46 = scalar_lea.smem %s0, 23
  %s47 = sld [smem:[%s46]]
  %s48 = scalar_lea.smem %s0, 24
  %s49 = sld [smem:[%s48]]
  %s50 = scalar_lea.smem %s0, 25
  %s51 = sld [smem:[%s50]]
  %s52 = scalar_lea.smem %s0, 26
  %s53 = sld [smem:[%s52]]
  %s54 = scalar_lea.smem %s0, 27
  %s55 = sld [smem:[%s54]]
  %s56 = scalar_lea.smem %s0, 28
  %s57 = sld [smem:[%s56]]
  %s58 = scalar_lea.smem %s0, 29
  %s59 = sld [smem:[%s58]]
  %s60 = scalar_lea.smem %s0, 30
  %s61 = sld [smem:[%s60]]
  %s62 = scalar_lea.smem %s0, 31
  %s63 = sld [smem:[%s62]]
  %s64 = scalar_lea.smem %s0, 32
  %s65 = sld [smem:[%s64]]
  %s66 = scalar_lea.smem %s0, 33
  %s67 = sld [smem:[%s66]]
  %68 = xla_tuple %s63, %s65, %s67
  %s69 = sld [smem:[#allocation0]]
  $region173: #{decoder_forward.1} parent=0
    _
  %s71 = ssub.s32 1, %s69
  %s72 = scalar_select 0, %s71, %s69
  $region1: #{decoder_forward.1} parent=0
    #allocation3 [shape = 'u8[32768]{0}', space=vmem, size = 0x8000, scoped, tag = 'output window, operand 1']
    #allocation4 [shape = 's32[2]{0}', space=sflag, size = 0x8, scoped, tag = 'scoped memory for decoder_forward.1']
    %73 = vsyncpa [#allocation4], 0
    %s74 = scalar_lea.sflag [#allocation4], 1
    %75 = vsyncpa %s74, 0
    loop: start=0, step=1, limit=4
    $region2: #{decoder_forward.1} parent=1 // loop_pre_header
      _
    $region3: #{decoder_forward.1} parent=1 // loop_header
      %s77 = sphi 0, %s81
      %p78 = scmp.ge.s32.totalorder %s77, 4
      %s87 = sphi 0, %s89
      %s90 = sphi 0, %s87
      %s91 = sphi 0, %s90
      %s107 = sphi 0, %s91
      %s113 = sphi 0, %s115
      %s116 = sphi 0, %s113
      %s117 = sphi 0, %s116
      %s133 = sphi 0, %s117
      %s139 = sphi 0, %s141
      %s142 = sphi 0, %s139
      %s143 = sphi 0, %s142
      %s159 = sphi 0, %s143
      %s163 = sphi 0, %s163
      %s165 = sphi 0, %s163
      %s166 = sphi 0, %s165
      %s180 = sphi 0, %s166
      %s184 = sphi 0, %s184
      %s186 = sphi 0, %s184
      %s187 = sphi 0, %s186
      %s201 = sphi 0, %s187
      %s205 = sphi 0, %s205
      %s207 = sphi 0, %s205
      %s208 = sphi 0, %s207
      %s222 = sphi 0, %s208
      %s226 = sphi 0, %s226
      %s228 = sphi 0, %s226
      %s229 = sphi 0, %s228
      %s243 = sphi 0, %s229
      %s247 = sphi 0, %s247
      %s249 = sphi 0, %s247
      %s250 = sphi 0, %s249
      %s264 = sphi 0, %s250
      %s268 = sphi 0, %s268
      %s270 = sphi 0, %s268
      %s271 = sphi 0, %s270
      %s285 = sphi 0, %s271
      %s289 = sphi 0, %s289
      %s291 = sphi 0, %s289
      %s292 = sphi 0, %s291
      %s306 = sphi 0, %s292
      %s310 = sphi 0, %s310
      %s312 = sphi 0, %s310
      %s313 = sphi 0, %s312
      %s327 = sphi 0, %s313
      %s331 = sphi 0, %s331
      %s333 = sphi 0, %s331
      %s334 = sphi 0, %s333
      %s348 = sphi 0, %s334
      %s352 = sphi 0, %s352
      %s354 = sphi 0, %s352
      %s355 = sphi 0, %s354
      %s369 = sphi 0, %s355
      %s373 = sphi 0, %s373
      %s375 = sphi 0, %s373
      %s376 = sphi 0, %s375
      %s390 = sphi 0, %s376
      %s394 = sphi 0, %s394
      %s396 = sphi 0, %s394
      %s397 = sphi 0, %s396
      %s411 = sphi 0, %s397
      %s415 = sphi 0, %s415
      %s417 = sphi 0, %s415
      %s418 = sphi 0, %s417
      %s432 = sphi 0, %s418
      %s436 = sphi 0, %s436
      %s438 = sphi 0, %s436
      %s439 = sphi 0, %s438
      %s453 = sphi 0, %s439
      %s457 = sphi 0, %s457
      %s459 = sphi 0, %s457
      %s460 = sphi 0, %s459
      %s474 = sphi 0, %s460
      %s478 = sphi 0, %s478
      %s480 = sphi 0, %s478
      %s481 = sphi 0, %s480
      %s495 = sphi 0, %s481
      %s499 = sphi 0, %s499
      %s501 = sphi 0, %s499
      %s502 = sphi 0, %s501
      %s516 = sphi 0, %s502
      %s520 = sphi 0, %s520
      %s522 = sphi 0, %s520
      %s523 = sphi 0, %s522
      %s537 = sphi 0, %s523
      %s541 = sphi 0, %s541
      %s543 = sphi 0, %s541
      %s544 = sphi 0, %s543
      %s558 = sphi 0, %s544
      %s562 = sphi 0, %s562
      %s564 = sphi 0, %s562
      %s565 = sphi 0, %s564
      %s579 = sphi 0, %s565
      %s583 = sphi 0, %s583
      %s585 = sphi 0, %s583
      %s586 = sphi 0, %s585
      %s600 = sphi 0, %s586
      %s604 = sphi 0, %s604
      %s606 = sphi 0, %s604
      %s607 = sphi 0, %s606
      %s621 = sphi 0, %s607
      %s625 = sphi 0, %s625
      %s627 = sphi 0, %s625
      %s628 = sphi 0, %s627
      %s642 = sphi 0, %s628
      %s646 = sphi 0, %s646
      %s648 = sphi 0, %s646
      %s649 = sphi 0, %s648
      %s663 = sphi 0, %s649
      %s667 = sphi 0, %s667
      %s669 = sphi 0, %s667
      %s670 = sphi 0, %s669
      %s684 = sphi 0, %s670
      %s688 = sphi 0, %s688
      %s690 = sphi 0, %s688
      %s691 = sphi 0, %s690
      %s705 = sphi 0, %s691
      %s709 = sphi 0, %s709
      %s711 = sphi 0, %s709
      %s712 = sphi 0, %s711
      %s726 = sphi 0, %s712
      %s730 = sphi 0, %s730
      %s732 = sphi 0, %s730
      %s733 = sphi 0, %s732
      %s747 = sphi 0, %s733
      %s753 = sphi 0, %s755
      %s756 = sphi 0, %s753
      %s757 = sphi 0, %s756
      %s773 = sphi 0, %s757
      %s779 = sphi 0, %s781
      %s782 = sphi 0, %s779
      %s783 = sphi 0, %s782
      %s799 = sphi 0, %s783
      %s805 = sphi 0, %s807
      %s808 = sphi 0, %s805
      %s809 = sphi 0, %s808
      %s825 = sphi 0, %s809
    $region4: #{decoder_forward.1} parent=1 // loop_header_branch
      %80 = sbr.rel (%p78) target = $region8
    $region5: #{decoder_forward.1} parent=1 // loop_body
      %s82 = ssub.s32 %s77, 1
      %s83 = ssub.s32 %s77, 2
      %s84 = sadd.s32 %s77, 1
      %s85 = ssub.s32 %s77, %s84
      %p86 = scmp.eq.s32.totalorder %s85, 0
      %s88 = sadd.s32 %s87, 1
      %s89 = scalar_select %p86, %s87, %s88
      %p92 = pneg %p86
      %p93 = scmp.eq.s32.totalorder %s77, 1
      %p94 = por %p92, %p93
      %p95 = scmp.ne.s32.totalorder %s87, %s90
      %p96 = scmp.eq.s32.totalorder %s77, 0
      %p97 = por %p95, %p96
      %p98 = scmp.ne.s32.totalorder %s87, %s90
      %p99 = scmp.eq.s32.totalorder %s82, 1
      %p100 = por %p98, %p99
      %p101 = scmp.ne.s32.totalorder %s90, %s91
      %p102 = scmp.eq.s32.totalorder %s82, 0
      %p103 = por %p101, %p102
      %p104 = scmp.ne.s32.totalorder %s90, %s91
      %p105 = scmp.eq.s32.totalorder %s83, 1
      %p106 = por %p104, %p105
      %p108 = scmp.ne.s32.totalorder %s91, %s107
      %p109 = scmp.eq.s32.totalorder %s83, 0
      %p110 = por %p108, %p109
      %s111 = ssub.s32 %s77, %s84
      %p112 = scmp.eq.s32.totalorder %s111, 0
      %s114 = sadd.s32 %s113, 1
      %s115 = scalar_select %p112, %s113, %s114
      %p118 = pneg %p112
      %p119 = scmp.eq.s32.totalorder %s77, 1
      %p120 = por %p118, %p119
      %p121 = scmp.ne.s32.totalorder %s113, %s116
      %p122 = scmp.eq.s32.totalorder %s77, 0
      %p123 = por %p121, %p122
      %p124 = scmp.ne.s32.totalorder %s113, %s116
      %p125 = scmp.eq.s32.totalorder %s82, 1
      %p126 = por %p124, %p125
      %p127 = scmp.ne.s32.totalorder %s116, %s117
      %p128 = scmp.eq.s32.totalorder %s82, 0
      %p129 = por %p127, %p128
      %p130 = scmp.ne.s32.totalorder %s116, %s117
      %p131 = scmp.eq.s32.totalorder %s83, 1
      %p132 = por %p130, %p131
      %p134 = scmp.ne.s32.totalorder %s117, %s133
      %p135 = scmp.eq.s32.totalorder %s83, 0
      %p136 = por %p134, %p135
      %s137 = ssub.s32 %s77, %s84
      %p138 = scmp.eq.s32.totalorder %s137, 0
      %s140 = sadd.s32 %s139, 1
      %s141 = scalar_select %p138, %s139, %s140
      %p144 = pneg %p138
      %p145 = scmp.eq.s32.totalorder %s77, 1
      %p146 = por %p144, %p145
      %p147 = scmp.ne.s32.totalorder %s139, %s142
      %p148 = scmp.eq.s32.totalorder %s77, 0
      %p149 = por %p147, %p148
      %p150 = scmp.ne.s32.totalorder %s139, %s142
      %p151 = scmp.eq.s32.totalorder %s82, 1
      %p152 = por %p150, %p151
      %p153 = scmp.ne.s32.totalorder %s142, %s143
      %p154 = scmp.eq.s32.totalorder %s82, 0
      %p155 = por %p153, %p154
      %p156 = scmp.ne.s32.totalorder %s142, %s143
      %p157 = scmp.eq.s32.totalorder %s83, 1
      %p158 = por %p156, %p157
      %p160 = scmp.ne.s32.totalorder %s143, %s159
      %p161 = scmp.eq.s32.totalorder %s83, 0
      %p162 = por %p160, %p161
      %s164 = sadd.s32 %s163, 1
      %p167 = scmp.eq.s32.totalorder %s77, 1
      %p168 = scmp.ne.s32.totalorder %s163, %s165
      %p169 = scmp.eq.s32.totalorder %s77, 0
      %p170 = por %p168, %p169
      %p171 = scmp.ne.s32.totalorder %s163, %s165
      %p172 = scmp.eq.s32.totalorder %s82, 1
      %p173 = por %p171, %p172
      %p174 = scmp.ne.s32.totalorder %s165, %s166
      %p175 = scmp.eq.s32.totalorder %s82, 0
      %p176 = por %p174, %p175
      %p177 = scmp.ne.s32.totalorder %s165, %s166
      %p178 = scmp.eq.s32.totalorder %s83, 1
      %p179 = por %p177, %p178
      %p181 = scmp.ne.s32.totalorder %s166, %s180
      %p182 = scmp.eq.s32.totalorder %s83, 0
      %p183 = por %p181, %p182
      %s185 = sadd.s32 %s184, 1
      %p188 = scmp.eq.s32.totalorder %s77, 1
      %p189 = scmp.ne.s32.totalorder %s184, %s186
      %p190 = scmp.eq.s32.totalorder %s77, 0
      %p191 = por %p189, %p190
      %p192 = scmp.ne.s32.totalorder %s184, %s186
      %p193 = scmp.eq.s32.totalorder %s82, 1
      %p194 = por %p192, %p193
      %p195 = scmp.ne.s32.totalorder %s186, %s187
      %p196 = scmp.eq.s32.totalorder %s82, 0
      %p197 = por %p195, %p196
      %p198 = scmp.ne.s32.totalorder %s186, %s187
      %p199 = scmp.eq.s32.totalorder %s83, 1
      %p200 = por %p198, %p199
      %p202 = scmp.ne.s32.totalorder %s187, %s201
      %p203 = scmp.eq.s32.totalorder %s83, 0
      %p204 = por %p202, %p203
      %s206 = sadd.s32 %s205, 1
      %p209 = scmp.eq.s32.totalorder %s77, 1
      %p210 = scmp.ne.s32.totalorder %s205, %s207
      %p211 = scmp.eq.s32.totalorder %s77, 0
      %p212 = por %p210, %p211
      %p213 = scmp.ne.s32.totalorder %s205, %s207
      %p214 = scmp.eq.s32.totalorder %s82, 1
      %p215 = por %p213, %p214
      %p216 = scmp.ne.s32.totalorder %s207, %s208
      %p217 = scmp.eq.s32.totalorder %s82, 0
      %p218 = por %p216, %p217
      %p219 = scmp.ne.s32.totalorder %s207, %s208
      %p220 = scmp.eq.s32.totalorder %s83, 1
      %p221 = por %p219, %p220
      %p223 = scmp.ne.s32.totalorder %s208, %s222
      %p224 = scmp.eq.s32.totalorder %s83, 0
      %p225 = por %p223, %p224
      %s227 = sadd.s32 %s226, 1
      %p230 = scmp.eq.s32.totalorder %s77, 1
      %p231 = scmp.ne.s32.totalorder %s226, %s228
      %p232 = scmp.eq.s32.totalorder %s77, 0
      %p233 = por %p231, %p232
      %p234 = scmp.ne.s32.totalorder %s226, %s228
      %p235 = scmp.eq.s32.totalorder %s82, 1
      %p236 = por %p234, %p235
      %p237 = scmp.ne.s32.totalorder %s228, %s229
      %p238 = scmp.eq.s32.totalorder %s82, 0
      %p239 = por %p237, %p238
      %p240 = scmp.ne.s32.totalorder %s228, %s229
      %p241 = scmp.eq.s32.totalorder %s83, 1
      %p242 = por %p240, %p241
      %p244 = scmp.ne.s32.totalorder %s229, %s243
      %p245 = scmp.eq.s32.totalorder %s83, 0
      %p246 = por %p244, %p245
      %s248 = sadd.s32 %s247, 1
      %p251 = scmp.eq.s32.totalorder %s77, 1
      %p252 = scmp.ne.s32.totalorder %s247, %s249
      %p253 = scmp.eq.s32.totalorder %s77, 0
      %p254 = por %p252, %p253
      %p255 = scmp.ne.s32.totalorder %s247, %s249
      %p256 = scmp.eq.s32.totalorder %s82, 1
      %p257 = por %p255, %p256
      %p258 = scmp.ne.s32.totalorder %s249, %s250
      %p259 = scmp.eq.s32.totalorder %s82, 0
      %p260 = por %p258, %p259
      %p261 = scmp.ne.s32.totalorder %s249, %s250
      %p262 = scmp.eq.s32.totalorder %s83, 1
      %p263 = por %p261, %p262
      %p265 = scmp.ne.s32.totalorder %s250, %s264
      %p266 = scmp.eq.s32.totalorder %s83, 0
      %p267 = por %p265, %p266
      %s269 = sadd.s32 %s268, 1
      %p272 = scmp.eq.s32.totalorder %s77, 1
      %p273 = scmp.ne.s32.totalorder %s268, %s270
      %p274 = scmp.eq.s32.totalorder %s77, 0
      %p275 = por %p273, %p274
      %p276 = scmp.ne.s32.totalorder %s268, %s270
      %p277 = scmp.eq.s32.totalorder %s82, 1
      %p278 = por %p276, %p277
      %p279 = scmp.ne.s32.totalorder %s270, %s271
      %p280 = scmp.eq.s32.totalorder %s82, 0
      %p281 = por %p279, %p280
      %p282 = scmp.ne.s32.totalorder %s270, %s271
      %p283 = scmp.eq.s32.totalorder %s83, 1
      %p284 = por %p282, %p283
      %p286 = scmp.ne.s32.totalorder %s271, %s285
      %p287 = scmp.eq.s32.totalorder %s83, 0
      %p288 = por %p286, %p287
      %s290 = sadd.s32 %s289, 1
      %p293 = scmp.eq.s32.totalorder %s77, 1
      %p294 = scmp.ne.s32.totalorder %s289, %s291
      %p295 = scmp.eq.s32.totalorder %s77, 0
      %p296 = por %p294, %p295
      %p297 = scmp.ne.s32.totalorder %s289, %s291
      %p298 = scmp.eq.s32.totalorder %s82, 1
      %p299 = por %p297, %p298
      %p300 = scmp.ne.s32.totalorder %s291, %s292
      %p301 = scmp.eq.s32.totalorder %s82, 0
      %p302 = por %p300, %p301
      %p303 = scmp.ne.s32.totalorder %s291, %s292
      %p304 = scmp.eq.s32.totalorder %s83, 1
      %p305 = por %p303, %p304
      %p307 = scmp.ne.s32.totalorder %s292, %s306
      %p308 = scmp.eq.s32.totalorder %s83, 0
      %p309 = por %p307, %p308
      %s311 = sadd.s32 %s310, 1
      %p314 = scmp.eq.s32.totalorder %s77, 1
      %p315 = scmp.ne.s32.totalorder %s310, %s312
      %p316 = scmp.eq.s32.totalorder %s77, 0
      %p317 = por %p315, %p316
      %p318 = scmp.ne.s32.totalorder %s310, %s312
      %p319 = scmp.eq.s32.totalorder %s82, 1
      %p320 = por %p318, %p319
      %p321 = scmp.ne.s32.totalorder %s312, %s313
      %p322 = scmp.eq.s32.totalorder %s82, 0
      %p323 = por %p321, %p322
      %p324 = scmp.ne.s32.totalorder %s312, %s313
      %p325 = scmp.eq.s32.totalorder %s83, 1
      %p326 = por %p324, %p325
      %p328 = scmp.ne.s32.totalorder %s313, %s327
      %p329 = scmp.eq.s32.totalorder %s83, 0
      %p330 = por %p328, %p329
      %s332 = sadd.s32 %s331, 1
      %p335 = scmp.eq.s32.totalorder %s77, 1
      %p336 = scmp.ne.s32.totalorder %s331, %s333
      %p337 = scmp.eq.s32.totalorder %s77, 0
      %p338 = por %p336, %p337
      %p339 = scmp.ne.s32.totalorder %s331, %s333
      %p340 = scmp.eq.s32.totalorder %s82, 1
      %p341 = por %p339, %p340
      %p342 = scmp.ne.s32.totalorder %s333, %s334
      %p343 = scmp.eq.s32.totalorder %s82, 0
      %p344 = por %p342, %p343
      %p345 = scmp.ne.s32.totalorder %s333, %s334
      %p346 = scmp.eq.s32.totalorder %s83, 1
      %p347 = por %p345, %p346
      %p349 = scmp.ne.s32.totalorder %s334, %s348
      %p350 = scmp.eq.s32.totalorder %s83, 0
      %p351 = por %p349, %p350
      %s353 = sadd.s32 %s352, 1
      %p356 = scmp.eq.s32.totalorder %s77, 1
      %p357 = scmp.ne.s32.totalorder %s352, %s354
      %p358 = scmp.eq.s32.totalorder %s77, 0
      %p359 = por %p357, %p358
      %p360 = scmp.ne.s32.totalorder %s352, %s354
      %p361 = scmp.eq.s32.totalorder %s82, 1
      %p362 = por %p360, %p361
      %p363 = scmp.ne.s32.totalorder %s354, %s355
      %p364 = scmp.eq.s32.totalorder %s82, 0
      %p365 = por %p363, %p364
      %p366 = scmp.ne.s32.totalorder %s354, %s355
      %p367 = scmp.eq.s32.totalorder %s83, 1
      %p368 = por %p366, %p367
      %p370 = scmp.ne.s32.totalorder %s355, %s369
      %p371 = scmp.eq.s32.totalorder %s83, 0
      %p372 = por %p370, %p371
      %s374 = sadd.s32 %s373, 1
      %p377 = scmp.eq.s32.totalorder %s77, 1
      %p378 = scmp.ne.s32.totalorder %s373, %s375
      %p379 = scmp.eq.s32.totalorder %s77, 0
      %p380 = por %p378, %p379
      %p381 = scmp.ne.s32.totalorder %s373, %s375
      %p382 = scmp.eq.s32.totalorder %s82, 1
      %p383 = por %p381, %p382
      %p384 = scmp.ne.s32.totalorder %s375, %s376
      %p385 = scmp.eq.s32.totalorder %s82, 0
      %p386 = por %p384, %p385
      %p387 = scmp.ne.s32.totalorder %s375, %s376
      %p388 = scmp.eq.s32.totalorder %s83, 1
      %p389 = por %p387, %p388
      %p391 = scmp.ne.s32.totalorder %s376, %s390
      %p392 = scmp.eq.s32.totalorder %s83, 0
      %p393 = por %p391, %p392
      %s395 = sadd.s32 %s394, 1
      %p398 = scmp.eq.s32.totalorder %s77, 1
      %p399 = scmp.ne.s32.totalorder %s394, %s396
      %p400 = scmp.eq.s32.totalorder %s77, 0
      %p401 = por %p399, %p400
      %p402 = scmp.ne.s32.totalorder %s394, %s396
      %p403 = scmp.eq.s32.totalorder %s82, 1
      %p404 = por %p402, %p403
      %p405 = scmp.ne.s32.totalorder %s396, %s397
      %p406 = scmp.eq.s32.totalorder %s82, 0
      %p407 = por %p405, %p406
      %p408 = scmp.ne.s32.totalorder %s396, %s397
      %p409 = scmp.eq.s32.totalorder %s83, 1
      %p410 = por %p408, %p409
      %p412 = scmp.ne.s32.totalorder %s397, %s411
      %p413 = scmp.eq.s32.totalorder %s83, 0
      %p414 = por %p412, %p413
      %s416 = sadd.s32 %s415, 1
      %p419 = scmp.eq.s32.totalorder %s77, 1
      %p420 = scmp.ne.s32.totalorder %s415, %s417
      %p421 = scmp.eq.s32.totalorder %s77, 0
      %p422 = por %p420, %p421
      %p423 = scmp.ne.s32.totalorder %s415, %s417
      %p424 = scmp.eq.s32.totalorder %s82, 1
      %p425 = por %p423, %p424
      %p426 = scmp.ne.s32.totalorder %s417, %s418
      %p427 = scmp.eq.s32.totalorder %s82, 0
      %p428 = por %p426, %p427
      %p429 = scmp.ne.s32.totalorder %s417, %s418
      %p430 = scmp.eq.s32.totalorder %s83, 1
      %p431 = por %p429, %p430
      %p433 = scmp.ne.s32.totalorder %s418, %s432
      %p434 = scmp.eq.s32.totalorder %s83, 0
      %p435 = por %p433, %p434
      %s437 = sadd.s32 %s436, 1
      %p440 = scmp.eq.s32.totalorder %s77, 1
      %p441 = scmp.ne.s32.totalorder %s436, %s438
      %p442 = scmp.eq.s32.totalorder %s77, 0
      %p443 = por %p441, %p442
      %p444 = scmp.ne.s32.totalorder %s436, %s438
      %p445 = scmp.eq.s32.totalorder %s82, 1
      %p446 = por %p444, %p445
      %p447 = scmp.ne.s32.totalorder %s438, %s439
      %p448 = scmp.eq.s32.totalorder %s82, 0
      %p449 = por %p447, %p448
      %p450 = scmp.ne.s32.totalorder %s438, %s439
      %p451 = scmp.eq.s32.totalorder %s83, 1
      %p452 = por %p450, %p451
      %p454 = scmp.ne.s32.totalorder %s439, %s453
      %p455 = scmp.eq.s32.totalorder %s83, 0
      %p456 = por %p454, %p455
      %s458 = sadd.s32 %s457, 1
      %p461 = scmp.eq.s32.totalorder %s77, 1
      %p462 = scmp.ne.s32.totalorder %s457, %s459
      %p463 = scmp.eq.s32.totalorder %s77, 0
      %p464 = por %p462, %p463
      %p465 = scmp.ne.s32.totalorder %s457, %s459
      %p466 = scmp.eq.s32.totalorder %s82, 1
      %p467 = por %p465, %p466
      %p468 = scmp.ne.s32.totalorder %s459, %s460
      %p469 = scmp.eq.s32.totalorder %s82, 0
      %p470 = por %p468, %p469
      %p471 = scmp.ne.s32.totalorder %s459, %s460
      %p472 = scmp.eq.s32.totalorder %s83, 1
      %p473 = por %p471, %p472
      %p475 = scmp.ne.s32.totalorder %s460, %s474
      %p476 = scmp.eq.s32.totalorder %s83, 0
      %p477 = por %p475, %p476
      %s479 = sadd.s32 %s478, 1
      %p482 = scmp.eq.s32.totalorder %s77, 1
      %p483 = scmp.ne.s32.totalorder %s478, %s480
      %p484 = scmp.eq.s32.totalorder %s77, 0
      %p485 = por %p483, %p484
      %p486 = scmp.ne.s32.totalorder %s478, %s480
      %p487 = scmp.eq.s32.totalorder %s82, 1
      %p488 = por %p486, %p487
      %p489 = scmp.ne.s32.totalorder %s480, %s481
      %p490 = scmp.eq.s32.totalorder %s82, 0
      %p491 = por %p489, %p490
      %p492 = scmp.ne.s32.totalorder %s480, %s481
      %p493 = scmp.eq.s32.totalorder %s83, 1
      %p494 = por %p492, %p493
      %p496 = scmp.ne.s32.totalorder %s481, %s495
      %p497 = scmp.eq.s32.totalorder %s83, 0
      %p498 = por %p496, %p497
      %s500 = sadd.s32 %s499, 1
      %p503 = scmp.eq.s32.totalorder %s77, 1
      %p504 = scmp.ne.s32.totalorder %s499, %s501
      %p505 = scmp.eq.s32.totalorder %s77, 0
      %p506 = por %p504, %p505
      %p507 = scmp.ne.s32.totalorder %s499, %s501
      %p508 = scmp.eq.s32.totalorder %s82, 1
      %p509 = por %p507, %p508
      %p510 = scmp.ne.s32.totalorder %s501, %s502
      %p511 = scmp.eq.s32.totalorder %s82, 0
      %p512 = por %p510, %p511
      %p513 = scmp.ne.s32.totalorder %s501, %s502
      %p514 = scmp.eq.s32.totalorder %s83, 1
      %p515 = por %p513, %p514
      %p517 = scmp.ne.s32.totalorder %s502, %s516
      %p518 = scmp.eq.s32.totalorder %s83, 0
      %p519 = por %p517, %p518
      %s521 = sadd.s32 %s520, 1
      %p524 = scmp.eq.s32.totalorder %s77, 1
      %p525 = scmp.ne.s32.totalorder %s520, %s522
      %p526 = scmp.eq.s32.totalorder %s77, 0
      %p527 = por %p525, %p526
      %p528 = scmp.ne.s32.totalorder %s520, %s522
      %p529 = scmp.eq.s32.totalorder %s82, 1
      %p530 = por %p528, %p529
      %p531 = scmp.ne.s32.totalorder %s522, %s523
      %p532 = scmp.eq.s32.totalorder %s82, 0
      %p533 = por %p531, %p532
      %p534 = scmp.ne.s32.totalorder %s522, %s523
      %p535 = scmp.eq.s32.totalorder %s83, 1
      %p536 = por %p534, %p535
      %p538 = scmp.ne.s32.totalorder %s523, %s537
      %p539 = scmp.eq.s32.totalorder %s83, 0
      %p540 = por %p538, %p539
      %s542 = sadd.s32 %s541, 1
      %p545 = scmp.eq.s32.totalorder %s77, 1
      %p546 = scmp.ne.s32.totalorder %s541, %s543
      %p547 = scmp.eq.s32.totalorder %s77, 0
      %p548 = por %p546, %p547
      %p549 = scmp.ne.s32.totalorder %s541, %s543
      %p550 = scmp.eq.s32.totalorder %s82, 1
      %p551 = por %p549, %p550
      %p552 = scmp.ne.s32.totalorder %s543, %s544
      %p553 = scmp.eq.s32.totalorder %s82, 0
      %p554 = por %p552, %p553
      %p555 = scmp.ne.s32.totalorder %s543, %s544
      %p556 = scmp.eq.s32.totalorder %s83, 1
      %p557 = por %p555, %p556
      %p559 = scmp.ne.s32.totalorder %s544, %s558
      %p560 = scmp.eq.s32.totalorder %s83, 0
      %p561 = por %p559, %p560
      %s563 = sadd.s32 %s562, 1
      %p566 = scmp.eq.s32.totalorder %s77, 1
      %p567 = scmp.ne.s32.totalorder %s562, %s564
      %p568 = scmp.eq.s32.totalorder %s77, 0
      %p569 = por %p567, %p568
      %p570 = scmp.ne.s32.totalorder %s562, %s564
      %p571 = scmp.eq.s32.totalorder %s82, 1
      %p572 = por %p570, %p571
      %p573 = scmp.ne.s32.totalorder %s564, %s565
      %p574 = scmp.eq.s32.totalorder %s82, 0
      %p575 = por %p573, %p574
      %p576 = scmp.ne.s32.totalorder %s564, %s565
      %p577 = scmp.eq.s32.totalorder %s83, 1
      %p578 = por %p576, %p577
      %p580 = scmp.ne.s32.totalorder %s565, %s579
      %p581 = scmp.eq.s32.totalorder %s83, 0
      %p582 = por %p580, %p581
      %s584 = sadd.s32 %s583, 1
      %p587 = scmp.eq.s32.totalorder %s77, 1
      %p588 = scmp.ne.s32.totalorder %s583, %s585
      %p589 = scmp.eq.s32.totalorder %s77, 0
      %p590 = por %p588, %p589
      %p591 = scmp.ne.s32.totalorder %s583, %s585
      %p592 = scmp.eq.s32.totalorder %s82, 1
      %p593 = por %p591, %p592
      %p594 = scmp.ne.s32.totalorder %s585, %s586
      %p595 = scmp.eq.s32.totalorder %s82, 0
      %p596 = por %p594, %p595
      %p597 = scmp.ne.s32.totalorder %s585, %s586
      %p598 = scmp.eq.s32.totalorder %s83, 1
      %p599 = por %p597, %p598
      %p601 = scmp.ne.s32.totalorder %s586, %s600
      %p602 = scmp.eq.s32.totalorder %s83, 0
      %p603 = por %p601, %p602
      %s605 = sadd.s32 %s604, 1
      %p608 = scmp.eq.s32.totalorder %s77, 1
      %p609 = scmp.ne.s32.totalorder %s604, %s606
      %p610 = scmp.eq.s32.totalorder %s77, 0
      %p611 = por %p609, %p610
      %p612 = scmp.ne.s32.totalorder %s604, %s606
      %p613 = scmp.eq.s32.totalorder %s82, 1
      %p614 = por %p612, %p613
      %p615 = scmp.ne.s32.totalorder %s606, %s607
      %p616 = scmp.eq.s32.totalorder %s82, 0
      %p617 = por %p615, %p616
      %p618 = scmp.ne.s32.totalorder %s606, %s607
      %p619 = scmp.eq.s32.totalorder %s83, 1
      %p620 = por %p618, %p619
      %p622 = scmp.ne.s32.totalorder %s607, %s621
      %p623 = scmp.eq.s32.totalorder %s83, 0
      %p624 = por %p622, %p623
      %s626 = sadd.s32 %s625, 1
      %p629 = scmp.eq.s32.totalorder %s77, 1
      %p630 = scmp.ne.s32.totalorder %s625, %s627
      %p631 = scmp.eq.s32.totalorder %s77, 0
      %p632 = por %p630, %p631
      %p633 = scmp.ne.s32.totalorder %s625, %s627
      %p634 = scmp.eq.s32.totalorder %s82, 1
      %p635 = por %p633, %p634
      %p636 = scmp.ne.s32.totalorder %s627, %s628
      %p637 = scmp.eq.s32.totalorder %s82, 0
      %p638 = por %p636, %p637
      %p639 = scmp.ne.s32.totalorder %s627, %s628
      %p640 = scmp.eq.s32.totalorder %s83, 1
      %p641 = por %p639, %p640
      %p643 = scmp.ne.s32.totalorder %s628, %s642
      %p644 = scmp.eq.s32.totalorder %s83, 0
      %p645 = por %p643, %p644
      %s647 = sadd.s32 %s646, 1
      %p650 = scmp.eq.s32.totalorder %s77, 1
      %p651 = scmp.ne.s32.totalorder %s646, %s648
      %p652 = scmp.eq.s32.totalorder %s77, 0
      %p653 = por %p651, %p652
      %p654 = scmp.ne.s32.totalorder %s646, %s648
      %p655 = scmp.eq.s32.totalorder %s82, 1
      %p656 = por %p654, %p655
      %p657 = scmp.ne.s32.totalorder %s648, %s649
      %p658 = scmp.eq.s32.totalorder %s82, 0
      %p659 = por %p657, %p658
      %p660 = scmp.ne.s32.totalorder %s648, %s649
      %p661 = scmp.eq.s32.totalorder %s83, 1
      %p662 = por %p660, %p661
      %p664 = scmp.ne.s32.totalorder %s649, %s663
      %p665 = scmp.eq.s32.totalorder %s83, 0
      %p666 = por %p664, %p665
      %s668 = sadd.s32 %s667, 1
      %p671 = scmp.eq.s32.totalorder %s77, 1
      %p672 = scmp.ne.s32.totalorder %s667, %s669
      %p673 = scmp.eq.s32.totalorder %s77, 0
      %p674 = por %p672, %p673
      %p675 = scmp.ne.s32.totalorder %s667, %s669
      %p676 = scmp.eq.s32.totalorder %s82, 1
      %p677 = por %p675, %p676
      %p678 = scmp.ne.s32.totalorder %s669, %s670
      %p679 = scmp.eq.s32.totalorder %s82, 0
      %p680 = por %p678, %p679
      %p681 = scmp.ne.s32.totalorder %s669, %s670
      %p682 = scmp.eq.s32.totalorder %s83, 1
      %p683 = por %p681, %p682
      %p685 = scmp.ne.s32.totalorder %s670, %s684
      %p686 = scmp.eq.s32.totalorder %s83, 0
      %p687 = por %p685, %p686
      %s689 = sadd.s32 %s688, 1
      %p692 = scmp.eq.s32.totalorder %s77, 1
      %p693 = scmp.ne.s32.totalorder %s688, %s690
      %p694 = scmp.eq.s32.totalorder %s77, 0
      %p695 = por %p693, %p694
      %p696 = scmp.ne.s32.totalorder %s688, %s690
      %p697 = scmp.eq.s32.totalorder %s82, 1
      %p698 = por %p696, %p697
      %p699 = scmp.ne.s32.totalorder %s690, %s691
      %p700 = scmp.eq.s32.totalorder %s82, 0
      %p701 = por %p699, %p700
      %p702 = scmp.ne.s32.totalorder %s690, %s691
      %p703 = scmp.eq.s32.totalorder %s83, 1
      %p704 = por %p702, %p703
      %p706 = scmp.ne.s32.totalorder %s691, %s705
      %p707 = scmp.eq.s32.totalorder %s83, 0
      %p708 = por %p706, %p707
      %s710 = sadd.s32 %s709, 1
      %p713 = scmp.eq.s32.totalorder %s77, 1
      %p714 = scmp.ne.s32.totalorder %s709, %s711
      %p715 = scmp.eq.s32.totalorder %s77, 0
      %p716 = por %p714, %p715
      %p717 = scmp.ne.s32.totalorder %s709, %s711
      %p718 = scmp.eq.s32.totalorder %s82, 1
      %p719 = por %p717, %p718
      %p720 = scmp.ne.s32.totalorder %s711, %s712
      %p721 = scmp.eq.s32.totalorder %s82, 0
      %p722 = por %p720, %p721
      %p723 = scmp.ne.s32.totalorder %s711, %s712
      %p724 = scmp.eq.s32.totalorder %s83, 1
      %p725 = por %p723, %p724
      %p727 = scmp.ne.s32.totalorder %s712, %s726
      %p728 = scmp.eq.s32.totalorder %s83, 0
      %p729 = por %p727, %p728
      %s731 = sadd.s32 %s730, 1
      %p734 = scmp.eq.s32.totalorder %s77, 1
      %p735 = scmp.ne.s32.totalorder %s730, %s732
      %p736 = scmp.eq.s32.totalorder %s77, 0
      %p737 = por %p735, %p736
      %p738 = scmp.ne.s32.totalorder %s730, %s732
      %p739 = scmp.eq.s32.totalorder %s82, 1
      %p740 = por %p738, %p739
      %p741 = scmp.ne.s32.totalorder %s732, %s733
      %p742 = scmp.eq.s32.totalorder %s82, 0
      %p743 = por %p741, %p742
      %p744 = scmp.ne.s32.totalorder %s732, %s733
      %p745 = scmp.eq.s32.totalorder %s83, 1
      %p746 = por %p744, %p745
      %p748 = scmp.ne.s32.totalorder %s733, %s747
      %p749 = scmp.eq.s32.totalorder %s83, 0
      %p750 = por %p748, %p749
      %s751 = ssub.s32 %s77, %s84
      %p752 = scmp.eq.s32.totalorder %s751, 0
      %s754 = sadd.s32 %s753, 1
      %s755 = scalar_select %p752, %s753, %s754
      %p758 = pneg %p752
      %p759 = scmp.eq.s32.totalorder %s77, 1
      %p760 = por %p758, %p759
      %p761 = scmp.ne.s32.totalorder %s753, %s756
      %p762 = scmp.eq.s32.totalorder %s77, 0
      %p763 = por %p761, %p762
      %p764 = scmp.ne.s32.totalorder %s753, %s756
      %p765 = scmp.eq.s32.totalorder %s82, 1
      %p766 = por %p764, %p765
      %p767 = scmp.ne.s32.totalorder %s756, %s757
      %p768 = scmp.eq.s32.totalorder %s82, 0
      %p769 = por %p767, %p768
      %p770 = scmp.ne.s32.totalorder %s756, %s757
      %p771 = scmp.eq.s32.totalorder %s83, 1
      %p772 = por %p770, %p771
      %p774 = scmp.ne.s32.totalorder %s757, %s773
      %p775 = scmp.eq.s32.totalorder %s83, 0
      %p776 = por %p774, %p775
      %s777 = ssub.s32 %s77, %s84
      %p778 = scmp.eq.s32.totalorder %s777, 0
      %s780 = sadd.s32 %s779, 1
      %s781 = scalar_select %p778, %s779, %s780
      %p784 = pneg %p778
      %p785 = scmp.eq.s32.totalorder %s77, 1
      %p786 = por %p784, %p785
      %p787 = scmp.ne.s32.totalorder %s779, %s782
      %p788 = scmp.eq.s32.totalorder %s77, 0
      %p789 = por %p787, %p788
      %p790 = scmp.ne.s32.totalorder %s779, %s782
      %p791 = scmp.eq.s32.totalorder %s82, 1
      %p792 = por %p790, %p791
      %p793 = scmp.ne.s32.totalorder %s782, %s783
      %p794 = scmp.eq.s32.totalorder %s82, 0
      %p795 = por %p793, %p794
      %p796 = scmp.ne.s32.totalorder %s782, %s783
      %p797 = scmp.eq.s32.totalorder %s83, 1
      %p798 = por %p796, %p797
      %p800 = scmp.ne.s32.totalorder %s783, %s799
      %p801 = scmp.eq.s32.totalorder %s83, 0
      %p802 = por %p800, %p801
      %s803 = ssub.s32 %s77, %s84
      %p804 = scmp.eq.s32.totalorder %s803, 0
      %s806 = sadd.s32 %s805, 1
      %s807 = scalar_select %p804, %s805, %s806
      %p810 = pneg %p804
      %p811 = scmp.eq.s32.totalorder %s77, 1
      %p812 = por %p810, %p811
      %p813 = scmp.ne.s32.totalorder %s805, %s808
      %p814 = scmp.eq.s32.totalorder %s77, 0
      %p815 = por %p813, %p814
      %p816 = scmp.ne.s32.totalorder %s805, %s808
      %p817 = scmp.eq.s32.totalorder %s82, 1
      %p818 = por %p816, %p817
      %p819 = scmp.ne.s32.totalorder %s808, %s809
      %p820 = scmp.eq.s32.totalorder %s82, 0
      %p821 = por %p819, %p820
      %p822 = scmp.ne.s32.totalorder %s808, %s809
      %p823 = scmp.eq.s32.totalorder %s83, 1
      %p824 = por %p822, %p823
      %p826 = scmp.ne.s32.totalorder %s809, %s825
      %p827 = scmp.eq.s32.totalorder %s83, 0
      %p828 = por %p826, %p827
      %p829 = scmp.le.s32.totalorder 1, %s77
      %p830 = scmp.lt.s32.totalorder %s77, 3
      %p831 = pnand %p829, %p830
      %p832 = pneg %p831
      // Predicated region
      $region9: #{decoder_forward.1} parent=5 // pred_check
        _
      $region10: #{decoder_forward.1} parent=5 // pred_check_branch
        %834 = sbr.rel (%p831) target = $region12
      $region11: #{decoder_forward.1} parent=5 // pred_region
        %s835 = ssub.s32 %s77, 1
        // Predicated region
        $region13: #{decoder_forward.1} parent=11 // pred_check
          %p836 = pneg %p176
        $region14: #{decoder_forward.1} parent=11 // pred_check_branch
          %838 = sbr.rel (%p836) target = $region16
        $region15: #{decoder_forward.1} parent=11 // pred_region
          _
        $region16: #{decoder_forward.1} parent=11 // pred_fallthru
          _
        // Predicated region
        $region17: #{decoder_forward.1} parent=11 // pred_check
          %p839 = pneg %p197
        $region18: #{decoder_forward.1} parent=11 // pred_check_branch
          %841 = sbr.rel (%p839) target = $region20
        $region19: #{decoder_forward.1} parent=11 // pred_region
          _
        $region20: #{decoder_forward.1} parent=11 // pred_fallthru
          _
        // Predicated region
        $region21: #{decoder_forward.1} parent=11 // pred_check
          %p842 = pneg %p218
        $region22: #{decoder_forward.1} parent=11 // pred_check_branch
          %844 = sbr.rel (%p842) target = $region24
        $region23: #{decoder_forward.1} parent=11 // pred_region
          _
        $region24: #{decoder_forward.1} parent=11 // pred_fallthru
          _
        // Predicated region
        $region25: #{decoder_forward.1} parent=11 // pred_check
          %p845 = pneg %p239
        $region26: #{decoder_forward.1} parent=11 // pred_check_branch
          %847 = sbr.rel (%p845) target = $region28
        $region27: #{decoder_forward.1} parent=11 // pred_region
          _
        $region28: #{decoder_forward.1} parent=11 // pred_fallthru
          _
        // Predicated region
        $region29: #{decoder_forward.1} parent=11 // pred_check
          %p848 = pneg %p260
        $region30: #{decoder_forward.1} parent=11 // pred_check_branch
          %850 = sbr.rel (%p848) target = $region32
        $region31: #{decoder_forward.1} parent=11 // pred_region
          _
        $region32: #{decoder_forward.1} parent=11 // pred_fallthru
          _
        // Predicated region
        $region33: #{decoder_forward.1} parent=11 // pred_check
          %p851 = pneg %p281
        $region34: #{decoder_forward.1} parent=11 // pred_check_branch
          %853 = sbr.rel (%p851) target = $region36
        $region35: #{decoder_forward.1} parent=11 // pred_region
          _
        $region36: #{decoder_forward.1} parent=11 // pred_fallthru
          _
        // Predicated region
        $region37: #{decoder_forward.1} parent=11 // pred_check
          %p854 = pneg %p302
        $region38: #{decoder_forward.1} parent=11 // pred_check_branch
          %856 = sbr.rel (%p854) target = $region40
        $region39: #{decoder_forward.1} parent=11 // pred_region
          _
        $region40: #{decoder_forward.1} parent=11 // pred_fallthru
          _
        // Predicated region
        $region41: #{decoder_forward.1} parent=11 // pred_check
          %p857 = pneg %p323
        $region42: #{decoder_forward.1} parent=11 // pred_check_branch
          %859 = sbr.rel (%p857) target = $region44
        $region43: #{decoder_forward.1} parent=11 // pred_region
          _
        $region44: #{decoder_forward.1} parent=11 // pred_fallthru
          _
        // Predicated region
        $region45: #{decoder_forward.1} parent=11 // pred_check
          %p860 = pneg %p344
        $region46: #{decoder_forward.1} parent=11 // pred_check_branch
          %862 = sbr.rel (%p860) target = $region48
        $region47: #{decoder_forward.1} parent=11 // pred_region
          _
        $region48: #{decoder_forward.1} parent=11 // pred_fallthru
          _
        // Predicated region
        $region49: #{decoder_forward.1} parent=11 // pred_check
          %p863 = pneg %p365
        $region50: #{decoder_forward.1} parent=11 // pred_check_branch
          %865 = sbr.rel (%p863) target = $region52
        $region51: #{decoder_forward.1} parent=11 // pred_region
          _
        $region52: #{decoder_forward.1} parent=11 // pred_fallthru
          _
        // Predicated region
        $region53: #{decoder_forward.1} parent=11 // pred_check
          %p866 = pneg %p386
        $region54: #{decoder_forward.1} parent=11 // pred_check_branch
          %868 = sbr.rel (%p866) target = $region56
        $region55: #{decoder_forward.1} parent=11 // pred_region
          _
        $region56: #{decoder_forward.1} parent=11 // pred_fallthru
          _
        // Predicated region
        $region57: #{decoder_forward.1} parent=11 // pred_check
          %p869 = pneg %p407
        $region58: #{decoder_forward.1} parent=11 // pred_check_branch
          %871 = sbr.rel (%p869) target = $region60
        $region59: #{decoder_forward.1} parent=11 // pred_region
          _
        $region60: #{decoder_forward.1} parent=11 // pred_fallthru
          _
        // Predicated region
        $region61: #{decoder_forward.1} parent=11 // pred_check
          %p872 = pneg %p428
        $region62: #{decoder_forward.1} parent=11 // pred_check_branch
          %874 = sbr.rel (%p872) target = $region64
        $region63: #{decoder_forward.1} parent=11 // pred_region
          _
        $region64: #{decoder_forward.1} parent=11 // pred_fallthru
          _
        // Predicated region
        $region65: #{decoder_forward.1} parent=11 // pred_check
          %p875 = pneg %p449
        $region66: #{decoder_forward.1} parent=11 // pred_check_branch
          %877 = sbr.rel (%p875) target = $region68
        $region67: #{decoder_forward.1} parent=11 // pred_region
          _
        $region68: #{decoder_forward.1} parent=11 // pred_fallthru
          _
        // Predicated region
        $region69: #{decoder_forward.1} parent=11 // pred_check
          %p878 = pneg %p470
        $region70: #{decoder_forward.1} parent=11 // pred_check_branch
          %880 = sbr.rel (%p878) target = $region72
        $region71: #{decoder_forward.1} parent=11 // pred_region
          _
        $region72: #{decoder_forward.1} parent=11 // pred_fallthru
          _
        // Predicated region
        $region73: #{decoder_forward.1} parent=11 // pred_check
          %p881 = pneg %p491
        $region74: #{decoder_forward.1} parent=11 // pred_check_branch
          %883 = sbr.rel (%p881) target = $region76
        $region75: #{decoder_forward.1} parent=11 // pred_region
          _
        $region76: #{decoder_forward.1} parent=11 // pred_fallthru
          _
        // Predicated region
        $region77: #{decoder_forward.1} parent=11 // pred_check
          %p884 = pneg %p512
        $region78: #{decoder_forward.1} parent=11 // pred_check_branch
          %886 = sbr.rel (%p884) target = $region80
        $region79: #{decoder_forward.1} parent=11 // pred_region
          _
        $region80: #{decoder_forward.1} parent=11 // pred_fallthru
          _
        // Predicated region
        $region81: #{decoder_forward.1} parent=11 // pred_check
          %p887 = pneg %p533
        $region82: #{decoder_forward.1} parent=11 // pred_check_branch
          %889 = sbr.rel (%p887) target = $region84
        $region83: #{decoder_forward.1} parent=11 // pred_region
          _
        $region84: #{decoder_forward.1} parent=11 // pred_fallthru
          _
        // Predicated region
        $region85: #{decoder_forward.1} parent=11 // pred_check
          %p890 = pneg %p554
        $region86: #{decoder_forward.1} parent=11 // pred_check_branch
          %892 = sbr.rel (%p890) target = $region88
        $region87: #{decoder_forward.1} parent=11 // pred_region
          _
        $region88: #{decoder_forward.1} parent=11 // pred_fallthru
          _
        // Predicated region
        $region89: #{decoder_forward.1} parent=11 // pred_check
          %p893 = pneg %p575
        $region90: #{decoder_forward.1} parent=11 // pred_check_branch
          %895 = sbr.rel (%p893) target = $region92
        $region91: #{decoder_forward.1} parent=11 // pred_region
          _
        $region92: #{decoder_forward.1} parent=11 // pred_fallthru
          _
        // Predicated region
        $region93: #{decoder_forward.1} parent=11 // pred_check
          %p896 = pneg %p596
        $region94: #{decoder_forward.1} parent=11 // pred_check_branch
          %898 = sbr.rel (%p896) target = $region96
        $region95: #{decoder_forward.1} parent=11 // pred_region
          _
        $region96: #{decoder_forward.1} parent=11 // pred_fallthru
          _
        // Predicated region
        $region97: #{decoder_forward.1} parent=11 // pred_check
          %p899 = pneg %p617
        $region98: #{decoder_forward.1} parent=11 // pred_check_branch
          %901 = sbr.rel (%p899) target = $region100
        $region99: #{decoder_forward.1} parent=11 // pred_region
          _
        $region100: #{decoder_forward.1} parent=11 // pred_fallthru
          _
        // Predicated region
        $region101: #{decoder_forward.1} parent=11 // pred_check
          %p902 = pneg %p638
        $region102: #{decoder_forward.1} parent=11 // pred_check_branch
          %904 = sbr.rel (%p902) target = $region104
        $region103: #{decoder_forward.1} parent=11 // pred_region
          _
        $region104: #{decoder_forward.1} parent=11 // pred_fallthru
          _
        // Predicated region
        $region105: #{decoder_forward.1} parent=11 // pred_check
          %p905 = pneg %p659
        $region106: #{decoder_forward.1} parent=11 // pred_check_branch
          %907 = sbr.rel (%p905) target = $region108
        $region107: #{decoder_forward.1} parent=11 // pred_region
          _
        $region108: #{decoder_forward.1} parent=11 // pred_fallthru
          _
        // Predicated region
        $region109: #{decoder_forward.1} parent=11 // pred_check
          %p908 = pneg %p680
        $region110: #{decoder_forward.1} parent=11 // pred_check_branch
          %910 = sbr.rel (%p908) target = $region112
        $region111: #{decoder_forward.1} parent=11 // pred_region
          _
        $region112: #{decoder_forward.1} parent=11 // pred_fallthru
          _
        // Predicated region
        $region113: #{decoder_forward.1} parent=11 // pred_check
          %p911 = pneg %p701
        $region114: #{decoder_forward.1} parent=11 // pred_check_branch
          %913 = sbr.rel (%p911) target = $region116
        $region115: #{decoder_forward.1} parent=11 // pred_region
          _
        $region116: #{decoder_forward.1} parent=11 // pred_fallthru
          _
        // Predicated region
        $region117: #{decoder_forward.1} parent=11 // pred_check
          %p914 = pneg %p722
        $region118: #{decoder_forward.1} parent=11 // pred_check_branch
          %916 = sbr.rel (%p914) target = $region120
        $region119: #{decoder_forward.1} parent=11 // pred_region
          _
        $region120: #{decoder_forward.1} parent=11 // pred_fallthru
          _
        // Predicated region
        $region121: #{decoder_forward.1} parent=11 // pred_check
          %p917 = pneg %p743
        $region122: #{decoder_forward.1} parent=11 // pred_check_branch
          %919 = sbr.rel (%p917) target = $region124
        $region123: #{decoder_forward.1} parent=11 // pred_region
          _
        $region124: #{decoder_forward.1} parent=11 // pred_fallthru
          _
      $region12: #{decoder_forward.1} parent=5 // pred_fallthru
        _
      %p920 = scmp.lt.s32.totalorder %s77, 2
      // Predicated region
      $region125: #{decoder_forward.1} parent=5 // pred_check
        %p921 = pneg %p920
      $region126: #{decoder_forward.1} parent=5 // pred_check_branch
        %923 = sbr.rel (%p921) target = $region128
      $region127: #{decoder_forward.1} parent=5 // pred_region
        // Predicated region
        $region129: #{decoder_forward.1} parent=127 // pred_check
          %p924 = pneg %p97
        $region130: #{decoder_forward.1} parent=127 // pred_check_branch
          %926 = sbr.rel (%p924) target = $region132
        $region131: #{decoder_forward.1} parent=127 // pred_region
          %s927 = smul.u32 2, %s77
          %p928 = scmp.lt.s32.totalorder %s927, 3
          %s929 = scalar_select %p928, %s927, 3
          %s930 = smul.addr %s929, 2
          %s931 = smul.addr %s930, 8
          %s932 = scalar_lea.vmem %s1, %s931
          %s933 = smul.u32 2, %s77
        $region132: #{decoder_forward.1} parent=127 // pred_fallthru
          _
        // Predicated region
        $region133: #{decoder_forward.1} parent=127 // pred_check
          %p934 = pneg %p123
        $region134: #{decoder_forward.1} parent=127 // pred_check_branch
          %936 = sbr.rel (%p934) target = $region136
        $region135: #{decoder_forward.1} parent=127 // pred_region
          %s937 = smul.u32 2, %s77
          %p938 = scmp.lt.s32.totalorder %s937, 3
          %s939 = scalar_select %p938, %s937, 3
          %s940 = smul.addr %s939, 8
          %s941 = scalar_lea.vmem %s3, %s940
          %s942 = smul.u32 2, %s77
        $region136: #{decoder_forward.1} parent=127 // pred_fallthru
          _
        // Predicated region
        $region137: #{decoder_forward.1} parent=127 // pred_check
          %p943 = pneg %p149
        $region138: #{decoder_forward.1} parent=127 // pred_check_branch
          %945 = sbr.rel (%p943) target = $region140
        $region139: #{decoder_forward.1} parent=127 // pred_region
          %s946 = smul.u32 2, %s77
          %p947 = scmp.lt.s32.totalorder %s946, 3
          %s948 = scalar_select %p947, %s946, 3
          %s949 = smul.addr %s948, 8
          %s950 = scalar_lea.vmem %s5, %s949
          %s951 = smul.u32 2, %s77
        $region140: #{decoder_forward.1} parent=127 // pred_fallthru
          _
      $region128: #{decoder_forward.1} parent=5 // pred_fallthru
        _
      %p952 = scmp.le.s32.totalorder 1, %s77
      %p953 = scmp.lt.s32.totalorder %s77, 3
      %p954 = pnand %p952, %p953
      %p955 = pneg %p954
      // Predicated region
      $region141: #{decoder_forward.1} parent=5 // pred_check
        _
      $region142: #{decoder_forward.1} parent=5 // pred_check_branch
        %957 = sbr.rel (%p954) target = $region144
      $region143: #{decoder_forward.1} parent=5 // pred_region
        %s958 = ssub.s32 %s77, 1
        %s959 = smul.u32 2, %s82
        %p960 = scmp.lt.s32.totalorder %s959, 3
        %s961 = scalar_select %p960, %s959, 3
        %s962 = smul.addr %s961, 2
        %s963 = smul.addr %s962, 8
        %s964 = scalar_lea.vmem %s1, %s963
        %p965 = pneg %p103
        %p966 = pneg %p100
        %s967 = smul.u32 2, %s82
        %p968 = scmp.lt.s32.totalorder %s967, 3
        %s969 = scalar_select %p968, %s967, 3
        %s970 = smul.addr %s969, 8
        %s971 = scalar_lea.vmem %s3, %s970
        %p972 = pneg %p129
        %p973 = pneg %p126
        %s974 = smul.u32 2, %s82
        %p975 = scmp.lt.s32.totalorder %s974, 3
        %s976 = scalar_select %p975, %s974, 3
        %s977 = smul.addr %s976, 8
        %s978 = scalar_lea.vmem %s5, %s977
        %p979 = pneg %p155
        %p980 = pneg %p152
        %p981 = pneg %p176
        %p982 = pneg %p173
        %p983 = pneg %p197
        %p984 = pneg %p194
        %p985 = pneg %p218
        %p986 = pneg %p215
        %p987 = pneg %p239
        %p988 = pneg %p236
        %p989 = pneg %p260
        %p990 = pneg %p257
        %p991 = pneg %p281
        %p992 = pneg %p278
        %p993 = pneg %p302
        %p994 = pneg %p299
        %p995 = pneg %p323
        %p996 = pneg %p320
        %p997 = pneg %p344
        %p998 = pneg %p341
        %p999 = pneg %p365
        %p1000 = pneg %p362
        %p1001 = pneg %p386
        %p1002 = pneg %p383
        %p1003 = pneg %p407
        %p1004 = pneg %p404
        %p1005 = pneg %p428
        %p1006 = pneg %p425
        %p1007 = pneg %p449
        %p1008 = pneg %p446
        %p1009 = pneg %p470
        %p1010 = pneg %p467
        %p1011 = pneg %p491
        %p1012 = pneg %p488
        %p1013 = pneg %p512
        %p1014 = pneg %p509
        %p1015 = pneg %p533
        %p1016 = pneg %p530
        %p1017 = pneg %p554
        %p1018 = pneg %p551
        %p1019 = pneg %p575
        %p1020 = pneg %p572
        %p1021 = pneg %p596
        %p1022 = pneg %p593
        %p1023 = pneg %p617
        %p1024 = pneg %p614
        %p1025 = pneg %p638
        %p1026 = pneg %p635
        %p1027 = pneg %p659
        %p1028 = pneg %p656
        %p1029 = pneg %p680
        %p1030 = pneg %p677
        %p1031 = pneg %p701
        %p1032 = pneg %p698
        %p1033 = pneg %p722
        %p1034 = pneg %p719
        %p1035 = pneg %p743
        %p1036 = pneg %p740
        %p1037 = pneg %p769
        %p1038 = pneg %p766
        %s1039 = smul.u32 2, %s82
        %p1040 = scmp.lt.s32.totalorder %s1039, 3
        %s1041 = scalar_select %p1040, %s1039, 3
        %s1042 = smul.addr %s1041, 2
        %s1043 = smul.addr %s1042, 8
        %s1044 = scalar_lea.vmem %s63, %s1043
        %p1045 = pneg %p795
        %p1046 = pneg %p792
        %s1047 = sand.u32 %s782, 1
        %s1048 = scalar_lea.sflag [#allocation4], %s1047
        %s1049 = sand.u32 %s782, 1
        %s1050 = smul.addr %s1049, 32
        %s1051 = scalar_lea.vmem [#allocation3], %s1050
        %p1052 = pneg %p821
        %p1053 = pneg %p818
        %s1054 = smul.u32 2, %s82
        %p1055 = scmp.lt.s32.totalorder %s1054, 3
        %s1056 = scalar_select %p1055, %s1054, 3
        %s1057 = smul.addr %s1056, 4
        %s1058 = smul.addr %s1057, 8
        %s1059 = scalar_lea.vmem %s67, %s1058
        %s1060 = smul.u32 2, %s82
        %p1061 = scmp.lt.s32.totalorder %s1060, 3
        %s1062 = scalar_select %p1061, %s1060, 3
        %s1063 = smul.addr %s1062, 2
        %s1064 = smul.addr %s1063, 8
        %s1065 = scalar_lea.vmem %s1, %s1064
        %s1066 = smul.u32 2, %s82
        %s1067 = smul.u32 2, %s82
        %p1068 = scmp.lt.s32.totalorder %s1067, 3
        %s1069 = scalar_select %p1068, %s1067, 3
        %s1070 = smul.addr %s1069, 8
        %s1071 = scalar_lea.vmem %s3, %s1070
        %s1072 = smul.u32 2, %s82
        %s1073 = smul.u32 2, %s82
        %p1074 = scmp.lt.s32.totalorder %s1073, 3
        %s1075 = scalar_select %p1074, %s1073, 3
        %s1076 = smul.addr %s1075, 8
        %s1077 = scalar_lea.vmem %s5, %s1076
        %s1078 = smul.u32 2, %s82
        %s1079 = smul.u32 2, %s82
        %p1080 = scmp.lt.s32.totalorder %s1079, 3
        %s1081 = scalar_select %p1080, %s1079, 3
        %s1082 = smul.addr %s1081, 2
        %s1083 = smul.addr %s1082, 8
        %s1084 = scalar_lea.vmem %s63, %s1083
        %s1085 = smul.u32 2, %s82
        %s1086 = smul.u32 2, %s82
        %s1087 = smul.u32 2, %s82
        %p1088 = scmp.lt.s32.totalorder %s1087, 3
        %s1089 = scalar_select %p1088, %s1087, 3
        %s1090 = smul.addr %s1089, 4
        %s1091 = smul.addr %s1090, 8
        %s1092 = scalar_lea.vmem %s67, %s1091
        %s1093 = smul.u32 2, %s82
        %v1095 = vlaneseq
        %v1096 = vshrl.u32 %v1095, 7
        %v1097 = vadd.s32 %v1096, 8
        %v1098 = vadd.s32 %v1096, 16
        %v1099 = vadd.s32 %v1096, 24
        %v1100 = vadd.s32 %v1096, 32
        %v1101 = vadd.s32 %v1097, 8
        %v1102 = vadd.s32 %v1098, 8
        %v1103 = vadd.s32 %v1099, 8
        %v1104 = vadd.s32 %v1100, 8
        %vm1105 = vcmp.lt.s32.totalorder %v1097, 0
        %v1106 = vsub.s32 0, %v1097
        %v1107 = vsel %vm1105, %v1106, %v1097
        %v1108 = vand.u32 %v1107, 65535
        %v1109 = vshrl.u32 %v1107, 16
        %v1111 = vmul.u32 %v1108, 43691
        %v1112 = vmul.u32 %v1108, 43690
        %v1113 = vmul.u32 %v1109, 43691
        %v1114 = vmul.u32 %v1109, 43690
        %v1115 = vshll.u32 %v1112, 16
        %v1116 = vshrl.u32 %v1112, 16
        %v1117 = vshll.u32 %v1113, 16
        %v1118 = vshrl.u32 %v1113, 16
        %vm1119 = vc.u32 %v1111, %v1115
        %v1120 = vsel %vm1119, 1, 0
        %v1121 = vadd.s32 %v1111, %v1115
        %v1122 = vadd.s32 %v1114, %v1120
        %vm1123 = vc.u32 %v1121, %v1117
        %v1124 = vsel %vm1123, 1, 0
        %v1125 = vadd.s32 %v1121, %v1117
        %v1126 = vadd.s32 %v1122, %v1124
        %v1127 = vadd.s32 %v1126, %v1116
        %v1128 = vadd.s32 %v1127, %v1118
        %v1129 = vshrl.u32 %v1128, 4
        %v1130 = vmul.u32 %v1129, 24
        %v1131 = vsub.s32 %v1107, %v1130
        %v1132 = vsub.s32 0, %v1131
        %v1133 = vsel %vm1105, %v1132, %v1131
        %vm1134 = vcmp.lt.s32.totalorder %v1101, 0
        %v1135 = vsub.s32 0, %v1101
        %v1136 = vsel %vm1134, %v1135, %v1101
        %v1137 = vand.u32 %v1136, 65535
        %v1138 = vshrl.u32 %v1136, 16
        %v1140 = vmul.u32 %v1137, 43691
        %v1141 = vmul.u32 %v1137, 43690
        %v1142 = vmul.u32 %v1138, 43691
        %v1143 = vmul.u32 %v1138, 43690
        %v1144 = vshll.u32 %v1141, 16
        %v1145 = vshrl.u32 %v1141, 16
        %v1146 = vshll.u32 %v1142, 16
        %v1147 = vshrl.u32 %v1142, 16
        %vm1148 = vc.u32 %v1140, %v1144
        %v1149 = vsel %vm1148, 1, 0
        %v1150 = vadd.s32 %v1140, %v1144
        %v1151 = vadd.s32 %v1143, %v1149
        %vm1152 = vc.u32 %v1150, %v1146
        %v1153 = vsel %vm1152, 1, 0
        %v1154 = vadd.s32 %v1150, %v1146
        %v1155 = vadd.s32 %v1151, %v1153
        %v1156 = vadd.s32 %v1155, %v1145
        %v1157 = vadd.s32 %v1156, %v1147
        %v1158 = vshrl.u32 %v1157, 4
        %v1159 = vmul.u32 %v1158, 24
        %v1160 = vsub.s32 %v1136, %v1159
        %v1161 = vsub.s32 0, %v1160
        %v1162 = vsel %vm1134, %v1161, %v1160
        %vm1163 = vcmp.lt.s32.totalorder %v1102, 0
        %v1164 = vsub.s32 0, %v1102
        %v1165 = vsel %vm1163, %v1164, %v1102
        %v1166 = vand.u32 %v1165, 65535
        %v1167 = vshrl.u32 %v1165, 16
        %v1169 = vmul.u32 %v1166, 43691
        %v1170 = vmul.u32 %v1166, 43690
        %v1171 = vmul.u32 %v1167, 43691
        %v1172 = vmul.u32 %v1167, 43690
        %v1173 = vshll.u32 %v1170, 16
        %v1174 = vshrl.u32 %v1170, 16
        %v1175 = vshll.u32 %v1171, 16
        %v1176 = vshrl.u32 %v1171, 16
        %vm1177 = vc.u32 %v1169, %v1173
        %v1178 = vsel %vm1177, 1, 0
        %v1179 = vadd.s32 %v1169, %v1173
        %v1180 = vadd.s32 %v1172, %v1178
        %vm1181 = vc.u32 %v1179, %v1175
        %v1182 = vsel %vm1181, 1, 0
        %v1183 = vadd.s32 %v1179, %v1175
        %v1184 = vadd.s32 %v1180, %v1182
        %v1185 = vadd.s32 %v1184, %v1174
        %v1186 = vadd.s32 %v1185, %v1176
        %v1187 = vshrl.u32 %v1186, 4
        %v1188 = vmul.u32 %v1187, 24
        %v1189 = vsub.s32 %v1165, %v1188
        %v1190 = vsub.s32 0, %v1189
        %v1191 = vsel %vm1163, %v1190, %v1189
        %vm1192 = vcmp.lt.s32.totalorder %v1103, 0
        %v1193 = vsub.s32 0, %v1103
        %v1194 = vsel %vm1192, %v1193, %v1103
        %v1195 = vand.u32 %v1194, 65535
        %v1196 = vshrl.u32 %v1194, 16
        %v1198 = vmul.u32 %v1195, 43691
        %v1199 = vmul.u32 %v1195, 43690
        %v1200 = vmul.u32 %v1196, 43691
        %v1201 = vmul.u32 %v1196, 43690
        %v1202 = vshll.u32 %v1199, 16
        %v1203 = vshrl.u32 %v1199, 16
        %v1204 = vshll.u32 %v1200, 16
        %v1205 = vshrl.u32 %v1200, 16
        %vm1206 = vc.u32 %v1198, %v1202
        %v1207 = vsel %vm1206, 1, 0
        %v1208 = vadd.s32 %v1198, %v1202
        %v1209 = vadd.s32 %v1201, %v1207
        %vm1210 = vc.u32 %v1208, %v1204
        %v1211 = vsel %vm1210, 1, 0
        %v1212 = vadd.s32 %v1208, %v1204
        %v1213 = vadd.s32 %v1209, %v1211
        %v1214 = vadd.s32 %v1213, %v1203
        %v1215 = vadd.s32 %v1214, %v1205
        %v1216 = vshrl.u32 %v1215, 4
        %v1217 = vmul.u32 %v1216, 24
        %v1218 = vsub.s32 %v1194, %v1217
        %v1219 = vsub.s32 0, %v1218
        %v1220 = vsel %vm1192, %v1219, %v1218
        %vm1221 = vcmp.lt.s32.totalorder %v1104, 0
        %v1222 = vsub.s32 0, %v1104
        %v1223 = vsel %vm1221, %v1222, %v1104
        %v1224 = vand.u32 %v1223, 65535
        %v1225 = vshrl.u32 %v1223, 16
        %v1227 = vmul.u32 %v1224, 43691
        %v1228 = vmul.u32 %v1224, 43690
        %v1229 = vmul.u32 %v1225, 43691
        %v1230 = vmul.u32 %v1225, 43690
        %v1231 = vshll.u32 %v1228, 16
        %v1232 = vshrl.u32 %v1228, 16
        %v1233 = vshll.u32 %v1229, 16
        %v1234 = vshrl.u32 %v1229, 16
        %vm1235 = vc.u32 %v1227, %v1231
        %v1236 = vsel %vm1235, 1, 0
        %v1237 = vadd.s32 %v1227, %v1231
        %v1238 = vadd.s32 %v1230, %v1236
        %vm1239 = vc.u32 %v1237, %v1233
        %v1240 = vsel %vm1239, 1, 0
        %v1241 = vadd.s32 %v1237, %v1233
        %v1242 = vadd.s32 %v1238, %v1240
        %v1243 = vadd.s32 %v1242, %v1232
        %v1244 = vadd.s32 %v1243, %v1234
        %v1245 = vshrl.u32 %v1244, 4
        %v1246 = vmul.u32 %v1245, 24
        %v1247 = vsub.s32 %v1223, %v1246
        %v1248 = vsub.s32 0, %v1247
        %v1249 = vsel %vm1221, %v1248, %v1247
        %vm1250 = vcmp.ne.s32.totalorder %v1133, 0
        %vm1251 = vcmp.ne.s32.totalorder %v1162, 0
        %vm1252 = vcmp.ne.s32.totalorder %v1191, 0
        %vm1253 = vcmp.ne.s32.totalorder %v1220, 0
        %vm1254 = vcmp.ne.s32.totalorder %v1249, 0
        %vm1255 = vcmp.lt.s32.totalorder %v1133, 0
        %vm1256 = vcmp.lt.s32.totalorder %v1162, 0
        %vm1257 = vcmp.lt.s32.totalorder %v1191, 0
        %vm1258 = vcmp.lt.s32.totalorder %v1220, 0
        %vm1259 = vcmp.lt.s32.totalorder %v1249, 0
        %vm1260 = vmand %vm1255, %vm1250
        %vm1261 = vmand %vm1256, %vm1251
        %vm1262 = vmand %vm1257, %vm1252
        %vm1263 = vmand %vm1258, %vm1253
        %vm1264 = vmand %vm1259, %vm1254
        %v1265 = vadd.s32 %v1133, 24
        %v1266 = vadd.s32 %v1162, 24
        %v1267 = vadd.s32 %v1191, 24
        %v1268 = vadd.s32 %v1220, 24
        %v1269 = vadd.s32 %v1249, 24
        %v1270 = vsel %vm1260, %v1265, %v1133
        %v1271 = vsel %vm1261, %v1266, %v1162
        %v1272 = vsel %vm1262, %v1267, %v1191
        %v1273 = vsel %vm1263, %v1268, %v1220
        %v1274 = vsel %vm1264, %v1269, %v1249
        %vm1275 = vcmp.ge.s32.totalorder %v1270, 8
        %vm1276 = vcmp.ge.s32.totalorder %v1271, 8
        %vm1277 = vcmp.ge.s32.totalorder %v1272, 8
        %vm1278 = vcmp.ge.s32.totalorder %v1273, 8
        %vm1279 = vcmp.ge.s32.totalorder %v1274, 8
        %v1280 = vsel %vm1275, 1, 0
        %v1281 = vsel %vm1276, 1, 0
        %v1282 = vsel %vm1277, 1, 0
        %v1283 = vsel %vm1278, 1, 0
        %v1284 = vsel %vm1279, 1, 0
        %v1285 = vcvt.s32.f32 %v1280
        %v1286 = vcvt.s32.f32 %v1281
        %v1287 = vcvt.s32.f32 %v1282
        %v1288 = vcvt.s32.f32 %v1283
        %v1289 = vcvt.s32.f32 %v1284
        %vm1290 = vcmask 261120
        %1291 = vst.msk [vmem:[#allocation2] sm:$0xff] %vm1290, 0.0
        %1292 = vst.msk [vmem:[#allocation2 + $0x18] sm:$0xff] %vm1290, 0.0
        %v1293 = vld [vmem:[%s1065] sm:$0xff]
        %v1294 = vld [vmem:[%s1065 + $0x8] sm:$0xff]
        %v1295 = vld [vmem:[%s1065 + $0x10] sm:$0xff]
        %v1296 = vld [vmem:[%s1065 + $0x18] sm:$0xff]
        %v1297 = vpack.c.bf16 %v1294, %v1293
        %v1298 = vpack.c.bf16 %v1296, %v1295
        %v1299 = vld [vmem:[%s7] sm:$0xf]
        %v1300 = vld [vmem:[%s9] sm:$0x1]
        %v1302 = vperm.slane %v1300, 0
        %vm1304 = vcmask 64512
        %v1306 = vsel %vm1304, %v1297, 0
        %v1309 = vsel %vm1304, %v1298, 0
        %vm1311 = vcmask 1043456
        %v1313 = vsel %vm1311, %v1299, 0
        %1315 = vmatpush.bf16.msra.mxu0 0
        %1316 = vmatpush.bf16.msra.mxu0 0
        %1317 = vmatpush.bf16.msra.mxu0 0
        %1318 = vmatpush.bf16.msra.mxu0 0
        %1319 = vmatpush.bf16.msra.mxu0 0
        %1320 = vmatpush.bf16.msra.mxu0 0
        %1321 = vmatpush.bf16.msra.mxu0 0
        %1322 = vmatpush.bf16.msra.mxu0 %v1313
        %1323 = vmatmul.bf16.gmra.mxu0 %v1306
        %v1324 = vpop.f32.mrf.mxu0
        %v1325 = vadd.f32 %v1302, %v1324
        %v1326 = vpop.f32.mrf.mxu0
        %v1327 = vadd.f32 %v1302, %v1326
        %1328 = vmatmul.bf16.gmra.mxu0 %v1309
        %v1329 = vpop.f32.mrf.mxu0
        %v1330 = vadd.f32 %v1302, %v1329
        %v1331 = vpop.f32.mrf.mxu0
        %v1332 = vadd.f32 %v1302, %v1331
        %1333 = vdwg.mxu0
        %v1334 = vmax.f32 %v1325, 0.0
        %v1335 = vmax.f32 %v1327, 0.0
        %v1336 = vmax.f32 %v1330, 0.0
        %v1337 = vmax.f32 %v1332, 0.0
        %1338 = vst.msk [vmem:[#allocation2 + $0x8] sm:$0xff] %vm1290, %v1334
        %1339 = vst.msk [vmem:[#allocation2 + $0x10] sm:$0xff] %vm1290, %v1335
        %1340 = vst.msk [vmem:[#allocation2 + $0x20] sm:$0xff] %vm1290, %v1336
        %1341 = vst.msk [vmem:[#allocation2 + $0x28] sm:$0xff] %vm1290, %v1337
        %v1342 = vld [vmem:[%s13] sm:$0x1]
        %v1343 = vld [vmem:[#allocation2 + $0x6] sm:$0xff]
        %v1344 = vld [vmem:[#allocation2 + $0xe] sm:$0xff]
        %v1345 = vld [vmem:[#allocation2 + $0x16] sm:$0xff]
        %v1346 = vld [vmem:[#allocation2 + $0x1e] sm:$0xff]
        %v1347 = vld [vmem:[#allocation2 + $0x26] sm:$0xff]
        %v1348 = vpack.c.bf16 %v1344, %v1343
        %v1349 = vpack.c.bf16 %v1346, %v1345
        %v1350 = vpack.c.bf16 %v1347, %v1347
        %v1351 = vld [vmem:[%s11] sm:$0xf]
        %v1352 = vld [vmem:[%s11 + $0x4] sm:$0xf]
        %v1353 = vld [vmem:[%s11 + $0x8] sm:$0xf]
        %v1354 = vld [vmem:[%s11 + $0xc] sm:$0xf]
        %v1359 = vunpack.c.l.b16 %v1351
        %v1360 = vunpack.c.l.b16 %v1352
        %v1361 = vunpack.c.l.b16 %v1353
        %v1362 = vunpack.c.l.b16 %v1354
        %v1363 = vpack.c.b16 %v1360, %v1359
        %v1364 = vpack.c.b16 %v1362, %v1361
        %v1368 = vsel %vm1290, %v1348, 0
        %v1371 = vsel %vm1290, %v1349, 0
        %v1374 = vsel %vm1290, %v1350, 0
        %1376 = vmatpush.bf16.msra.mxu0 0
        %1377 = vmatpush.bf16.msra.mxu0 0
        %1378 = vmatpush.bf16.msra.mxu0 0
        %1379 = vmatpush.bf16.msra.mxu0 0
        %1380 = vmatpush.bf16.msra.mxu0 0
        %1381 = vmatpush.bf16.msra.mxu0 0
        %1382 = vmatpush.bf16.msra.mxu0 %v1364
        %1383 = vmatpush.bf16.msra.mxu0 %v1363
        %1384 = vmatmul.bf16.gmra.mxu0 %v1368
        %v1385 = vpop.f32.mrf.mxu0
        %v1386 = vadd.f32 0.0, %v1385
        %v1387 = vpop.f32.mrf.mxu0
        %v1388 = vadd.f32 0.0, %v1387
        %1389 = vmatmul.bf16.gmra.mxu0 %v1371
        %v1390 = vpop.f32.mrf.mxu0
        %v1391 = vadd.f32 0.0, %v1390
        %v1392 = vpop.f32.mrf.mxu0
        %v1393 = vadd.f32 0.0, %v1392
        %1394 = vmatmul.bf16.gmra.mxu0 %v1374
        %v1395 = vpop.f32.mrf.mxu0
        %v1396 = vadd.f32 0.0, %v1395
        %v1397 = vpop.f32.mrf.mxu0
        %1398 = vdwg.mxu0
        %v1400 = vperm.slane %v1342, 0
        %v1402 = vadd.f32 %v1400, %v1386
        %v1403 = vadd.f32 %v1400, %v1388
        %v1404 = vadd.f32 %v1400, %v1391
        %v1405 = vadd.f32 %v1400, %v1393
        %v1406 = vadd.f32 %v1400, %v1396
        %v1407 = vld [vmem:[#allocation2 + $0x7] sm:$0xff]
        %v1408 = vld [vmem:[#allocation2 + $0xf] sm:$0xff]
        %v1409 = vld [vmem:[#allocation2 + $0x17] sm:$0xff]
        %v1410 = vld [vmem:[#allocation2 + $0x1f] sm:$0xff]
        %v1411 = vld [vmem:[#allocation2 + $0x27] sm:$0xff]
        %v1412 = vpack.c.bf16 %v1408, %v1407
        %v1413 = vpack.c.bf16 %v1410, %v1409
        %v1414 = vpack.c.bf16 %v1411, %v1411
        %v1415 = vld [vmem:[%s11 + $0x10] sm:$0xf]
        %v1416 = vld [vmem:[%s11 + $0x14] sm:$0xf]
        %v1417 = vld [vmem:[%s11 + $0x18] sm:$0xf]
        %v1418 = vld [vmem:[%s11 + $0x1c] sm:$0xf]
        %v1423 = vunpack.c.l.b16 %v1415
        %v1424 = vunpack.c.l.b16 %v1416
        %v1425 = vunpack.c.l.b16 %v1417
        %v1426 = vunpack.c.l.b16 %v1418
        %v1427 = vpack.c.b16 %v1424, %v1423
        %v1428 = vpack.c.b16 %v1426, %v1425
        %v1432 = vsel %vm1290, %v1412, 0
        %v1435 = vsel %vm1290, %v1413, 0
        %v1438 = vsel %vm1290, %v1414, 0
        %1440 = vmatpush.bf16.msra.mxu0 0
        %1441 = vmatpush.bf16.msra.mxu0 0
        %1442 = vmatpush.bf16.msra.mxu0 0
        %1443 = vmatpush.bf16.msra.mxu0 0
        %1444 = vmatpush.bf16.msra.mxu0 0
        %1445 = vmatpush.bf16.msra.mxu0 0
        %1446 = vmatpush.bf16.msra.mxu0 %v1428
        %1447 = vmatpush.bf16.msra.mxu0 %v1427
        %1448 = vmatmul.bf16.gmra.mxu0 %v1432
        %v1449 = vpop.f32.mrf.mxu0
        %v1450 = vadd.f32 0.0, %v1449
        %v1451 = vpop.f32.mrf.mxu0
        %v1452 = vadd.f32 0.0, %v1451
        %1453 = vmatmul.bf16.gmra.mxu0 %v1435
        %v1454 = vpop.f32.mrf.mxu0
        %v1455 = vadd.f32 0.0, %v1454
        %v1456 = vpop.f32.mrf.mxu0
        %v1457 = vadd.f32 0.0, %v1456
        %1458 = vmatmul.bf16.gmra.mxu0 %v1438
        %v1459 = vpop.f32.mrf.mxu0
        %v1460 = vadd.f32 0.0, %v1459
        %v1461 = vpop.f32.mrf.mxu0
        %1462 = vdwg.mxu0
        %v1463 = vadd.f32 %v1402, %v1450
        %v1464 = vadd.f32 %v1403, %v1452
        %v1465 = vadd.f32 %v1404, %v1455
        %v1466 = vadd.f32 %v1405, %v1457
        %v1467 = vadd.f32 %v1406, %v1460
        %v1468 = vld [vmem:[#allocation2 + $0x8] sm:$0xff]
        %v1469 = vld [vmem:[#allocation2 + $0x10] sm:$0xff]
        %v1470 = vld [vmem:[#allocation2 + $0x18] sm:$0xff]
        %v1471 = vld [vmem:[#allocation2 + $0x20] sm:$0xff]
        %v1472 = vld [vmem:[#allocation2 + $0x28] sm:$0xff]
        %v1473 = vpack.c.bf16 %v1469, %v1468
        %v1474 = vpack.c.bf16 %v1471, %v1470
        %v1475 = vpack.c.bf16 %v1472, %v1472
        %v1476 = vld [vmem:[%s11 + $0x20] sm:$0xf]
        %v1477 = vld [vmem:[%s11 + $0x24] sm:$0xf]
        %v1478 = vld [vmem:[%s11 + $0x28] sm:$0xf]
        %v1479 = vld [vmem:[%s11 + $0x2c] sm:$0xf]
        %v1484 = vunpack.c.l.b16 %v1476
        %v1485 = vunpack.c.l.b16 %v1477
        %v1486 = vunpack.c.l.b16 %v1478
        %v1487 = vunpack.c.l.b16 %v1479
        %v1488 = vpack.c.b16 %v1485, %v1484
        %v1489 = vpack.c.b16 %v1487, %v1486
        %v1493 = vsel %vm1290, %v1473, 0
        %v1496 = vsel %vm1290, %v1474, 0
        %v1499 = vsel %vm1290, %v1475, 0
        %1501 = vmatpush.bf16.msra.mxu0 0
        %1502 = vmatpush.bf16.msra.mxu0 0
        %1503 = vmatpush.bf16.msra.mxu0 0
        %1504 = vmatpush.bf16.msra.mxu0 0
        %1505 = vmatpush.bf16.msra.mxu0 0
        %1506 = vmatpush.bf16.msra.mxu0 0
        %1507 = vmatpush.bf16.msra.mxu0 %v1489
        %1508 = vmatpush.bf16.msra.mxu0 %v1488
        %1509 = vmatmul.bf16.gmra.mxu0 %v1493
        %v1510 = vpop.f32.mrf.mxu0
        %v1511 = vadd.f32 0.0, %v1510
        %v1512 = vpop.f32.mrf.mxu0
        %v1513 = vadd.f32 0.0, %v1512
        %1514 = vmatmul.bf16.gmra.mxu0 %v1496
        %v1515 = vpop.f32.mrf.mxu0
        %v1516 = vadd.f32 0.0, %v1515
        %v1517 = vpop.f32.mrf.mxu0
        %v1518 = vadd.f32 0.0, %v1517
        %1519 = vmatmul.bf16.gmra.mxu0 %v1499
        %v1520 = vpop.f32.mrf.mxu0
        %v1521 = vadd.f32 0.0, %v1520
        %v1522 = vpop.f32.mrf.mxu0
        %1523 = vdwg.mxu0
        %v1524 = vadd.f32 %v1463, %v1511
        %v1525 = vadd.f32 %v1464, %v1513
        %v1526 = vadd.f32 %v1465, %v1516
        %v1527 = vadd.f32 %v1466, %v1518
        %v1528 = vadd.f32 %v1467, %v1521
        %v1529 = vmul.f32 %v1524, %v1285
        %v1530 = vmul.f32 %v1525, %v1286
        %v1531 = vmul.f32 %v1526, %v1287
        %v1532 = vmul.f32 %v1527, %v1288
        %v1533 = vmul.f32 %v1528, %v1289
        %1534 = vst.msk [vmem:[#allocation2 + $0x8] sm:$0xff] %vm1290, %v1529
        %1535 = vst.msk [vmem:[#allocation2 + $0x10] sm:$0xff] %vm1290, %v1530
        %1536 = vst.msk [vmem:[#allocation2 + $0x18] sm:$0xff] %vm1290, %v1531
        %1537 = vst.msk [vmem:[#allocation2 + $0x20] sm:$0xff] %vm1290, %v1532
        %1538 = vst.msk [vmem:[#allocation2 + $0x28] sm:$0xff] %vm1290, %v1533
        %v1539 = vld [vmem:[%s17] sm:$0x1]
        %v1540 = vld [vmem:[#allocation2 + $0x4] sm:$0xff]
        %v1541 = vld [vmem:[#allocation2 + $0xc] sm:$0xff]
        %v1542 = vld [vmem:[#allocation2 + $0x14] sm:$0xff]
        %v1543 = vld [vmem:[#allocation2 + $0x1c] sm:$0xff]
        %v1544 = vld [vmem:[#allocation2 + $0x24] sm:$0xff]
        %v1545 = vpack.c.bf16 %v1541, %v1540
        %v1546 = vpack.c.bf16 %v1543, %v1542
        %v1547 = vpack.c.bf16 %v1544, %v1544
        %v1548 = vld [vmem:[%s15] sm:$0xf]
        %v1549 = vld [vmem:[%s15 + $0x4] sm:$0xf]
        %v1550 = vld [vmem:[%s15 + $0x8] sm:$0xf]
        %v1551 = vld [vmem:[%s15 + $0xc] sm:$0xf]
        %v1556 = vunpack.c.l.b16 %v1548
        %v1557 = vunpack.c.l.b16 %v1549
        %v1558 = vunpack.c.l.b16 %v1550
        %v1559 = vunpack.c.l.b16 %v1551
        %v1560 = vpack.c.b16 %v1557, %v1556
        %v1561 = vpack.c.b16 %v1559, %v1558
        %v1565 = vsel %vm1290, %v1545, 0
        %v1568 = vsel %vm1290, %v1546, 0
        %v1571 = vsel %vm1290, %v1547, 0
        %1573 = vmatpush.bf16.msra.mxu0 0
        %1574 = vmatpush.bf16.msra.mxu0 0
        %1575 = vmatpush.bf16.msra.mxu0 0
        %1576 = vmatpush.bf16.msra.mxu0 0
        %1577 = vmatpush.bf16.msra.mxu0 0
        %1578 = vmatpush.bf16.msra.mxu0 0
        %1579 = vmatpush.bf16.msra.mxu0 %v1561
        %1580 = vmatpush.bf16.msra.mxu0 %v1560
        %1581 = vmatmul.bf16.gmra.mxu0 %v1565
        %v1582 = vpop.f32.mrf.mxu0
        %v1583 = vadd.f32 0.0, %v1582
        %v1584 = vpop.f32.mrf.mxu0
        %v1585 = vadd.f32 0.0, %v1584
        %1586 = vmatmul.bf16.gmra.mxu0 %v1568
        %v1587 = vpop.f32.mrf.mxu0
        %v1588 = vadd.f32 0.0, %v1587
        %v1589 = vpop.f32.mrf.mxu0
        %v1590 = vadd.f32 0.0, %v1589
        %1591 = vmatmul.bf16.gmra.mxu0 %v1571
        %v1592 = vpop.f32.mrf.mxu0
        %v1593 = vadd.f32 0.0, %v1592
        %v1594 = vpop.f32.mrf.mxu0
        %1595 = vdwg.mxu0
        %v1597 = vperm.slane %v1539, 0
        %v1599 = vadd.f32 %v1597, %v1583
        %v1600 = vadd.f32 %v1597, %v1585
        %v1601 = vadd.f32 %v1597, %v1588
        %v1602 = vadd.f32 %v1597, %v1590
        %v1603 = vadd.f32 %v1597, %v1593
        %v1604 = vld [vmem:[#allocation2 + $0x6] sm:$0xff]
        %v1605 = vld [vmem:[#allocation2 + $0xe] sm:$0xff]
        %v1606 = vld [vmem:[#allocation2 + $0x16] sm:$0xff]
        %v1607 = vld [vmem:[#allocation2 + $0x1e] sm:$0xff]
        %v1608 = vld [vmem:[#allocation2 + $0x26] sm:$0xff]
        %v1609 = vpack.c.bf16 %v1605, %v1604
        %v1610 = vpack.c.bf16 %v1607, %v1606
        %v1611 = vpack.c.bf16 %v1608, %v1608
        %v1612 = vld [vmem:[%s15 + $0x10] sm:$0xf]
        %v1613 = vld [vmem:[%s15 + $0x14] sm:$0xf]
        %v1614 = vld [vmem:[%s15 + $0x18] sm:$0xf]
        %v1615 = vld [vmem:[%s15 + $0x1c] sm:$0xf]
        %v1620 = vunpack.c.l.b16 %v1612
        %v1621 = vunpack.c.l.b16 %v1613
        %v1622 = vunpack.c.l.b16 %v1614
        %v1623 = vunpack.c.l.b16 %v1615
        %v1624 = vpack.c.b16 %v1621, %v1620
        %v1625 = vpack.c.b16 %v1623, %v1622
        %v1629 = vsel %vm1290, %v1609, 0
        %v1632 = vsel %vm1290, %v1610, 0
        %v1635 = vsel %vm1290, %v1611, 0
        %1637 = vmatpush.bf16.msra.mxu0 0
        %1638 = vmatpush.bf16.msra.mxu0 0
        %1639 = vmatpush.bf16.msra.mxu0 0
        %1640 = vmatpush.bf16.msra.mxu0 0
        %1641 = vmatpush.bf16.msra.mxu0 0
        %1642 = vmatpush.bf16.msra.mxu0 0
        %1643 = vmatpush.bf16.msra.mxu0 %v1625
        %1644 = vmatpush.bf16.msra.mxu0 %v1624
        %1645 = vmatmul.bf16.gmra.mxu0 %v1629
        %v1646 = vpop.f32.mrf.mxu0
        %v1647 = vadd.f32 0.0, %v1646
        %v1648 = vpop.f32.mrf.mxu0
        %v1649 = vadd.f32 0.0, %v1648
        %1650 = vmatmul.bf16.gmra.mxu0 %v1632
        %v1651 = vpop.f32.mrf.mxu0
        %v1652 = vadd.f32 0.0, %v1651
        %v1653 = vpop.f32.mrf.mxu0
        %v1654 = vadd.f32 0.0, %v1653
        %1655 = vmatmul.bf16.gmra.mxu0 %v1635
        %v1656 = vpop.f32.mrf.mxu0
        %v1657 = vadd.f32 0.0, %v1656
        %v1658 = vpop.f32.mrf.mxu0
        %1659 = vdwg.mxu0
        %v1660 = vadd.f32 %v1599, %v1647
        %v1661 = vadd.f32 %v1600, %v1649
        %v1662 = vadd.f32 %v1601, %v1652
        %v1663 = vadd.f32 %v1602, %v1654
        %v1664 = vadd.f32 %v1603, %v1657
        %v1665 = vld [vmem:[#allocation2 + $0x8] sm:$0xff]
        %v1666 = vld [vmem:[#allocation2 + $0x10] sm:$0xff]
        %v1667 = vld [vmem:[#allocation2 + $0x18] sm:$0xff]
        %v1668 = vld [vmem:[#allocation2 + $0x20] sm:$0xff]
        %v1669 = vld [vmem:[#allocation2 + $0x28] sm:$0xff]
        %v1670 = vpack.c.bf16 %v1666, %v1665
        %v1671 = vpack.c.bf16 %v1668, %v1667
        %v1672 = vpack.c.bf16 %v1669, %v1669
        %v1673 = vld [vmem:[%s15 + $0x20] sm:$0xf]
        %v1674 = vld [vmem:[%s15 + $0x24] sm:$0xf]
        %v1675 = vld [vmem:[%s15 + $0x28] sm:$0xf]
        %v1676 = vld [vmem:[%s15 + $0x2c] sm:$0xf]
        %v1681 = vunpack.c.l.b16 %v1673
        %v1682 = vunpack.c.l.b16 %v1674
        %v1683 = vunpack.c.l.b16 %v1675
        %v1684 = vunpack.c.l.b16 %v1676
        %v1685 = vpack.c.b16 %v1682, %v1681
        %v1686 = vpack.c.b16 %v1684, %v1683
        %v1690 = vsel %vm1290, %v1670, 0
        %v1693 = vsel %vm1290, %v1671, 0
        %v1696 = vsel %vm1290, %v1672, 0
        %1698 = vmatpush.bf16.msra.mxu0 0
        %1699 = vmatpush.bf16.msra.mxu0 0
        %1700 = vmatpush.bf16.msra.mxu0 0
        %1701 = vmatpush.bf16.msra.mxu0 0
        %1702 = vmatpush.bf16.msra.mxu0 0
        %1703 = vmatpush.bf16.msra.mxu0 0
        %1704 = vmatpush.bf16.msra.mxu0 %v1686
        %1705 = vmatpush.bf16.msra.mxu0 %v1685
        %1706 = vmatmul.bf16.gmra.mxu0 %v1690
        %v1707 = vpop.f32.mrf.mxu0
        %v1708 = vadd.f32 0.0, %v1707
        %v1709 = vpop.f32.mrf.mxu0
        %v1710 = vadd.f32 0.0, %v1709
        %1711 = vmatmul.bf16.gmra.mxu0 %v1693
        %v1712 = vpop.f32.mrf.mxu0
        %v1713 = vadd.f32 0.0, %v1712
        %v1714 = vpop.f32.mrf.mxu0
        %v1715 = vadd.f32 0.0, %v1714
        %1716 = vmatmul.bf16.gmra.mxu0 %v1696
        %v1717 = vpop.f32.mrf.mxu0
        %v1718 = vadd.f32 0.0, %v1717
        %v1719 = vpop.f32.mrf.mxu0
        %1720 = vdwg.mxu0
        %v1721 = vadd.f32 %v1660, %v1708
        %v1722 = vadd.f32 %v1661, %v1710
        %v1723 = vadd.f32 %v1662, %v1713
        %v1724 = vadd.f32 %v1663, %v1715
        %v1725 = vadd.f32 %v1664, %v1718
        %v1726 = vmul.f32 %v1721, %v1285
        %v1727 = vmul.f32 %v1722, %v1286
        %v1728 = vmul.f32 %v1723, %v1287
        %v1729 = vmul.f32 %v1724, %v1288
        %v1730 = vmul.f32 %v1725, %v1289
        %1731 = vst.msk [vmem:[#allocation2 + $0x8] sm:$0xff] %vm1290, %v1726
        %1732 = vst.msk [vmem:[#allocation2 + $0x10] sm:$0xff] %vm1290, %v1727
        %1733 = vst.msk [vmem:[#allocation2 + $0x18] sm:$0xff] %vm1290, %v1728
        %1734 = vst.msk [vmem:[#allocation2 + $0x20] sm:$0xff] %vm1290, %v1729
        %1735 = vst.msk [vmem:[#allocation2 + $0x28] sm:$0xff] %vm1290, %v1730
        %v1736 = vld [vmem:[%s1071] sm:$0xff]
        %v1737 = vld [vmem:[%s1071 + $0x8] sm:$0xff]
        %v1738 = vpack.c.bf16 %v1737, %v1736
        %v1739 = vld [vmem:[%s1077] sm:$0xff]
        %v1740 = vld [vmem:[%s1077 + $0x8] sm:$0xff]
        %v1741 = vpack.c.bf16 %v1740, %v1739
        %v1742 = vld [vmem:[%s21] sm:$0x1]
        %v1743 = vld [vmem:[#allocation2 + $0x6] sm:$0xff]
        %v1744 = vld [vmem:[#allocation2 + $0xe] sm:$0xff]
        %v1745 = vld [vmem:[#allocation2 + $0x16] sm:$0xff]
        %v1746 = vld [vmem:[#allocation2 + $0x1e] sm:$0xff]
        %v1747 = vld [vmem:[#allocation2 + $0x26] sm:$0xff]
        %v1748 = vpack.c.bf16 %v1744, %v1743
        %v1749 = vpack.c.bf16 %v1746, %v1745
        %v1750 = vpack.c.bf16 %v1747, %v1747
        %v1751 = vld [vmem:[%s19] sm:$0xf]
        %v1752 = vld [vmem:[%s19 + $0x4] sm:$0xf]
        %v1753 = vld [vmem:[%s19 + $0x8] sm:$0xf]
        %v1754 = vld [vmem:[%s19 + $0xc] sm:$0xf]
        %v1759 = vunpack.c.l.b16 %v1751
        %v1760 = vunpack.c.l.b16 %v1752
        %v1761 = vunpack.c.l.b16 %v1753
        %v1762 = vunpack.c.l.b16 %v1754
        %v1763 = vpack.c.b16 %v1760, %v1759
        %v1764 = vpack.c.b16 %v1762, %v1761
        %v1768 = vsel %vm1290, %v1748, 0
        %v1771 = vsel %vm1290, %v1749, 0
        %v1774 = vsel %vm1290, %v1750, 0
        %1776 = vmatpush.bf16.msra.mxu0 0
        %1777 = vmatpush.bf16.msra.mxu0 0
        %1778 = vmatpush.bf16.msra.mxu0 0
        %1779 = vmatpush.bf16.msra.mxu0 0
        %1780 = vmatpush.bf16.msra.mxu0 0
        %1781 = vmatpush.bf16.msra.mxu0 0
        %1782 = vmatpush.bf16.msra.mxu0 %v1764
        %1783 = vmatpush.bf16.msra.mxu0 %v1763
        %1784 = vmatmul.bf16.gmra.mxu0 %v1768
        %v1785 = vpop.f32.mrf.mxu0
        %v1786 = vadd.f32 0.0, %v1785
        %v1787 = vpop.f32.mrf.mxu0
        %v1788 = vadd.f32 0.0, %v1787
        %1789 = vmatmul.bf16.gmra.mxu0 %v1771
        %v1790 = vpop.f32.mrf.mxu0
        %v1791 = vadd.f32 0.0, %v1790
        %v1792 = vpop.f32.mrf.mxu0
        %v1793 = vadd.f32 0.0, %v1792
        %1794 = vmatmul.bf16.gmra.mxu0 %v1774
        %v1795 = vpop.f32.mrf.mxu0
        %v1796 = vadd.f32 0.0, %v1795
        %v1797 = vpop.f32.mrf.mxu0
        %1798 = vdwg.mxu0
        %v1800 = vperm.slane %v1742, 0
        %v1802 = vadd.f32 %v1800, %v1786
        %v1803 = vadd.f32 %v1800, %v1788
        %v1804 = vadd.f32 %v1800, %v1791
        %v1805 = vadd.f32 %v1800, %v1793
        %v1806 = vadd.f32 %v1800, %v1796
        %v1807 = vld [vmem:[#allocation2 + $0x7] sm:$0xff]
        %v1808 = vld [vmem:[#allocation2 + $0xf] sm:$0xff]
        %v1809 = vld [vmem:[#allocation2 + $0x17] sm:$0xff]
        %v1810 = vld [vmem:[#allocation2 + $0x1f] sm:$0xff]
        %v1811 = vld [vmem:[#allocation2 + $0x27] sm:$0xff]
        %v1812 = vpack.c.bf16 %v1808, %v1807
        %v1813 = vpack.c.bf16 %v1810, %v1809
        %v1814 = vpack.c.bf16 %v1811, %v1811
        %v1815 = vld [vmem:[%s19 + $0x10] sm:$0xf]
        %v1816 = vld [vmem:[%s19 + $0x14] sm:$0xf]
        %v1817 = vld [vmem:[%s19 + $0x18] sm:$0xf]
        %v1818 = vld [vmem:[%s19 + $0x1c] sm:$0xf]
        %v1823 = vunpack.c.l.b16 %v1815
        %v1824 = vunpack.c.l.b16 %v1816
        %v1825 = vunpack.c.l.b16 %v1817
        %v1826 = vunpack.c.l.b16 %v1818
        %v1827 = vpack.c.b16 %v1824, %v1823
        %v1828 = vpack.c.b16 %v1826, %v1825
        %v1832 = vsel %vm1290, %v1812, 0
        %v1835 = vsel %vm1290, %v1813, 0
        %v1838 = vsel %vm1290, %v1814, 0
        %1840 = vmatpush.bf16.msra.mxu0 0
        %1841 = vmatpush.bf16.msra.mxu0 0
        %1842 = vmatpush.bf16.msra.mxu0 0
        %1843 = vmatpush.bf16.msra.mxu0 0
        %1844 = vmatpush.bf16.msra.mxu0 0
        %1845 = vmatpush.bf16.msra.mxu0 0
        %1846 = vmatpush.bf16.msra.mxu0 %v1828
        %1847 = vmatpush.bf16.msra.mxu0 %v1827
        %1848 = vmatmul.bf16.gmra.mxu0 %v1832
        %v1849 = vpop.f32.mrf.mxu0
        %v1850 = vadd.f32 0.0, %v1849
        %v1851 = vpop.f32.mrf.mxu0
        %v1852 = vadd.f32 0.0, %v1851
        %1853 = vmatmul.bf16.gmra.mxu0 %v1835
        %v1854 = vpop.f32.mrf.mxu0
        %v1855 = vadd.f32 0.0, %v1854
        %v1856 = vpop.f32.mrf.mxu0
        %v1857 = vadd.f32 0.0, %v1856
        %1858 = vmatmul.bf16.gmra.mxu0 %v1838
        %v1859 = vpop.f32.mrf.mxu0
        %v1860 = vadd.f32 0.0, %v1859
        %v1861 = vpop.f32.mrf.mxu0
        %1862 = vdwg.mxu0
        %v1863 = vadd.f32 %v1802, %v1850
        %v1864 = vadd.f32 %v1803, %v1852
        %v1865 = vadd.f32 %v1804, %v1855
        %v1866 = vadd.f32 %v1805, %v1857
        %v1867 = vadd.f32 %v1806, %v1860
        %v1868 = vld [vmem:[#allocation2 + $0x8] sm:$0xff]
        %v1869 = vld [vmem:[#allocation2 + $0x10] sm:$0xff]
        %v1870 = vld [vmem:[#allocation2 + $0x18] sm:$0xff]
        %v1871 = vld [vmem:[#allocation2 + $0x20] sm:$0xff]
        %v1872 = vld [vmem:[#allocation2 + $0x28] sm:$0xff]
        %v1873 = vpack.c.bf16 %v1869, %v1868
        %v1874 = vpack.c.bf16 %v1871, %v1870
        %v1875 = vpack.c.bf16 %v1872, %v1872
        %v1876 = vld [vmem:[%s19 + $0x20] sm:$0xf]
        %v1877 = vld [vmem:[%s19 + $0x24] sm:$0xf]
        %v1878 = vld [vmem:[%s19 + $0x28] sm:$0xf]
        %v1879 = vld [vmem:[%s19 + $0x2c] sm:$0xf]
        %v1884 = vunpack.c.l.b16 %v1876
        %v1885 = vunpack.c.l.b16 %v1877
        %v1886 = vunpack.c.l.b16 %v1878
        %v1887 = vunpack.c.l.b16 %v1879
        %v1888 = vpack.c.b16 %v1885, %v1884
        %v1889 = vpack.c.b16 %v1887, %v1886
        %v1893 = vsel %vm1290, %v1873, 0
        %v1896 = vsel %vm1290, %v1874, 0
        %v1899 = vsel %vm1290, %v1875, 0
        %1901 = vmatpush.bf16.msra.mxu0 0
        %1902 = vmatpush.bf16.msra.mxu0 0
        %1903 = vmatpush.bf16.msra.mxu0 0
        %1904 = vmatpush.bf16.msra.mxu0 0
        %1905 = vmatpush.bf16.msra.mxu0 0
        %1906 = vmatpush.bf16.msra.mxu0 0
        %1907 = vmatpush.bf16.msra.mxu0 %v1889
        %1908 = vmatpush.bf16.msra.mxu0 %v1888
        %1909 = vmatmul.bf16.gmra.mxu0 %v1893
        %v1910 = vpop.f32.mrf.mxu0
        %v1911 = vadd.f32 0.0, %v1910
        %v1912 = vpop.f32.mrf.mxu0
        %v1913 = vadd.f32 0.0, %v1912
        %1914 = vmatmul.bf16.gmra.mxu0 %v1896
        %v1915 = vpop.f32.mrf.mxu0
        %v1916 = vadd.f32 0.0, %v1915
        %v1917 = vpop.f32.mrf.mxu0
        %v1918 = vadd.f32 0.0, %v1917
        %1919 = vmatmul.bf16.gmra.mxu0 %v1899
        %v1920 = vpop.f32.mrf.mxu0
        %v1921 = vadd.f32 0.0, %v1920
        %v1922 = vpop.f32.mrf.mxu0
        %1923 = vdwg.mxu0
        %v1924 = vadd.f32 %v1863, %v1911
        %v1925 = vadd.f32 %v1864, %v1913
        %v1926 = vadd.f32 %v1865, %v1916
        %v1927 = vadd.f32 %v1866, %v1918
        %v1928 = vadd.f32 %v1867, %v1921
        %v1929 = vmax.f32 %v1924, 0.0
        %v1930 = vmax.f32 %v1925, 0.0
        %v1931 = vmax.f32 %v1926, 0.0
        %v1932 = vmax.f32 %v1927, 0.0
        %v1933 = vmax.f32 %v1928, 0.0
        %v1934 = vadd.f32 %v1868, %v1929
        %v1935 = vadd.f32 %v1869, %v1930
        %v1936 = vadd.f32 %v1870, %v1931
        %v1937 = vadd.f32 %v1871, %v1932
        %v1938 = vadd.f32 %v1872, %v1933
        %v1939 = vmul.f32 %v1934, 0.70710677
        %v1940 = vmul.f32 %v1935, 0.70710677
        %v1941 = vmul.f32 %v1936, 0.70710677
        %v1942 = vmul.f32 %v1937, 0.70710677
        %v1943 = vmul.f32 %v1938, 0.70710677
        %v1944 = vmul.f32 %v1939, %v1285
        %v1945 = vmul.f32 %v1940, %v1286
        %v1946 = vmul.f32 %v1941, %v1287
        %v1947 = vmul.f32 %v1942, %v1288
        %v1948 = vmul.f32 %v1943, %v1289
        %1949 = vst.msk [vmem:[#allocation2 + $0x8] sm:$0xff] %vm1290, %v1944
        %1950 = vst.msk [vmem:[#allocation2 + $0x10] sm:$0xff] %vm1290, %v1945
        %1951 = vst.msk [vmem:[#allocation2 + $0x18] sm:$0xff] %vm1290, %v1946
        %1952 = vst.msk [vmem:[#allocation2 + $0x20] sm:$0xff] %vm1290, %v1947
        %1953 = vst.msk [vmem:[#allocation2 + $0x28] sm:$0xff] %vm1290, %v1948
        %v1954 = vld [vmem:[%s25] sm:$0x1]
        %v1955 = vld [vmem:[#allocation2 + $0x4] sm:$0xff]
        %v1956 = vld [vmem:[#allocation2 + $0xc] sm:$0xff]
        %v1957 = vld [vmem:[#allocation2 + $0x14] sm:$0xff]
        %v1958 = vld [vmem:[#allocation2 + $0x1c] sm:$0xff]
        %v1959 = vld [vmem:[#allocation2 + $0x24] sm:$0xff]
        %v1960 = vpack.c.bf16 %v1956, %v1955
        %v1961 = vpack.c.bf16 %v1958, %v1957
        %v1962 = vpack.c.bf16 %v1959, %v1959
        %v1963 = vld [vmem:[%s23] sm:$0xf]
        %v1964 = vld [vmem:[%s23 + $0x4] sm:$0xf]
        %v1965 = vld [vmem:[%s23 + $0x8] sm:$0xf]
        %v1966 = vld [vmem:[%s23 + $0xc] sm:$0xf]
        %v1971 = vunpack.c.l.b16 %v1963
        %v1972 = vunpack.c.l.b16 %v1964
        %v1973 = vunpack.c.l.b16 %v1965
        %v1974 = vunpack.c.l.b16 %v1966
        %v1975 = vpack.c.b16 %v1972, %v1971
        %v1976 = vpack.c.b16 %v1974, %v1973
        %v1980 = vsel %vm1290, %v1960, 0
        %v1983 = vsel %vm1290, %v1961, 0
        %v1986 = vsel %vm1290, %v1962, 0
        %1988 = vmatpush.bf16.msra.mxu0 0
        %1989 = vmatpush.bf16.msra.mxu0 0
        %1990 = vmatpush.bf16.msra.mxu0 0
        %1991 = vmatpush.bf16.msra.mxu0 0
        %1992 = vmatpush.bf16.msra.mxu0 0
        %1993 = vmatpush.bf16.msra.mxu0 0
        %1994 = vmatpush.bf16.msra.mxu0 %v1976
        %1995 = vmatpush.bf16.msra.mxu0 %v1975
        %1996 = vmatmul.bf16.gmra.mxu0 %v1980
        %v1997 = vpop.f32.mrf.mxu0
        %v1998 = vadd.f32 0.0, %v1997
        %v1999 = vpop.f32.mrf.mxu0
        %v2000 = vadd.f32 0.0, %v1999
        %2001 = vmatmul.bf16.gmra.mxu0 %v1983
        %v2002 = vpop.f32.mrf.mxu0
        %v2003 = vadd.f32 0.0, %v2002
        %v2004 = vpop.f32.mrf.mxu0
        %v2005 = vadd.f32 0.0, %v2004
        %2006 = vmatmul.bf16.gmra.mxu0 %v1986
        %v2007 = vpop.f32.mrf.mxu0
        %v2008 = vadd.f32 0.0, %v2007
        %v2009 = vpop.f32.mrf.mxu0
        %2010 = vdwg.mxu0
        %v2012 = vperm.slane %v1954, 0
        %v2014 = vadd.f32 %v2012, %v1998
        %v2015 = vadd.f32 %v2012, %v2000
        %v2016 = vadd.f32 %v2012, %v2003
        %v2017 = vadd.f32 %v2012, %v2005
        %v2018 = vadd.f32 %v2012, %v2008
        %v2019 = vld [vmem:[#allocation2 + $0x6] sm:$0xff]
        %v2020 = vld [vmem:[#allocation2 + $0xe] sm:$0xff]
        %v2021 = vld [vmem:[#allocation2 + $0x16] sm:$0xff]
        %v2022 = vld [vmem:[#allocation2 + $0x1e] sm:$0xff]
        %v2023 = vld [vmem:[#allocation2 + $0x26] sm:$0xff]
        %v2024 = vpack.c.bf16 %v2020, %v2019
        %v2025 = vpack.c.bf16 %v2022, %v2021
        %v2026 = vpack.c.bf16 %v2023, %v2023
        %v2027 = vld [vmem:[%s23 + $0x10] sm:$0xf]
        %v2028 = vld [vmem:[%s23 + $0x14] sm:$0xf]
        %v2029 = vld [vmem:[%s23 + $0x18] sm:$0xf]
        %v2030 = vld [vmem:[%s23 + $0x1c] sm:$0xf]
        %v2035 = vunpack.c.l.b16 %v2027
        %v2036 = vunpack.c.l.b16 %v2028
        %v2037 = vunpack.c.l.b16 %v2029
        %v2038 = vunpack.c.l.b16 %v2030
        %v2039 = vpack.c.b16 %v2036, %v2035
        %v2040 = vpack.c.b16 %v2038, %v2037
        %v2044 = vsel %vm1290, %v2024, 0
        %v2047 = vsel %vm1290, %v2025, 0
        %v2050 = vsel %vm1290, %v2026, 0
        %2052 = vmatpush.bf16.msra.mxu0 0
        %2053 = vmatpush.bf16.msra.mxu0 0
        %2054 = vmatpush.bf16.msra.mxu0 0
        %2055 = vmatpush.bf16.msra.mxu0 0
        %2056 = vmatpush.bf16.msra.mxu0 0
        %2057 = vmatpush.bf16.msra.mxu0 0
        %2058 = vmatpush.bf16.msra.mxu0 %v2040
        %2059 = vmatpush.bf16.msra.mxu0 %v2039
        %2060 = vmatmul.bf16.gmra.mxu0 %v2044
        %v2061 = vpop.f32.mrf.mxu0
        %v2062 = vadd.f32 0.0, %v2061
        %v2063 = vpop.f32.mrf.mxu0
        %v2064 = vadd.f32 0.0, %v2063
        %2065 = vmatmul.bf16.gmra.mxu0 %v2047
        %v2066 = vpop.f32.mrf.mxu0
        %v2067 = vadd.f32 0.0, %v2066
        %v2068 = vpop.f32.mrf.mxu0
        %v2069 = vadd.f32 0.0, %v2068
        %2070 = vmatmul.bf16.gmra.mxu0 %v2050
        %v2071 = vpop.f32.mrf.mxu0
        %v2072 = vadd.f32 0.0, %v2071
        %v2073 = vpop.f32.mrf.mxu0
        %2074 = vdwg.mxu0
        %v2075 = vadd.f32 %v2014, %v2062
        %v2076 = vadd.f32 %v2015, %v2064
        %v2077 = vadd.f32 %v2016, %v2067
        %v2078 = vadd.f32 %v2017, %v2069
        %v2079 = vadd.f32 %v2018, %v2072
        %v2080 = vld [vmem:[#allocation2 + $0x8] sm:$0xff]
        %v2081 = vld [vmem:[#allocation2 + $0x10] sm:$0xff]
        %v2082 = vld [vmem:[#allocation2 + $0x18] sm:$0xff]
        %v2083 = vld [vmem:[#allocation2 + $0x20] sm:$0xff]
        %v2084 = vld [vmem:[#allocation2 + $0x28] sm:$0xff]
        %v2085 = vpack.c.bf16 %v2081, %v2080
        %v2086 = vpack.c.bf16 %v2083, %v2082
        %v2087 = vpack.c.bf16 %v2084, %v2084
        %v2088 = vld [vmem:[%s23 + $0x20] sm:$0xf]
        %v2089 = vld [vmem:[%s23 + $0x24] sm:$0xf]
        %v2090 = vld [vmem:[%s23 + $0x28] sm:$0xf]
        %v2091 = vld [vmem:[%s23 + $0x2c] sm:$0xf]
        %v2096 = vunpack.c.l.b16 %v2088
        %v2097 = vunpack.c.l.b16 %v2089
        %v2098 = vunpack.c.l.b16 %v2090
        %v2099 = vunpack.c.l.b16 %v2091
        %v2100 = vpack.c.b16 %v2097, %v2096
        %v2101 = vpack.c.b16 %v2099, %v2098
        %v2105 = vsel %vm1290, %v2085, 0
        %v2108 = vsel %vm1290, %v2086, 0
        %v2111 = vsel %vm1290, %v2087, 0
        %2113 = vmatpush.bf16.msra.mxu0 0
        %2114 = vmatpush.bf16.msra.mxu0 0
        %2115 = vmatpush.bf16.msra.mxu0 0
        %2116 = vmatpush.bf16.msra.mxu0 0
        %2117 = vmatpush.bf16.msra.mxu0 0
        %2118 = vmatpush.bf16.msra.mxu0 0
        %2119 = vmatpush.bf16.msra.mxu0 %v2101
        %2120 = vmatpush.bf16.msra.mxu0 %v2100
        %2121 = vmatmul.bf16.gmra.mxu0 %v2105
        %v2122 = vpop.f32.mrf.mxu0
        %v2123 = vadd.f32 0.0, %v2122
        %v2124 = vpop.f32.mrf.mxu0
        %v2125 = vadd.f32 0.0, %v2124
        %2126 = vmatmul.bf16.gmra.mxu0 %v2108
        %v2127 = vpop.f32.mrf.mxu0
        %v2128 = vadd.f32 0.0, %v2127
        %v2129 = vpop.f32.mrf.mxu0
        %v2130 = vadd.f32 0.0, %v2129
        %2131 = vmatmul.bf16.gmra.mxu0 %v2111
        %v2132 = vpop.f32.mrf.mxu0
        %v2133 = vadd.f32 0.0, %v2132
        %v2134 = vpop.f32.mrf.mxu0
        %2135 = vdwg.mxu0
        %v2136 = vadd.f32 %v2075, %v2123
        %v2137 = vadd.f32 %v2076, %v2125
        %v2138 = vadd.f32 %v2077, %v2128
        %v2139 = vadd.f32 %v2078, %v2130
        %v2140 = vadd.f32 %v2079, %v2133
        %v2141 = vmax.f32 %v2136, 0.0
        %v2142 = vmax.f32 %v2137, 0.0
        %v2143 = vmax.f32 %v2138, 0.0
        %v2144 = vmax.f32 %v2139, 0.0
        %v2145 = vmax.f32 %v2140, 0.0
        %v2146 = vadd.f32 %v2080, %v2141
        %v2147 = vadd.f32 %v2081, %v2142
        %v2148 = vadd.f32 %v2082, %v2143
        %v2149 = vadd.f32 %v2083, %v2144
        %v2150 = vadd.f32 %v2084, %v2145
        %v2151 = vmul.f32 %v2146, 0.70710677
        %v2152 = vmul.f32 %v2147, 0.70710677
        %v2153 = vmul.f32 %v2148, 0.70710677
        %v2154 = vmul.f32 %v2149, 0.70710677
        %v2155 = vmul.f32 %v2150, 0.70710677
        %v2156 = vmul.f32 %v2151, %v1285
        %v2157 = vmul.f32 %v2152, %v1286
        %v2158 = vmul.f32 %v2153, %v1287
        %v2159 = vmul.f32 %v2154, %v1288
        %v2160 = vmul.f32 %v2155, %v1289
        %2161 = vst.msk [vmem:[#allocation2 + $0x8] sm:$0xff] %vm1290, %v2156
        %2162 = vst.msk [vmem:[#allocation2 + $0x10] sm:$0xff] %vm1290, %v2157
        %2163 = vst.msk [vmem:[#allocation2 + $0x18] sm:$0xff] %vm1290, %v2158
        %2164 = vst.msk [vmem:[#allocation2 + $0x20] sm:$0xff] %vm1290, %v2159
        %2165 = vst.msk [vmem:[#allocation2 + $0x28] sm:$0xff] %vm1290, %v2160
        %v2166 = vld [vmem:[#allocation2 + $0x8] sm:$0xff]
        %v2167 = vld [vmem:[#allocation2 + $0x10] sm:$0xff]
        %v2168 = vld [vmem:[#allocation2 + $0x18] sm:$0xff]
        %v2169 = vld [vmem:[#allocation2 + $0x20] sm:$0xff]
        %v2170 = vld [vmem:[#allocation2 + $0x28] sm:$0xff]
        %v2171 = vpack.c.bf16 %v2167, %v2166
        %v2172 = vpack.c.bf16 %v2169, %v2168
        %v2173 = vpack.c.bf16 %v2170, %v2170
        %v2174 = vld [vmem:[%s27] sm:$0xf]
        %v2175 = vld [vmem:[%s27 + $0x4] sm:$0xf]
        %v2176 = vld [vmem:[%s27 + $0x8] sm:$0xf]
        %v2177 = vld [vmem:[%s27 + $0xc] sm:$0xf]
        %v2178 = vld [vmem:[%s29] sm:$0x1]
        %v2180 = vperm.slane %v2178, 0
        %v2186 = vunpack.c.l.b16 %v2174
        %v2187 = vunpack.c.l.b16 %v2175
        %v2188 = vunpack.c.l.b16 %v2176
        %v2189 = vunpack.c.l.b16 %v2177
        %v2190 = vpack.c.b16 %v2187, %v2186
        %v2191 = vpack.c.b16 %v2189, %v2188
        %v2195 = vsel %vm1290, %v2171, 0
        %v2198 = vsel %vm1290, %v2172, 0
        %v2201 = vsel %vm1290, %v2173, 0
        %2203 = vmatpush.bf16.msra.mxu0 0
        %2204 = vmatpush.bf16.msra.mxu0 0
        %2205 = vmatpush.bf16.msra.mxu0 0
        %2206 = vmatpush.bf16.msra.mxu0 0
        %2207 = vmatpush.bf16.msra.mxu0 0
        %2208 = vmatpush.bf16.msra.mxu0 0
        %2209 = vmatpush.bf16.msra.mxu0 %v2191
        %2210 = vmatpush.bf16.msra.mxu0 %v2190
        %2211 = vmatmul.bf16.gmra.mxu0 %v2195
        %v2212 = vpop.f32.mrf.mxu0
        %v2213 = vadd.f32 %v2180, %v2212
        %v2214 = vpop.f32.mrf.mxu0
        %v2215 = vadd.f32 %v2180, %v2214
        %2216 = vmatmul.bf16.gmra.mxu0 %v2198
        %v2217 = vpop.f32.mrf.mxu0
        %v2218 = vpop.f32.mrf.mxu0
        %v2219 = vadd.f32 %v2180, %v2218
        %2220 = vmatmul.bf16.gmra.mxu0 %v2201
        %v2221 = vpop.f32.mrf.mxu0
        %v2222 = vadd.f32 %v2180, %v2221
        %v2223 = vpop.f32.mrf.mxu0
        %2224 = vdwg.mxu0
        %v2225 = vld [vmem:[%s31] sm:$0xf]
        %v2226 = vld [vmem:[%s31 + $0x4] sm:$0xf]
        %v2227 = vld [vmem:[%s31 + $0x8] sm:$0xf]
        %v2228 = vld [vmem:[%s31 + $0xc] sm:$0xf]
        %v2229 = vld [vmem:[%s33] sm:$0x1]
        %v2231 = vperm.slane %v2229, 0
        %v2237 = vunpack.c.l.b16 %v2225
        %v2238 = vunpack.c.l.b16 %v2226
        %v2239 = vunpack.c.l.b16 %v2227
        %v2240 = vunpack.c.l.b16 %v2228
        %v2241 = vpack.c.b16 %v2238, %v2237
        %v2242 = vpack.c.b16 %v2240, %v2239
        %v2246 = vsel %vm1290, %v1738, 0
        %2248 = vmatpush.bf16.msra.mxu0 0
        %2249 = vmatpush.bf16.msra.mxu0 0
        %2250 = vmatpush.bf16.msra.mxu0 0
        %2251 = vmatpush.bf16.msra.mxu0 0
        %2252 = vmatpush.bf16.msra.mxu0 0
        %2253 = vmatpush.bf16.msra.mxu0 0
        %2254 = vmatpush.bf16.msra.mxu0 %v2242
        %2255 = vmatpush.bf16.msra.mxu0 %v2241
        %2256 = vmatmul.bf16.gmra.mxu0 %v2246
        %v2257 = vpop.f32.mrf.mxu0
        %v2258 = vadd.f32 %v2231, %v2257
        %v2259 = vpop.f32.mrf.mxu0
        %v2260 = vadd.f32 %v2231, %v2259
        %2261 = vdwg.mxu0
        %v2262 = vld [vmem:[%s35] sm:$0xf]
        %v2263 = vld [vmem:[%s35 + $0x4] sm:$0xf]
        %v2264 = vld [vmem:[%s35 + $0x8] sm:$0xf]
        %v2265 = vld [vmem:[%s35 + $0xc] sm:$0xf]
        %v2266 = vld [vmem:[%s37] sm:$0x1]
        %v2268 = vperm.slane %v2266, 0
        %v2274 = vunpack.c.l.b16 %v2262
        %v2275 = vunpack.c.l.b16 %v2263
        %v2276 = vunpack.c.l.b16 %v2264
        %v2277 = vunpack.c.l.b16 %v2265
        %v2278 = vpack.c.b16 %v2275, %v2274
        %v2279 = vpack.c.b16 %v2277, %v2276
        %v2283 = vsel %vm1290, %v1741, 0
        %2285 = vmatpush.bf16.msra.mxu0 0
        %2286 = vmatpush.bf16.msra.mxu0 0
        %2287 = vmatpush.bf16.msra.mxu0 0
        %2288 = vmatpush.bf16.msra.mxu0 0
        %2289 = vmatpush.bf16.msra.mxu0 0
        %2290 = vmatpush.bf16.msra.mxu0 0
        %2291 = vmatpush.bf16.msra.mxu0 %v2279
        %2292 = vmatpush.bf16.msra.mxu0 %v2278
        %2293 = vmatmul.bf16.gmra.mxu0 %v2283
        %v2294 = vpop.f32.mrf.mxu0
        %v2295 = vadd.f32 %v2268, %v2294
        %v2296 = vpop.f32.mrf.mxu0
        %v2297 = vadd.f32 %v2268, %v2296
        %2298 = vdwg.mxu0
        %2299 = vrot.lane.b32.xlu0 %v2190, 112
        %v2300 = vpop.permute.xlu0 %2299
        %2301 = vrot.lane.b32.xlu0 %v2191, 112
        %v2302 = vpop.permute.xlu0 %2301
        %2305 = vrot.lane.b32.xlu0 %v2180, 112
        %v2306 = vpop.permute.xlu0 %2305
        %2308 = vmatpush.bf16.msra.mxu0 0
        %2309 = vmatpush.bf16.msra.mxu0 0
        %2310 = vmatpush.bf16.msra.mxu0 0
        %2311 = vmatpush.bf16.msra.mxu0 0
        %2312 = vmatpush.bf16.msra.mxu0 0
        %2313 = vmatpush.bf16.msra.mxu0 0
        %2314 = vmatpush.bf16.msra.mxu0 %v2302
        %2315 = vmatpush.bf16.msra.mxu0 %v2300
        %2316 = vmatmul.bf16.gmra.mxu0 %v2195
        %v2317 = vpop.f32.mrf.mxu0
        %v2318 = vadd.f32 %v2306, %v2317
        %v2319 = vpop.f32.mrf.mxu0
        %v2320 = vadd.f32 %v2306, %v2319
        %2321 = vmatmul.bf16.gmra.mxu0 %v2198
        %v2322 = vpop.f32.mrf.mxu0
        %v2323 = vpop.f32.mrf.mxu0
        %v2324 = vadd.f32 %v2306, %v2323
        %2325 = vmatmul.bf16.gmra.mxu0 %v2201
        %v2326 = vpop.f32.mrf.mxu0
        %v2327 = vadd.f32 %v2306, %v2326
        %v2328 = vpop.f32.mrf.mxu0
        %2329 = vdwg.mxu0
        %2330 = vrot.lane.b32.xlu0 %v2241, 112
        %v2331 = vpop.permute.xlu0 %2330
        %2332 = vrot.lane.b32.xlu0 %v2242, 112
        %v2333 = vpop.permute.xlu0 %2332
        %2336 = vrot.lane.b32.xlu0 %v2231, 112
        %v2337 = vpop.permute.xlu0 %2336
        %2339 = vmatpush.bf16.msra.mxu0 0
        %2340 = vmatpush.bf16.msra.mxu0 0
        %2341 = vmatpush.bf16.msra.mxu0 0
        %2342 = vmatpush.bf16.msra.mxu0 0
        %2343 = vmatpush.bf16.msra.mxu0 0
        %2344 = vmatpush.bf16.msra.mxu0 0
        %2345 = vmatpush.bf16.msra.mxu0 %v2333
        %2346 = vmatpush.bf16.msra.mxu0 %v2331
        %2347 = vmatmul.bf16.gmra.mxu0 %v2246
        %v2348 = vpop.f32.mrf.mxu0
        %v2349 = vadd.f32 %v2337, %v2348
        %v2350 = vpop.f32.mrf.mxu0
        %v2351 = vadd.f32 %v2337, %v2350
        %2352 = vdwg.mxu0
        %2353 = vrot.lane.b32.xlu0 %v2278, 112
        %v2354 = vpop.permute.xlu0 %2353
        %2355 = vrot.lane.b32.xlu0 %v2279, 112
        %v2356 = vpop.permute.xlu0 %2355
        %2359 = vrot.lane.b32.xlu0 %v2268, 112
        %v2360 = vpop.permute.xlu0 %2359
        %2362 = vmatpush.bf16.msra.mxu0 0
        %2363 = vmatpush.bf16.msra.mxu0 0
        %2364 = vmatpush.bf16.msra.mxu0 0
        %2365 = vmatpush.bf16.msra.mxu0 0
        %2366 = vmatpush.bf16.msra.mxu0 0
        %2367 = vmatpush.bf16.msra.mxu0 0
        %2368 = vmatpush.bf16.msra.mxu0 %v2356
        %2369 = vmatpush.bf16.msra.mxu0 %v2354
        %2370 = vmatmul.bf16.gmra.mxu0 %v2283
        %v2371 = vpop.f32.mrf.mxu0
        %v2372 = vadd.f32 %v2360, %v2371
        %v2373 = vpop.f32.mrf.mxu0
        %v2374 = vadd.f32 %v2360, %v2373
        %2375 = vdwg.mxu0
        %v2376 = vpack.c.bf16 %v2215, %v2213
        %v2377 = vpack.c.bf16 %v2258, %v2258
        %v2378 = vpack.c.bf16 %v2295, %v2295
        %vm2379 = vcmask 130048
        %v2381 = vsel %vm2379, %v2376, 0
        %v2384 = vsel %vm2379, %v2377, 0
        %2386 = vmatpush.bf16.xpose.msra.mxu0 0
        %2387 = vmatpush.bf16.xpose.msra.mxu0 0
        %2388 = vmatpush.bf16.xpose.msra.mxu0 0
        %2389 = vmatpush.bf16.xpose.msra.mxu0 0
        %2390 = vmatpush.bf16.xpose.msra.mxu0 0
        %2391 = vmatpush.bf16.xpose.msra.mxu0 0
        %2392 = vmatpush.bf16.xpose.msra.mxu0 0
        %2393 = vmatpush.bf16.xpose.msra.mxu0 %v2384
        %2394 = vmatmul.bf16.gmra.mxu0 %v2381
        %v2395 = vpop.f32.mrf.mxu0
        %v2396 = vadd.f32 0.0, %v2395
        %v2397 = vpop.f32.mrf.mxu0
        %v2398 = vadd.f32 0.0, %v2397
        %2399 = vdwg.mxu0
        %v2400 = vmul.f32 %v2396, 0.25
        %v2401 = vmul.f32 %v2398, 0.25
        %v2402 = vsel %vm1304, %v2400, -inf
        %2403 = vmax.xlane.f32.xlu0 %v2402
        %v2404 = vpop.xlane.xlu0 %2403
        %v2405 = vsel %vm1304, %v2401, -inf
        %2406 = vmax.xlane.f32.xlu0 %v2405
        %v2407 = vpop.xlane.xlu0 %2406
        %v2408 = vsub.f32 %v2400, %v2404
        %v2409 = vsub.f32 %v2401, %v2407
        %v2410 = vmul.f32 %v2408, 1.442695
        %v2411 = vpow.pop %v2410
        %v2412 = vmul.f32 %v2409, 1.442695
        %v2413 = vpow.pop %v2412
        %v2414 = vsel %vm1304, %v2411, 0.0
        %2415 = vadd.xlane.f32.xlu0 %v2414
        %v2416 = vpop.xlane.xlu0 %2415
        %v2417 = vsel %vm1304, %v2413, 0.0
        %2418 = vadd.xlane.f32.xlu0 %v2417
        %v2419 = vpop.xlane.xlu0 %2418
        %v2420 = vrcp.pop %v2416
        %v2421 = vrcp.pop %v2419
        %v2422 = vmul.f32 %v2411, %v2420
        %v2423 = vmul.f32 %v2413, %v2421
        %v2424 = vpack.c.bf16 %v2423, %v2422
        %v2426 = vsel %vm1304, %v2424, 0
        %v2429 = vsel %vm1311, %v2378, 0
        %2431 = vmatpush.bf16.msra.mxu0 0
        %2432 = vmatpush.bf16.msra.mxu0 0
        %2433 = vmatpush.bf16.msra.mxu0 0
        %2434 = vmatpush.bf16.msra.mxu0 0
        %2435 = vmatpush.bf16.msra.mxu0 0
        %2436 = vmatpush.bf16.msra.mxu0 0
        %2437 = vmatpush.bf16.msra.mxu0 0
        %2438 = vmatpush.bf16.msra.mxu0 %v2429
        %2439 = vmatmul.bf16.gmra.mxu0 %v2426
        %v2440 = vpop.f32.mrf.mxu0
        %v2441 = vadd.f32 0.0, %v2440
        %v2442 = vpop.f32.mrf.mxu0
        %v2443 = vadd.f32 0.0, %v2442
        %2444 = vdwg.mxu0
        %v2445 = vpack.c.bf16 %v2320, %v2318
        %v2446 = vpack.c.bf16 %v2349, %v2349
        %v2447 = vpack.c.bf16 %v2372, %v2372
        %v2449 = vsel %vm2379, %v2445, 0
        %v2452 = vsel %vm2379, %v2446, 0
        %2454 = vmatpush.bf16.xpose.msra.mxu0 0
        %2455 = vmatpush.bf16.xpose.msra.mxu0 0
        %2456 = vmatpush.bf16.xpose.msra.mxu0 0
        %2457 = vmatpush.bf16.xpose.msra.mxu0 0
        %2458 = vmatpush.bf16.xpose.msra.mxu0 0
        %2459 = vmatpush.bf16.xpose.msra.mxu0 0
        %2460 = vmatpush.bf16.xpose.msra.mxu0 0
        %2461 = vmatpush.bf16.xpose.msra.mxu0 %v2452
        %2462 = vmatmul.bf16.gmra.mxu0 %v2449
        %v2463 = vpop.f32.mrf.mxu0
        %v2464 = vadd.f32 0.0, %v2463
        %v2465 = vpop.f32.mrf.mxu0
        %v2466 = vadd.f32 0.0, %v2465
        %2467 = vdwg.mxu0
        %v2468 = vmul.f32 %v2464, 0.25
        %v2469 = vmul.f32 %v2466, 0.25
        %v2470 = vsel %vm1304, %v2468, -inf
        %2471 = vmax.xlane.f32.xlu0 %v2470
        %v2472 = vpop.xlane.xlu0 %2471
        %v2473 = vsel %vm1304, %v2469, -inf
        %2474 = vmax.xlane.f32.xlu0 %v2473
        %v2475 = vpop.xlane.xlu0 %2474
        %v2476 = vsub.f32 %v2468, %v2472
        %v2477 = vsub.f32 %v2469, %v2475
        %v2478 = vmul.f32 %v2476, 1.442695
        %v2479 = vpow.pop %v2478
        %v2480 = vmul.f32 %v2477, 1.442695
        %v2481 = vpow.pop %v2480
        %v2482 = vsel %vm1304, %v2479, 0.0
        %2483 = vadd.xlane.f32.xlu0 %v2482
        %v2484 = vpop.xlane.xlu0 %2483
        %v2485 = vsel %vm1304, %v2481, 0.0
        %2486 = vadd.xlane.f32.xlu0 %v2485
        %v2487 = vpop.xlane.xlu0 %2486
        %v2488 = vrcp.pop %v2484
        %v2489 = vrcp.pop %v2487
        %v2490 = vmul.f32 %v2479, %v2488
        %v2491 = vmul.f32 %v2481, %v2489
        %v2492 = vpack.c.bf16 %v2491, %v2490
        %v2494 = vsel %vm1304, %v2492, 0
        %v2497 = vsel %vm1311, %v2447, 0
        %2499 = vmatpush.bf16.msra.mxu0 0
        %2500 = vmatpush.bf16.msra.mxu0 0
        %2501 = vmatpush.bf16.msra.mxu0 0
        %2502 = vmatpush.bf16.msra.mxu0 0
        %2503 = vmatpush.bf16.msra.mxu0 0
        %2504 = vmatpush.bf16.msra.mxu0 0
        %2505 = vmatpush.bf16.msra.mxu0 0
        %2506 = vmatpush.bf16.msra.mxu0 %v2497
        %2507 = vmatmul.bf16.gmra.mxu0 %v2494
        %v2508 = vpop.f32.mrf.mxu0
        %v2509 = vadd.f32 0.0, %v2508
        %v2510 = vpop.f32.mrf.mxu0
        %v2511 = vadd.f32 0.0, %v2510
        %2512 = vdwg.mxu0
        %2515 = vrot.lane.b32.xlu0 %v2509, 16
        %v2516 = vpop.permute.xlu0 %2515
        %2517 = vrot.lane.b32.xlu0 %v2511, 16
        %v2518 = vpop.permute.xlu0 %2517
        %v2521 = vsel %vm2379, %v2441, %v2516
        %v2522 = vsel %vm2379, %v2443, %v2518
        %v2523 = vpack.c.bf16 %v2522, %v2521
        %v2524 = vld [vmem:[%s39] sm:$0xf]
        %v2525 = vld [vmem:[%s39 + $0x4] sm:$0xf]
        %v2526 = vld [vmem:[%s39 + $0x8] sm:$0xf]
        %v2527 = vld [vmem:[%s39 + $0xc] sm:$0xf]
        %v2528 = vld [vmem:[%s41] sm:$0x1]
        %v2530 = vperm.slane %v2528, 0
        %v2536 = vunpack.c.l.b16 %v2524
        %v2537 = vunpack.c.l.b16 %v2525
        %v2538 = vunpack.c.l.b16 %v2526
        %v2539 = vunpack.c.l.b16 %v2527
        %v2540 = vpack.c.b16 %v2537, %v2536
        %v2541 = vpack.c.b16 %v2539, %v2538
        %v2545 = vsel %vm1290, %v2523, 0
        %2547 = vmatpush.bf16.msra.mxu0 0
        %2548 = vmatpush.bf16.msra.mxu0 0
        %2549 = vmatpush.bf16.msra.mxu0 0
        %2550 = vmatpush.bf16.msra.mxu0 0
        %2551 = vmatpush.bf16.msra.mxu0 0
        %2552 = vmatpush.bf16.msra.mxu0 0
        %2553 = vmatpush.bf16.msra.mxu0 %v2541
        %2554 = vmatpush.bf16.msra.mxu0 %v2540
        %2555 = vmatmul.bf16.gmra.mxu0 %v2545
        %v2556 = vpop.f32.mrf.mxu0
        %v2557 = vadd.f32 %v2530, %v2556
        %v2558 = vpop.f32.mrf.mxu0
        %v2559 = vadd.f32 %v2530, %v2558
        %2560 = vdwg.mxu0
        %v2561 = vadd.f32 %v2166, %v2557
        %v2562 = vadd.f32 %v2167, %v2559
        %v2563 = vmul.f32 %v2561, 0.70710677
        %v2564 = vmul.f32 %v2562, 0.70710677
        %2565 = vst.msk [vmem:[#allocation2 + $0x8] sm:$0xff] %vm1290, %v2563
        %2566 = vst.msk [vmem:[#allocation2 + $0x10] sm:$0xff] %vm1290, %v2564
        %2567 = vst.msk [vmem:[%s1092] sm:$0xff] %vm1304, %v2422
        %2568 = vst.msk [vmem:[%s1092 + $0x8] sm:$0xff] %vm1304, %v2423
        %2569 = vst.msk [vmem:[%s1092 + $0x10] sm:$0xff] %vm1304, %v2490
        %2570 = vst.msk [vmem:[%s1092 + $0x18] sm:$0xff] %vm1304, %v2491
        %v2571 = vpack.c.bf16 %v2222, %v2219
        %v2572 = vpack.c.bf16 %v2260, %v2260
        %v2573 = vpack.c.bf16 %v2297, %v2297
        %v2575 = vsel %vm2379, %v2571, 0
        %v2578 = vsel %vm2379, %v2572, 0
        %2580 = vmatpush.bf16.xpose.msra.mxu0 0
        %2581 = vmatpush.bf16.xpose.msra.mxu0 0
        %2582 = vmatpush.bf16.xpose.msra.mxu0 0
        %2583 = vmatpush.bf16.xpose.msra.mxu0 0
        %2584 = vmatpush.bf16.xpose.msra.mxu0 0
        %2585 = vmatpush.bf16.xpose.msra.mxu0 0
        %2586 = vmatpush.bf16.xpose.msra.mxu0 0
        %2587 = vmatpush.bf16.xpose.msra.mxu0 %v2578
        %2588 = vmatmul.bf16.gmra.mxu0 %v2575
        %v2589 = vpop.f32.mrf.mxu0
        %v2590 = vadd.f32 0.0, %v2589
        %v2591 = vpop.f32.mrf.mxu0
        %v2592 = vadd.f32 0.0, %v2591
        %2593 = vdwg.mxu0
        %v2594 = vmul.f32 %v2590, 0.25
        %v2595 = vmul.f32 %v2592, 0.25
        %v2596 = vsel %vm1304, %v2594, -inf
        %2597 = vmax.xlane.f32.xlu0 %v2596
        %v2598 = vpop.xlane.xlu0 %2597
        %v2599 = vsel %vm1304, %v2595, -inf
        %2600 = vmax.xlane.f32.xlu0 %v2599
        %v2601 = vpop.xlane.xlu0 %2600
        %v2602 = vsub.f32 %v2594, %v2598
        %v2603 = vsub.f32 %v2595, %v2601
        %v2604 = vmul.f32 %v2602, 1.442695
        %v2605 = vpow.pop %v2604
        %v2606 = vmul.f32 %v2603, 1.442695
        %v2607 = vpow.pop %v2606
        %v2608 = vsel %vm1304, %v2605, 0.0
        %2609 = vadd.xlane.f32.xlu0 %v2608
        %v2610 = vpop.xlane.xlu0 %2609
        %v2611 = vsel %vm1304, %v2607, 0.0
        %2612 = vadd.xlane.f32.xlu0 %v2611
        %v2613 = vpop.xlane.xlu0 %2612
        %v2614 = vrcp.pop %v2610
        %v2615 = vrcp.pop %v2613
        %v2616 = vmul.f32 %v2605, %v2614
        %v2617 = vmul.f32 %v2607, %v2615
        %v2618 = vpack.c.bf16 %v2617, %v2616
        %v2620 = vsel %vm1304, %v2618, 0
        %v2623 = vsel %vm1311, %v2573, 0
        %2625 = vmatpush.bf16.msra.mxu0 0
        %2626 = vmatpush.bf16.msra.mxu0 0
        %2627 = vmatpush.bf16.msra.mxu0 0
        %2628 = vmatpush.bf16.msra.mxu0 0
        %2629 = vmatpush.bf16.msra.mxu0 0
        %2630 = vmatpush.bf16.msra.mxu0 0
        %2631 = vmatpush.bf16.msra.mxu0 0
        %2632 = vmatpush.bf16.msra.mxu0 %v2623
        %2633 = vmatmul.bf16.gmra.mxu0 %v2620
        %v2634 = vpop.f32.mrf.mxu0
        %v2635 = vadd.f32 0.0, %v2634
        %v2636 = vpop.f32.mrf.mxu0
        %v2637 = vadd.f32 0.0, %v2636
        %2638 = vdwg.mxu0
        %v2639 = vpack.c.bf16 %v2327, %v2324
        %v2640 = vpack.c.bf16 %v2351, %v2351
        %v2641 = vpack.c.bf16 %v2374, %v2374
        %v2643 = vsel %vm2379, %v2639, 0
        %v2646 = vsel %vm2379, %v2640, 0
        %2648 = vmatpush.bf16.xpose.msra.mxu0 0
        %2649 = vmatpush.bf16.xpose.msra.mxu0 0
        %2650 = vmatpush.bf16.xpose.msra.mxu0 0
        %2651 = vmatpush.bf16.xpose.msra.mxu0 0
        %2652 = vmatpush.bf16.xpose.msra.mxu0 0
        %2653 = vmatpush.bf16.xpose.msra.mxu0 0
        %2654 = vmatpush.bf16.xpose.msra.mxu0 0
        %2655 = vmatpush.bf16.xpose.msra.mxu0 %v2646
        %2656 = vmatmul.bf16.gmra.mxu0 %v2643
        %v2657 = vpop.f32.mrf.mxu0
        %v2658 = vadd.f32 0.0, %v2657
        %v2659 = vpop.f32.mrf.mxu0
        %v2660 = vadd.f32 0.0, %v2659
        %2661 = vdwg.mxu0
        %v2662 = vmul.f32 %v2658, 0.25
        %v2663 = vmul.f32 %v2660, 0.25
        %v2664 = vsel %vm1304, %v2662, -inf
        %2665 = vmax.xlane.f32.xlu0 %v2664
        %v2666 = vpop.xlane.xlu0 %2665
        %v2667 = vsel %vm1304, %v2663, -inf
        %2668 = vmax.xlane.f32.xlu0 %v2667
        %v2669 = vpop.xlane.xlu0 %2668
        %v2670 = vsub.f32 %v2662, %v2666
        %v2671 = vsub.f32 %v2663, %v2669
        %v2672 = vmul.f32 %v2670, 1.442695
        %v2673 = vpow.pop %v2672
        %v2674 = vmul.f32 %v2671, 1.442695
        %v2675 = vpow.pop %v2674
        %v2676 = vsel %vm1304, %v2673, 0.0
        %2677 = vadd.xlane.f32.xlu0 %v2676
        %v2678 = vpop.xlane.xlu0 %2677
        %v2679 = vsel %vm1304, %v2675, 0.0
        %2680 = vadd.xlane.f32.xlu0 %v2679
        %v2681 = vpop.xlane.xlu0 %2680
        %v2682 = vrcp.pop %v2678
        %v2683 = vrcp.pop %v2681
        %v2684 = vmul.f32 %v2673, %v2682
        %v2685 = vmul.f32 %v2675, %v2683
        %v2686 = vpack.c.bf16 %v2685, %v2684
        %v2688 = vsel %vm1304, %v2686, 0
        %v2691 = vsel %vm1311, %v2641, 0
        %2693 = vmatpush.bf16.msra.mxu0 0
        %2694 = vmatpush.bf16.msra.mxu0 0
        %2695 = vmatpush.bf16.msra.mxu0 0
        %2696 = vmatpush.bf16.msra.mxu0 0
        %2697 = vmatpush.bf16.msra.mxu0 0
        %2698 = vmatpush.bf16.msra.mxu0 0
        %2699 = vmatpush.bf16.msra.mxu0 0
        %2700 = vmatpush.bf16.msra.mxu0 %v2691
        %2701 = vmatmul.bf16.gmra.mxu0 %v2688
        %v2702 = vpop.f32.mrf.mxu0
        %v2703 = vadd.f32 0.0, %v2702
        %v2704 = vpop.f32.mrf.mxu0
        %v2705 = vadd.f32 0.0, %v2704
        %2706 = vdwg.mxu0
        %2709 = vrot.lane.b32.xlu0 %v2703, 16
        %v2710 = vpop.permute.xlu0 %2709
        %2711 = vrot.lane.b32.xlu0 %v2705, 16
        %v2712 = vpop.permute.xlu0 %2711
        %v2715 = vsel %vm2379, %v2635, %v2710
        %v2716 = vsel %vm2379, %v2637, %v2712
        %v2717 = vpack.c.bf16 %v2716, %v2715
        %v2718 = vld [vmem:[%s39] sm:$0xf]
        %v2719 = vld [vmem:[%s39 + $0x4] sm:$0xf]
        %v2720 = vld [vmem:[%s39 + $0x8] sm:$0xf]
        %v2721 = vld [vmem:[%s39 + $0xc] sm:$0xf]
        %v2722 = vld [vmem:[%s41] sm:$0x1]
        %v2724 = vperm.slane %v2722, 0
        %v2730 = vunpack.c.l.b16 %v2718
        %v2731 = vunpack.c.l.b16 %v2719
        %v2732 = vunpack.c.l.b16 %v2720
        %v2733 = vunpack.c.l.b16 %v2721
        %v2734 = vpack.c.b16 %v2731, %v2730
        %v2735 = vpack.c.b16 %v2733, %v2732
        %v2739 = vsel %vm1290, %v2717, 0
        %2741 = vmatpush.bf16.msra.mxu0 0
        %2742 = vmatpush.bf16.msra.mxu0 0
        %2743 = vmatpush.bf16.msra.mxu0 0
        %2744 = vmatpush.bf16.msra.mxu0 0
        %2745 = vmatpush.bf16.msra.mxu0 0
        %2746 = vmatpush.bf16.msra.mxu0 0
        %2747 = vmatpush.bf16.msra.mxu0 %v2735
        %2748 = vmatpush.bf16.msra.mxu0 %v2734
        %2749 = vmatmul.bf16.gmra.mxu0 %v2739
        %v2750 = vpop.f32.mrf.mxu0
        %v2751 = vadd.f32 %v2724, %v2750
        %v2752 = vpop.f32.mrf.mxu0
        %v2753 = vadd.f32 %v2724, %v2752
        %2754 = vdwg.mxu0
        %v2755 = vadd.f32 %v2169, %v2751
        %v2756 = vadd.f32 %v2170, %v2753
        %v2757 = vmul.f32 %v2755, 0.70710677
        %v2758 = vmul.f32 %v2756, 0.70710677
        %2759 = vst.msk [vmem:[#allocation2 + $0x20] sm:$0xff] %vm1290, %v2757
        %2760 = vst.msk [vmem:[#allocation2 + $0x28] sm:$0xff] %vm1290, %v2758
        %s2761 = scalar_lea.vmem %s1092, 32
        %2762 = vst.msk [vmem:[%s2761] sm:$0xff] %vm1304, %v2616
        %2763 = vst.msk [vmem:[%s2761 + $0x8] sm:$0xff] %vm1304, %v2617
        %2764 = vst.msk [vmem:[%s2761 + $0x10] sm:$0xff] %vm1304, %v2684
        %2765 = vst.msk [vmem:[%s2761 + $0x18] sm:$0xff] %vm1304, %v2685
        %v2766 = vld [vmem:[#allocation2 + $0x8] sm:$0xff]
        %v2767 = vld [vmem:[#allocation2 + $0x10] sm:$0xff]
        %v2768 = vld [vmem:[#allocation2 + $0x18] sm:$0xff]
        %v2769 = vld [vmem:[#allocation2 + $0x20] sm:$0xff]
        %v2770 = vld [vmem:[#allocation2 + $0x28] sm:$0xff]
        %v2771 = vpack.c.bf16 %v2767, %v2766
        %v2772 = vpack.c.bf16 %v2769, %v2768
        %v2773 = vpack.c.bf16 %v2770, %v2770
        %v2774 = vld [vmem:[%s43] sm:$0xf]
        %v2775 = vld [vmem:[%s43 + $0x4] sm:$0xf]
        %v2776 = vld [vmem:[%s43 + $0x8] sm:$0xf]
        %v2777 = vld [vmem:[%s43 + $0xc] sm:$0xf]
        %v2778 = vld [vmem:[%s45] sm:$0x1]
        %v2780 = vperm.slane %v2778, 0
        %v2786 = vunpack.c.l.b16 %v2774
        %v2787 = vunpack.c.l.b16 %v2775
        %v2788 = vunpack.c.l.b16 %v2776
        %v2789 = vunpack.c.l.b16 %v2777
        %v2790 = vpack.c.b16 %v2787, %v2786
        %v2791 = vpack.c.b16 %v2789, %v2788
        %v2795 = vsel %vm1290, %v2771, 0
        %v2798 = vsel %vm1290, %v2772, 0
        %v2801 = vsel %vm1290, %v2773, 0
        %2803 = vmatpush.bf16.msra.mxu0 0
        %2804 = vmatpush.bf16.msra.mxu0 0
        %2805 = vmatpush.bf16.msra.mxu0 0
        %2806 = vmatpush.bf16.msra.mxu0 0
        %2807 = vmatpush.bf16.msra.mxu0 0
        %2808 = vmatpush.bf16.msra.mxu0 0
        %2809 = vmatpush.bf16.msra.mxu0 %v2791
        %2810 = vmatpush.bf16.msra.mxu0 %v2790
        %2811 = vmatmul.bf16.gmra.mxu0 %v2795
        %v2812 = vpop.f32.mrf.mxu0
        %v2813 = vadd.f32 %v2780, %v2812
        %v2814 = vpop.f32.mrf.mxu0
        %v2815 = vadd.f32 %v2780, %v2814
        %2816 = vmatmul.bf16.gmra.mxu0 %v2798
        %v2817 = vpop.f32.mrf.mxu0
        %v2818 = vadd.f32 %v2780, %v2817
        %v2819 = vpop.f32.mrf.mxu0
        %v2820 = vadd.f32 %v2780, %v2819
        %2821 = vmatmul.bf16.gmra.mxu0 %v2801
        %v2822 = vpop.f32.mrf.mxu0
        %v2823 = vadd.f32 %v2780, %v2822
        %v2824 = vpop.f32.mrf.mxu0
        %2825 = vdwg.mxu0
        %v2826 = vmax.f32 %v2813, 0.0
        %v2827 = vmax.f32 %v2815, 0.0
        %v2828 = vmax.f32 %v2818, 0.0
        %v2829 = vmax.f32 %v2820, 0.0
        %v2830 = vmax.f32 %v2823, 0.0
        %v2831 = vmul.f32 %v2826, %v1285
        %v2832 = vmul.f32 %v2827, %v1286
        %v2833 = vmul.f32 %v2828, %v1287
        %v2834 = vmul.f32 %v2829, %v1288
        %v2835 = vmul.f32 %v2830, %v1289
        %2836 = vst.msk [vmem:[#allocation2 + $0x8] sm:$0xff] %vm1290, %v2831
        %2837 = vst.msk [vmem:[#allocation2 + $0x10] sm:$0xff] %vm1290, %v2832
        %2838 = vst.msk [vmem:[#allocation2 + $0x18] sm:$0xff] %vm1290, %v2833
        %2839 = vst.msk [vmem:[#allocation2 + $0x20] sm:$0xff] %vm1290, %v2834
        %2840 = vst.msk [vmem:[#allocation2 + $0x28] sm:$0xff] %vm1290, %v2835
        %v2841 = vld [vmem:[%s49] sm:$0x1]
        %v2842 = vld [vmem:[#allocation2 + $0x6] sm:$0xff]
        %v2843 = vld [vmem:[#allocation2 + $0xe] sm:$0xff]
        %v2844 = vld [vmem:[#allocation2 + $0x16] sm:$0xff]
        %v2845 = vld [vmem:[#allocation2 + $0x1e] sm:$0xff]
        %v2846 = vld [vmem:[#allocation2 + $0x26] sm:$0xff]
        %v2847 = vpack.c.bf16 %v2843, %v2842
        %v2848 = vpack.c.bf16 %v2845, %v2844
        %v2849 = vpack.c.bf16 %v2846, %v2846
        %v2850 = vld [vmem:[%s47] sm:$0xf]
        %v2851 = vld [vmem:[%s47 + $0x4] sm:$0xf]
        %v2852 = vld [vmem:[%s47 + $0x8] sm:$0xf]
        %v2853 = vld [vmem:[%s47 + $0xc] sm:$0xf]
        %v2858 = vunpack.c.l.b16 %v2850
        %v2859 = vunpack.c.l.b16 %v2851
        %v2860 = vunpack.c.l.b16 %v2852
        %v2861 = vunpack.c.l.b16 %v2853
        %v2862 = vpack.c.b16 %v2859, %v2858
        %v2863 = vpack.c.b16 %v2861, %v2860
        %v2867 = vsel %vm1290, %v2847, 0
        %v2870 = vsel %vm1290, %v2848, 0
        %v2873 = vsel %vm1290, %v2849, 0
        %2875 = vmatpush.bf16.msra.mxu0 0
        %2876 = vmatpush.bf16.msra.mxu0 0
        %2877 = vmatpush.bf16.msra.mxu0 0
        %2878 = vmatpush.bf16.msra.mxu0 0
        %2879 = vmatpush.bf16.msra.mxu0 0
        %2880 = vmatpush.bf16.msra.mxu0 0
        %2881 = vmatpush.bf16.msra.mxu0 %v2863
        %2882 = vmatpush.bf16.msra.mxu0 %v2862
        %2883 = vmatmul.bf16.gmra.mxu0 %v2867
        %v2884 = vpop.f32.mrf.mxu0
        %v2885 = vadd.f32 0.0, %v2884
        %v2886 = vpop.f32.mrf.mxu0
        %v2887 = vadd.f32 0.0, %v2886
        %2888 = vmatmul.bf16.gmra.mxu0 %v2870
        %v2889 = vpop.f32.mrf.mxu0
        %v2890 = vadd.f32 0.0, %v2889
        %v2891 = vpop.f32.mrf.mxu0
        %v2892 = vadd.f32 0.0, %v2891
        %2893 = vmatmul.bf16.gmra.mxu0 %v2873
        %v2894 = vpop.f32.mrf.mxu0
        %v2895 = vadd.f32 0.0, %v2894
        %v2896 = vpop.f32.mrf.mxu0
        %2897 = vdwg.mxu0
        %v2899 = vperm.slane %v2841, 0
        %v2901 = vadd.f32 %v2899, %v2885
        %v2902 = vadd.f32 %v2899, %v2887
        %v2903 = vadd.f32 %v2899, %v2890
        %v2904 = vadd.f32 %v2899, %v2892
        %v2905 = vadd.f32 %v2899, %v2895
        %v2906 = vld [vmem:[#allocation2 + $0x7] sm:$0xff]
        %v2907 = vld [vmem:[#allocation2 + $0xf] sm:$0xff]
        %v2908 = vld [vmem:[#allocation2 + $0x17] sm:$0xff]
        %v2909 = vld [vmem:[#allocation2 + $0x1f] sm:$0xff]
        %v2910 = vld [vmem:[#allocation2 + $0x27] sm:$0xff]
        %v2911 = vpack.c.bf16 %v2907, %v2906
        %v2912 = vpack.c.bf16 %v2909, %v2908
        %v2913 = vpack.c.bf16 %v2910, %v2910
        %v2914 = vld [vmem:[%s47 + $0x10] sm:$0xf]
        %v2915 = vld [vmem:[%s47 + $0x14] sm:$0xf]
        %v2916 = vld [vmem:[%s47 + $0x18] sm:$0xf]
        %v2917 = vld [vmem:[%s47 + $0x1c] sm:$0xf]
        %v2922 = vunpack.c.l.b16 %v2914
        %v2923 = vunpack.c.l.b16 %v2915
        %v2924 = vunpack.c.l.b16 %v2916
        %v2925 = vunpack.c.l.b16 %v2917
        %v2926 = vpack.c.b16 %v2923, %v2922
        %v2927 = vpack.c.b16 %v2925, %v2924
        %v2931 = vsel %vm1290, %v2911, 0
        %v2934 = vsel %vm1290, %v2912, 0
        %v2937 = vsel %vm1290, %v2913, 0
        %2939 = vmatpush.bf16.msra.mxu0 0
        %2940 = vmatpush.bf16.msra.mxu0 0
        %2941 = vmatpush.bf16.msra.mxu0 0
        %2942 = vmatpush.bf16.msra.mxu0 0
        %2943 = vmatpush.bf16.msra.mxu0 0
        %2944 = vmatpush.bf16.msra.mxu0 0
        %2945 = vmatpush.bf16.msra.mxu0 %v2927
        %2946 = vmatpush.bf16.msra.mxu0 %v2926
        %2947 = vmatmul.bf16.gmra.mxu0 %v2931
        %v2948 = vpop.f32.mrf.mxu0
        %v2949 = vadd.f32 0.0, %v2948
        %v2950 = vpop.f32.mrf.mxu0
        %v2951 = vadd.f32 0.0, %v2950
        %2952 = vmatmul.bf16.gmra.mxu0 %v2934
        %v2953 = vpop.f32.mrf.mxu0
        %v2954 = vadd.f32 0.0, %v2953
        %v2955 = vpop.f32.mrf.mxu0
        %v2956 = vadd.f32 0.0, %v2955
        %2957 = vmatmul.bf16.gmra.mxu0 %v2937
        %v2958 = vpop.f32.mrf.mxu0
        %v2959 = vadd.f32 0.0, %v2958
        %v2960 = vpop.f32.mrf.mxu0
        %2961 = vdwg.mxu0
        %v2962 = vadd.f32 %v2901, %v2949
        %v2963 = vadd.f32 %v2902, %v2951
        %v2964 = vadd.f32 %v2903, %v2954
        %v2965 = vadd.f32 %v2904, %v2956
        %v2966 = vadd.f32 %v2905, %v2959
        %v2967 = vld [vmem:[#allocation2 + $0x8] sm:$0xff]
        %v2968 = vld [vmem:[#allocation2 + $0x10] sm:$0xff]
        %v2969 = vld [vmem:[#allocation2 + $0x18] sm:$0xff]
        %v2970 = vld [vmem:[#allocation2 + $0x20] sm:$0xff]
        %v2971 = vld [vmem:[#allocation2 + $0x28] sm:$0xff]
        %v2972 = vpack.c.bf16 %v2968, %v2967
        %v2973 = vpack.c.bf16 %v2970, %v2969
        %v2974 = vpack.c.bf16 %v2971, %v2971
        %v2975 = vld [vmem:[%s47 + $0x20] sm:$0xf]
        %v2976 = vld [vmem:[%s47 + $0x24] sm:$0xf]
        %v2977 = vld [vmem:[%s47 + $0x28] sm:$0xf]
        %v2978 = vld [vmem:[%s47 + $0x2c] sm:$0xf]
        %v2983 = vunpack.c.l.b16 %v2975
        %v2984 = vunpack.c.l.b16 %v2976
        %v2985 = vunpack.c.l.b16 %v2977
        %v2986 = vunpack.c.l.b16 %v2978
        %v2987 = vpack.c.b16 %v2984, %v2983
        %v2988 = vpack.c.b16 %v2986, %v2985
        %v2992 = vsel %vm1290, %v2972, 0
        %v2995 = vsel %vm1290, %v2973, 0
        %v2998 = vsel %vm1290, %v2974, 0
        %3000 = vmatpush.bf16.msra.mxu0 0
        %3001 = vmatpush.bf16.msra.mxu0 0
        %3002 = vmatpush.bf16.msra.mxu0 0
        %3003 = vmatpush.bf16.msra.mxu0 0
        %3004 = vmatpush.bf16.msra.mxu0 0
        %3005 = vmatpush.bf16.msra.mxu0 0
        %3006 = vmatpush.bf16.msra.mxu0 %v2988
        %3007 = vmatpush.bf16.msra.mxu0 %v2987
        %3008 = vmatmul.bf16.gmra.mxu0 %v2992
        %v3009 = vpop.f32.mrf.mxu0
        %v3010 = vadd.f32 0.0, %v3009
        %v3011 = vpop.f32.mrf.mxu0
        %v3012 = vadd.f32 0.0, %v3011
        %3013 = vmatmul.bf16.gmra.mxu0 %v2995
        %v3014 = vpop.f32.mrf.mxu0
        %v3015 = vadd.f32 0.0, %v3014
        %v3016 = vpop.f32.mrf.mxu0
        %v3017 = vadd.f32 0.0, %v3016
        %3018 = vmatmul.bf16.gmra.mxu0 %v2998
        %v3019 = vpop.f32.mrf.mxu0
        %v3020 = vadd.f32 0.0, %v3019
        %v3021 = vpop.f32.mrf.mxu0
        %3022 = vdwg.mxu0
        %v3023 = vadd.f32 %v2962, %v3010
        %v3024 = vadd.f32 %v2963, %v3012
        %v3025 = vadd.f32 %v2964, %v3015
        %v3026 = vadd.f32 %v2965, %v3017
        %v3027 = vadd.f32 %v2966, %v3020
        %v3028 = vmul.f32 %v3023, %v1285
        %v3029 = vmul.f32 %v3024, %v1286
        %v3030 = vmul.f32 %v3025, %v1287
        %v3031 = vmul.f32 %v3026, %v1288
        %v3032 = vmul.f32 %v3027, %v1289
        %3033 = vst.msk [vmem:[#allocation2 + $0x8] sm:$0xff] %vm1290, %v3028
        %3034 = vst.msk [vmem:[#allocation2 + $0x10] sm:$0xff] %vm1290, %v3029
        %3035 = vst.msk [vmem:[#allocation2 + $0x18] sm:$0xff] %vm1290, %v3030
        %3036 = vst.msk [vmem:[#allocation2 + $0x20] sm:$0xff] %vm1290, %v3031
        %3037 = vst.msk [vmem:[#allocation2 + $0x28] sm:$0xff] %vm1290, %v3032
        %v3038 = vld [vmem:[%s53] sm:$0x1]
        %v3039 = vld [vmem:[#allocation2 + $0x4] sm:$0xff]
        %v3040 = vld [vmem:[#allocation2 + $0xc] sm:$0xff]
        %v3041 = vld [vmem:[#allocation2 + $0x14] sm:$0xff]
        %v3042 = vld [vmem:[#allocation2 + $0x1c] sm:$0xff]
        %v3043 = vld [vmem:[#allocation2 + $0x24] sm:$0xff]
        %v3044 = vpack.c.bf16 %v3040, %v3039
        %v3045 = vpack.c.bf16 %v3042, %v3041
        %v3046 = vpack.c.bf16 %v3043, %v3043
        %v3047 = vld [vmem:[%s51] sm:$0xf]
        %v3048 = vld [vmem:[%s51 + $0x4] sm:$0xf]
        %v3049 = vld [vmem:[%s51 + $0x8] sm:$0xf]
        %v3050 = vld [vmem:[%s51 + $0xc] sm:$0xf]
        %v3055 = vunpack.c.l.b16 %v3047
        %v3056 = vunpack.c.l.b16 %v3048
        %v3057 = vunpack.c.l.b16 %v3049
        %v3058 = vunpack.c.l.b16 %v3050
        %v3059 = vpack.c.b16 %v3056, %v3055
        %v3060 = vpack.c.b16 %v3058, %v3057
        %v3064 = vsel %vm1290, %v3044, 0
        %v3067 = vsel %vm1290, %v3045, 0
        %v3070 = vsel %vm1290, %v3046, 0
        %3072 = vmatpush.bf16.msra.mxu0 0
        %3073 = vmatpush.bf16.msra.mxu0 0
        %3074 = vmatpush.bf16.msra.mxu0 0
        %3075 = vmatpush.bf16.msra.mxu0 0
        %3076 = vmatpush.bf16.msra.mxu0 0
        %3077 = vmatpush.bf16.msra.mxu0 0
        %3078 = vmatpush.bf16.msra.mxu0 %v3060
        %3079 = vmatpush.bf16.msra.mxu0 %v3059
        %3080 = vmatmul.bf16.gmra.mxu0 %v3064
        %v3081 = vpop.f32.mrf.mxu0
        %v3082 = vadd.f32 0.0, %v3081
        %v3083 = vpop.f32.mrf.mxu0
        %v3084 = vadd.f32 0.0, %v3083
        %3085 = vmatmul.bf16.gmra.mxu0 %v3067
        %v3086 = vpop.f32.mrf.mxu0
        %v3087 = vadd.f32 0.0, %v3086
        %v3088 = vpop.f32.mrf.mxu0
        %v3089 = vadd.f32 0.0, %v3088
        %3090 = vmatmul.bf16.gmra.mxu0 %v3070
        %v3091 = vpop.f32.mrf.mxu0
        %v3092 = vadd.f32 0.0, %v3091
        %v3093 = vpop.f32.mrf.mxu0
        %3094 = vdwg.mxu0
        %v3096 = vperm.slane %v3038, 0
        %v3098 = vadd.f32 %v3096, %v3082
        %v3099 = vadd.f32 %v3096, %v3084
        %v3100 = vadd.f32 %v3096, %v3087
        %v3101 = vadd.f32 %v3096, %v3089
        %v3102 = vadd.f32 %v3096, %v3092
        %v3103 = vld [vmem:[#allocation2 + $0x6] sm:$0xff]
        %v3104 = vld [vmem:[#allocation2 + $0xe] sm:$0xff]
        %v3105 = vld [vmem:[#allocation2 + $0x16] sm:$0xff]
        %v3106 = vld [vmem:[#allocation2 + $0x1e] sm:$0xff]
        %v3107 = vld [vmem:[#allocation2 + $0x26] sm:$0xff]
        %v3108 = vpack.c.bf16 %v3104, %v3103
        %v3109 = vpack.c.bf16 %v3106, %v3105
        %v3110 = vpack.c.bf16 %v3107, %v3107
        %v3111 = vld [vmem:[%s51 + $0x10] sm:$0xf]
        %v3112 = vld [vmem:[%s51 + $0x14] sm:$0xf]
        %v3113 = vld [vmem:[%s51 + $0x18] sm:$0xf]
        %v3114 = vld [vmem:[%s51 + $0x1c] sm:$0xf]
        %v3119 = vunpack.c.l.b16 %v3111
        %v3120 = vunpack.c.l.b16 %v3112
        %v3121 = vunpack.c.l.b16 %v3113
        %v3122 = vunpack.c.l.b16 %v3114
        %v3123 = vpack.c.b16 %v3120, %v3119
        %v3124 = vpack.c.b16 %v3122, %v3121
        %v3128 = vsel %vm1290, %v3108, 0
        %v3131 = vsel %vm1290, %v3109, 0
        %v3134 = vsel %vm1290, %v3110, 0
        %3136 = vmatpush.bf16.msra.mxu0 0
        %3137 = vmatpush.bf16.msra.mxu0 0
        %3138 = vmatpush.bf16.msra.mxu0 0
        %3139 = vmatpush.bf16.msra.mxu0 0
        %3140 = vmatpush.bf16.msra.mxu0 0
        %3141 = vmatpush.bf16.msra.mxu0 0
        %3142 = vmatpush.bf16.msra.mxu0 %v3124
        %3143 = vmatpush.bf16.msra.mxu0 %v3123
        %3144 = vmatmul.bf16.gmra.mxu0 %v3128
        %v3145 = vpop.f32.mrf.mxu0
        %v3146 = vadd.f32 0.0, %v3145
        %v3147 = vpop.f32.mrf.mxu0
        %v3148 = vadd.f32 0.0, %v3147
        %3149 = vmatmul.bf16.gmra.mxu0 %v3131
        %v3150 = vpop.f32.mrf.mxu0
        %v3151 = vadd.f32 0.0, %v3150
        %v3152 = vpop.f32.mrf.mxu0
        %v3153 = vadd.f32 0.0, %v3152
        %3154 = vmatmul.bf16.gmra.mxu0 %v3134
        %v3155 = vpop.f32.mrf.mxu0
        %v3156 = vadd.f32 0.0, %v3155
        %v3157 = vpop.f32.mrf.mxu0
        %3158 = vdwg.mxu0
        %v3159 = vadd.f32 %v3098, %v3146
        %v3160 = vadd.f32 %v3099, %v3148
        %v3161 = vadd.f32 %v3100, %v3151
        %v3162 = vadd.f32 %v3101, %v3153
        %v3163 = vadd.f32 %v3102, %v3156
        %v3164 = vld [vmem:[#allocation2 + $0x8] sm:$0xff]
        %v3165 = vld [vmem:[#allocation2 + $0x10] sm:$0xff]
        %v3166 = vld [vmem:[#allocation2 + $0x18] sm:$0xff]
        %v3167 = vld [vmem:[#allocation2 + $0x20] sm:$0xff]
        %v3168 = vld [vmem:[#allocation2 + $0x28] sm:$0xff]
        %v3169 = vpack.c.bf16 %v3165, %v3164
        %v3170 = vpack.c.bf16 %v3167, %v3166
        %v3171 = vpack.c.bf16 %v3168, %v3168
        %v3172 = vld [vmem:[%s51 + $0x20] sm:$0xf]
        %v3173 = vld [vmem:[%s51 + $0x24] sm:$0xf]
        %v3174 = vld [vmem:[%s51 + $0x28] sm:$0xf]
        %v3175 = vld [vmem:[%s51 + $0x2c] sm:$0xf]
        %v3180 = vunpack.c.l.b16 %v3172
        %v3181 = vunpack.c.l.b16 %v3173
        %v3182 = vunpack.c.l.b16 %v3174
        %v3183 = vunpack.c.l.b16 %v3175
        %v3184 = vpack.c.b16 %v3181, %v3180
        %v3185 = vpack.c.b16 %v3183, %v3182
        %v3189 = vsel %vm1290, %v3169, 0
        %v3192 = vsel %vm1290, %v3170, 0
        %v3195 = vsel %vm1290, %v3171, 0
        %3197 = vmatpush.bf16.msra.mxu0 0
        %3198 = vmatpush.bf16.msra.mxu0 0
        %3199 = vmatpush.bf16.msra.mxu0 0
        %3200 = vmatpush.bf16.msra.mxu0 0
        %3201 = vmatpush.bf16.msra.mxu0 0
        %3202 = vmatpush.bf16.msra.mxu0 0
        %3203 = vmatpush.bf16.msra.mxu0 %v3185
        %3204 = vmatpush.bf16.msra.mxu0 %v3184
        %3205 = vmatmul.bf16.gmra.mxu0 %v3189
        %v3206 = vpop.f32.mrf.mxu0
        %v3207 = vadd.f32 0.0, %v3206
        %v3208 = vpop.f32.mrf.mxu0
        %v3209 = vadd.f32 0.0, %v3208
        %3210 = vmatmul.bf16.gmra.mxu0 %v3192
        %v3211 = vpop.f32.mrf.mxu0
        %v3212 = vadd.f32 0.0, %v3211
        %v3213 = vpop.f32.mrf.mxu0
        %v3214 = vadd.f32 0.0, %v3213
        %3215 = vmatmul.bf16.gmra.mxu0 %v3195
        %v3216 = vpop.f32.mrf.mxu0
        %v3217 = vadd.f32 0.0, %v3216
        %v3218 = vpop.f32.mrf.mxu0
        %3219 = vdwg.mxu0
        %v3220 = vadd.f32 %v3159, %v3207
        %v3221 = vadd.f32 %v3160, %v3209
        %v3222 = vadd.f32 %v3161, %v3212
        %v3223 = vadd.f32 %v3162, %v3214
        %v3224 = vadd.f32 %v3163, %v3217
        %v3225 = vmul.f32 %v3220, %v1285
        %v3226 = vmul.f32 %v3221, %v1286
        %v3227 = vmul.f32 %v3222, %v1287
        %v3228 = vmul.f32 %v3223, %v1288
        %v3229 = vmul.f32 %v3224, %v1289
        %3230 = vst.msk [vmem:[#allocation2 + $0x8] sm:$0xff] %vm1290, %v3225
        %3231 = vst.msk [vmem:[#allocation2 + $0x10] sm:$0xff] %vm1290, %v3226
        %3232 = vst.msk [vmem:[#allocation2 + $0x18] sm:$0xff] %vm1290, %v3227
        %3233 = vst.msk [vmem:[#allocation2 + $0x20] sm:$0xff] %vm1290, %v3228
        %3234 = vst.msk [vmem:[#allocation2 + $0x28] sm:$0xff] %vm1290, %v3229
        %v3235 = vld [vmem:[%s57] sm:$0x1]
        %v3236 = vld [vmem:[#allocation2 + $0x6] sm:$0xff]
        %v3237 = vld [vmem:[#allocation2 + $0xe] sm:$0xff]
        %v3238 = vld [vmem:[#allocation2 + $0x16] sm:$0xff]
        %v3239 = vld [vmem:[#allocation2 + $0x1e] sm:$0xff]
        %v3240 = vld [vmem:[#allocation2 + $0x26] sm:$0xff]
        %v3241 = vpack.c.bf16 %v3237, %v3236
        %v3242 = vpack.c.bf16 %v3239, %v3238
        %v3243 = vpack.c.bf16 %v3240, %v3240
        %v3244 = vld [vmem:[%s55] sm:$0xf]
        %v3245 = vld [vmem:[%s55 + $0x4] sm:$0xf]
        %v3246 = vld [vmem:[%s55 + $0x8] sm:$0xf]
        %v3247 = vld [vmem:[%s55 + $0xc] sm:$0xf]
        %v3252 = vunpack.c.l.b16 %v3244
        %v3253 = vunpack.c.l.b16 %v3245
        %v3254 = vunpack.c.l.b16 %v3246
        %v3255 = vunpack.c.l.b16 %v3247
        %v3256 = vpack.c.b16 %v3253, %v3252
        %v3257 = vpack.c.b16 %v3255, %v3254
        %v3261 = vsel %vm1290, %v3241, 0
        %v3264 = vsel %vm1290, %v3242, 0
        %v3267 = vsel %vm1290, %v3243, 0
        %3269 = vmatpush.bf16.msra.mxu0 0
        %3270 = vmatpush.bf16.msra.mxu0 0
        %3271 = vmatpush.bf16.msra.mxu0 0
        %3272 = vmatpush.bf16.msra.mxu0 0
        %3273 = vmatpush.bf16.msra.mxu0 0
        %3274 = vmatpush.bf16.msra.mxu0 0
        %3275 = vmatpush.bf16.msra.mxu0 %v3257
        %3276 = vmatpush.bf16.msra.mxu0 %v3256
        %3277 = vmatmul.bf16.gmra.mxu0 %v3261
        %v3278 = vpop.f32.mrf.mxu0
        %v3279 = vadd.f32 0.0, %v3278
        %v3280 = vpop.f32.mrf.mxu0
        %v3281 = vadd.f32 0.0, %v3280
        %3282 = vmatmul.bf16.gmra.mxu0 %v3264
        %v3283 = vpop.f32.mrf.mxu0
        %v3284 = vadd.f32 0.0, %v3283
        %v3285 = vpop.f32.mrf.mxu0
        %v3286 = vadd.f32 0.0, %v3285
        %3287 = vmatmul.bf16.gmra.mxu0 %v3267
        %v3288 = vpop.f32.mrf.mxu0
        %v3289 = vadd.f32 0.0, %v3288
        %v3290 = vpop.f32.mrf.mxu0
        %3291 = vdwg.mxu0
        %v3293 = vperm.slane %v3235, 0
        %v3295 = vadd.f32 %v3293, %v3279
        %v3296 = vadd.f32 %v3293, %v3281
        %v3297 = vadd.f32 %v3293, %v3284
        %v3298 = vadd.f32 %v3293, %v3286
        %v3299 = vadd.f32 %v3293, %v3289
        %v3300 = vld [vmem:[#allocation2 + $0x7] sm:$0xff]
        %v3301 = vld [vmem:[#allocation2 + $0xf] sm:$0xff]
        %v3302 = vld [vmem:[#allocation2 + $0x17] sm:$0xff]
        %v3303 = vld [vmem:[#allocation2 + $0x1f] sm:$0xff]
        %v3304 = vld [vmem:[#allocation2 + $0x27] sm:$0xff]
        %v3305 = vpack.c.bf16 %v3301, %v3300
        %v3306 = vpack.c.bf16 %v3303, %v3302
        %v3307 = vpack.c.bf16 %v3304, %v3304
        %v3308 = vld [vmem:[%s55 + $0x10] sm:$0xf]
        %v3309 = vld [vmem:[%s55 + $0x14] sm:$0xf]
        %v3310 = vld [vmem:[%s55 + $0x18] sm:$0xf]
        %v3311 = vld [vmem:[%s55 + $0x1c] sm:$0xf]
        %v3316 = vunpack.c.l.b16 %v3308
        %v3317 = vunpack.c.l.b16 %v3309
        %v3318 = vunpack.c.l.b16 %v3310
        %v3319 = vunpack.c.l.b16 %v3311
        %v3320 = vpack.c.b16 %v3317, %v3316
        %v3321 = vpack.c.b16 %v3319, %v3318
        %v3325 = vsel %vm1290, %v3305, 0
        %v3328 = vsel %vm1290, %v3306, 0
        %v3331 = vsel %vm1290, %v3307, 0
        %3333 = vmatpush.bf16.msra.mxu0 0
        %3334 = vmatpush.bf16.msra.mxu0 0
        %3335 = vmatpush.bf16.msra.mxu0 0
        %3336 = vmatpush.bf16.msra.mxu0 0
        %3337 = vmatpush.bf16.msra.mxu0 0
        %3338 = vmatpush.bf16.msra.mxu0 0
        %3339 = vmatpush.bf16.msra.mxu0 %v3321
        %3340 = vmatpush.bf16.msra.mxu0 %v3320
        %3341 = vmatmul.bf16.gmra.mxu0 %v3325
        %v3342 = vpop.f32.mrf.mxu0
        %v3343 = vadd.f32 0.0, %v3342
        %v3344 = vpop.f32.mrf.mxu0
        %v3345 = vadd.f32 0.0, %v3344
        %3346 = vmatmul.bf16.gmra.mxu0 %v3328
        %v3347 = vpop.f32.mrf.mxu0
        %v3348 = vadd.f32 0.0, %v3347
        %v3349 = vpop.f32.mrf.mxu0
        %v3350 = vadd.f32 0.0, %v3349
        %3351 = vmatmul.bf16.gmra.mxu0 %v3331
        %v3352 = vpop.f32.mrf.mxu0
        %v3353 = vadd.f32 0.0, %v3352
        %v3354 = vpop.f32.mrf.mxu0
        %3355 = vdwg.mxu0
        %v3356 = vadd.f32 %v3295, %v3343
        %v3357 = vadd.f32 %v3296, %v3345
        %v3358 = vadd.f32 %v3297, %v3348
        %v3359 = vadd.f32 %v3298, %v3350
        %v3360 = vadd.f32 %v3299, %v3353
        %v3361 = vld [vmem:[#allocation2 + $0x8] sm:$0xff]
        %v3362 = vld [vmem:[#allocation2 + $0x10] sm:$0xff]
        %v3363 = vld [vmem:[#allocation2 + $0x18] sm:$0xff]
        %v3364 = vld [vmem:[#allocation2 + $0x20] sm:$0xff]
        %v3365 = vld [vmem:[#allocation2 + $0x28] sm:$0xff]
        %v3366 = vpack.c.bf16 %v3362, %v3361
        %v3367 = vpack.c.bf16 %v3364, %v3363
        %v3368 = vpack.c.bf16 %v3365, %v3365
        %v3369 = vld [vmem:[%s55 + $0x20] sm:$0xf]
        %v3370 = vld [vmem:[%s55 + $0x24] sm:$0xf]
        %v3371 = vld [vmem:[%s55 + $0x28] sm:$0xf]
        %v3372 = vld [vmem:[%s55 + $0x2c] sm:$0xf]
        %v3377 = vunpack.c.l.b16 %v3369
        %v3378 = vunpack.c.l.b16 %v3370
        %v3379 = vunpack.c.l.b16 %v3371
        %v3380 = vunpack.c.l.b16 %v3372
        %v3381 = vpack.c.b16 %v3378, %v3377
        %v3382 = vpack.c.b16 %v3380, %v3379
        %v3386 = vsel %vm1290, %v3366, 0
        %v3389 = vsel %vm1290, %v3367, 0
        %v3392 = vsel %vm1290, %v3368, 0
        %3394 = vmatpush.bf16.msra.mxu0 0
        %3395 = vmatpush.bf16.msra.mxu0 0
        %3396 = vmatpush.bf16.msra.mxu0 0
        %3397 = vmatpush.bf16.msra.mxu0 0
        %3398 = vmatpush.bf16.msra.mxu0 0
        %3399 = vmatpush.bf16.msra.mxu0 0
        %3400 = vmatpush.bf16.msra.mxu0 %v3382
        %3401 = vmatpush.bf16.msra.mxu0 %v3381
        %3402 = vmatmul.bf16.gmra.mxu0 %v3386
        %v3403 = vpop.f32.mrf.mxu0
        %v3404 = vadd.f32 0.0, %v3403
        %v3405 = vpop.f32.mrf.mxu0
        %v3406 = vadd.f32 0.0, %v3405
        %3407 = vmatmul.bf16.gmra.mxu0 %v3389
        %v3408 = vpop.f32.mrf.mxu0
        %v3409 = vadd.f32 0.0, %v3408
        %v3410 = vpop.f32.mrf.mxu0
        %v3411 = vadd.f32 0.0, %v3410
        %3412 = vmatmul.bf16.gmra.mxu0 %v3392
        %v3413 = vpop.f32.mrf.mxu0
        %v3414 = vadd.f32 0.0, %v3413
        %v3415 = vpop.f32.mrf.mxu0
        %3416 = vdwg.mxu0
        %v3417 = vadd.f32 %v3356, %v3404
        %v3418 = vadd.f32 %v3357, %v3406
        %v3419 = vadd.f32 %v3358, %v3409
        %v3420 = vadd.f32 %v3359, %v3411
        %v3421 = vadd.f32 %v3360, %v3414
        %v3422 = vmax.f32 %v3417, 0.0
        %v3423 = vmax.f32 %v3418, 0.0
        %v3424 = vmax.f32 %v3419, 0.0
        %v3425 = vmax.f32 %v3420, 0.0
        %v3426 = vmax.f32 %v3421, 0.0
        %v3427 = vmul.f32 %v3422, %v1285
        %v3428 = vmul.f32 %v3423, %v1286
        %v3429 = vmul.f32 %v3424, %v1287
        %v3430 = vmul.f32 %v3425, %v1288
        %v3431 = vmul.f32 %v3426, %v1289
        %3432 = vst.msk [vmem:[#allocation2 + $0x8] sm:$0xff] %vm1290, %v3427
        %3433 = vst.msk [vmem:[#allocation2 + $0x10] sm:$0xff] %vm1290, %v3428
        %3434 = vst.msk [vmem:[#allocation2 + $0x18] sm:$0xff] %vm1290, %v3429
        %3435 = vst.msk [vmem:[#allocation2 + $0x20] sm:$0xff] %vm1290, %v3430
        %3436 = vst.msk [vmem:[#allocation2 + $0x28] sm:$0xff] %vm1290, %v3431
        %v3437 = vld [vmem:[#allocation2 + $0x8] sm:$0xff]
        %v3438 = vld [vmem:[#allocation2 + $0x10] sm:$0xff]
        %v3439 = vld [vmem:[#allocation2 + $0x18] sm:$0xff]
        %v3440 = vld [vmem:[#allocation2 + $0x20] sm:$0xff]
        %v3441 = vld [vmem:[#allocation2 + $0x28] sm:$0xff]
        %v3442 = vpack.c.bf16 %v3438, %v3437
        %v3443 = vpack.c.bf16 %v3440, %v3439
        %v3444 = vpack.c.bf16 %v3441, %v3441
        %v3445 = vld [vmem:[%s59] sm:$0xf]
        %v3446 = vld [vmem:[%s59 + $0x4] sm:$0xf]
        %v3447 = vld [vmem:[%s59 + $0x8] sm:$0xf]
        %v3448 = vld [vmem:[%s59 + $0xc] sm:$0xf]
        %v3449 = vld [vmem:[%s61] sm:$0x1]
        %v3451 = vperm.slane %v3449, 0
        %v3457 = vunpack.c.l.b16 %v3445
        %v3458 = vunpack.c.l.b16 %v3446
        %v3459 = vunpack.c.l.b16 %v3447
        %v3460 = vunpack.c.l.b16 %v3448
        %v3461 = vpack.c.b16 %v3458, %v3457
        %v3462 = vpack.c.b16 %v3460, %v3459
        %v3466 = vsel %vm1290, %v3442, 0
        %v3469 = vsel %vm1290, %v3443, 0
        %v3472 = vsel %vm1290, %v3444, 0
        %3474 = vmatpush.bf16.msra.mxu0 0
        %3475 = vmatpush.bf16.msra.mxu0 0
        %3476 = vmatpush.bf16.msra.mxu0 0
        %3477 = vmatpush.bf16.msra.mxu0 0
        %3478 = vmatpush.bf16.msra.mxu0 0
        %3479 = vmatpush.bf16.msra.mxu0 0
        %3480 = vmatpush.bf16.msra.mxu0 %v3462
        %3481 = vmatpush.bf16.msra.mxu0 %v3461
        %3482 = vmatmul.bf16.gmra.mxu0 %v3466
        %v3483 = vpop.f32.mrf.mxu0
        %v3484 = vadd.f32 %v3451, %v3483
        %v3485 = vpop.f32.mrf.mxu0
        %v3486 = vadd.f32 %v3451, %v3485
        %3487 = vmatmul.bf16.gmra.mxu0 %v3469
        %v3488 = vpop.f32.mrf.mxu0
        %v3489 = vpop.f32.mrf.mxu0
        %v3490 = vadd.f32 %v3451, %v3489
        %3491 = vmatmul.bf16.gmra.mxu0 %v3472
        %v3492 = vpop.f32.mrf.mxu0
        %v3493 = vadd.f32 %v3451, %v3492
        %v3494 = vpop.f32.mrf.mxu0
        %3495 = vdwg.mxu0
        %v3496 = vxor.u32 %v3484, 2147483648
        %v3497 = vxor.u32 %v3486, 2147483648
        %v3498 = vxor.u32 %v3490, 2147483648
        %v3499 = vxor.u32 %v3493, 2147483648
        %v3500 = vmul.f32 %v3496, 1.442695
        %v3501 = vpow.pop %v3500
        %v3502 = vmul.f32 %v3497, 1.442695
        %v3503 = vpow.pop %v3502
        %v3504 = vmul.f32 %v3498, 1.442695
        %v3505 = vpow.pop %v3504
        %v3506 = vmul.f32 %v3499, 1.442695
        %v3507 = vpow.pop %v3506
        %v3508 = vadd.f32 %v3501, 1.0
        %v3509 = vadd.f32 %v3503, 1.0
        %v3510 = vadd.f32 %v3505, 1.0
        %v3511 = vadd.f32 %v3507, 1.0
        %v3512 = vrcp.pop %v3508
        %v3513 = vmul.f32 %v3508, %v3512
        %v3514 = vsub.f32 1.0, %v3513
        %v3515 = vmul.f32 %v3512, %v3514
        %v3516 = vadd.f32 %v3512, %v3515
        %vm3517 = vweird.f32 %v3508
        %vm3518 = vweird.f32 %v3512
        %vm3519 = vmor %vm3517, %vm3518
        %v3520 = vsel %vm3519, %v3512, %v3516
        %v3521 = vand.u32 2147483647, %v3508
        %vm3522 = vcmp.eq.f32.partialorder %v3521, 8.507059e+37
        %v3523 = vand.u32 %v3508, 2147483648
        %v3524 = vor.u32 1.1754944e-38, %v3523
        %v3525 = vsel %vm3522, %v3524, %v3520
        %v3526 = vmul.f32 1.0, %v3525
        %v3527 = vrcp.pop %v3509
        %v3528 = vmul.f32 %v3509, %v3527
        %v3529 = vsub.f32 1.0, %v3528
        %v3530 = vmul.f32 %v3527, %v3529
        %v3531 = vadd.f32 %v3527, %v3530
        %vm3532 = vweird.f32 %v3509
        %vm3533 = vweird.f32 %v3527
        %vm3534 = vmor %vm3532, %vm3533
        %v3535 = vsel %vm3534, %v3527, %v3531
        %v3536 = vand.u32 2147483647, %v3509
        %vm3537 = vcmp.eq.f32.partialorder %v3536, 8.507059e+37
        %v3538 = vand.u32 %v3509, 2147483648
        %v3539 = vor.u32 1.1754944e-38, %v3538
        %v3540 = vsel %vm3537, %v3539, %v3535
        %v3541 = vmul.f32 1.0, %v3540
        %v3542 = vrcp.pop %v3510
        %v3543 = vmul.f32 %v3510, %v3542
        %v3544 = vsub.f32 1.0, %v3543
        %v3545 = vmul.f32 %v3542, %v3544
        %v3546 = vadd.f32 %v3542, %v3545
        %vm3547 = vweird.f32 %v3510
        %vm3548 = vweird.f32 %v3542
        %vm3549 = vmor %vm3547, %vm3548
        %v3550 = vsel %vm3549, %v3542, %v3546
        %v3551 = vand.u32 2147483647, %v3510
        %vm3552 = vcmp.eq.f32.partialorder %v3551, 8.507059e+37
        %v3553 = vand.u32 %v3510, 2147483648
        %v3554 = vor.u32 1.1754944e-38, %v3553
        %v3555 = vsel %vm3552, %v3554, %v3550
        %v3556 = vmul.f32 1.0, %v3555
        %v3557 = vrcp.pop %v3511
        %v3558 = vmul.f32 %v3511, %v3557
        %v3559 = vsub.f32 1.0, %v3558
        %v3560 = vmul.f32 %v3557, %v3559
        %v3561 = vadd.f32 %v3557, %v3560
        %vm3562 = vweird.f32 %v3511
        %vm3563 = vweird.f32 %v3557
        %vm3564 = vmor %vm3562, %vm3563
        %v3565 = vsel %vm3564, %v3557, %v3561
        %v3566 = vand.u32 2147483647, %v3511
        %vm3567 = vcmp.eq.f32.partialorder %v3566, 8.507059e+37
        %v3568 = vand.u32 %v3511, 2147483648
        %v3569 = vor.u32 1.1754944e-38, %v3568
        %v3570 = vsel %vm3567, %v3569, %v3565
        %v3571 = vmul.f32 1.0, %v3570
        %3572 = vst.msk [vmem:[%s1051] sm:$0xff] %vm1290, %v3437
        %3573 = vst.msk [vmem:[%s1051 + $0x8] sm:$0xff] %vm1290, %v3438
        %vm3574 = vcmask 72704
        %3575 = vst.msk [vmem:[%s1084] sm:$0xff] %vm3574, %v3526
        %3576 = vst.msk [vmem:[%s1084 + $0x8] sm:$0xff] %vm3574, %v3541
        %s3577 = scalar_lea.vmem %s1051, 16 [#allocation3]
        %3578 = vst.msk [vmem:[%s3577] sm:$0xff] %vm1290, %v3440
        %3579 = vst.msk [vmem:[%s3577 + $0x8] sm:$0xff] %vm1290, %v3441
        %s3580 = scalar_lea.vmem %s1084, 16
        %3581 = vst.msk [vmem:[%s3580] sm:$0xff] %vm3574, %v3556
        %3582 = vst.msk [vmem:[%s3580 + $0x8] sm:$0xff] %vm3574, %v3571
        %s3583 = smul.u32 2, %s82
        %p3584 = scmp.lt.s32.totalorder %s3583, 3
        %s3585 = scalar_select %p3584, %s3583, 3
        %s3586 = smul.addr %s3585, 2
        %s3587 = smul.addr %s3586, 8
        %s3588 = scalar_lea.vmem %s63, %s3587
        %s3589 = sand.u32 %s782, 1
        %s3590 = scalar_lea.sflag [#allocation4], %s3589
        %s3591 = sand.u32 %s782, 1
        %s3592 = smul.addr %s3591, 32
        %s3593 = scalar_lea.vmem [#allocation3], %s3592
        %s3594 = smul.u32 2, %s82
        %p3595 = scmp.lt.s32.totalorder %s3594, 3
        %s3596 = scalar_select %p3595, %s3594, 3
        %s3597 = smul.addr %s3596, 4
        %s3598 = smul.addr %s3597, 8
        %s3599 = scalar_lea.vmem %s67, %s3598
        // Predicated region
        $region145: #{decoder_forward.1} parent=143 // pred_check
          %p3600 = pneg %p766
        $region146: #{decoder_forward.1} parent=143 // pred_check_branch
          %3602 = sbr.rel (%p3600) target = $region148
        $region147: #{decoder_forward.1} parent=143 // pred_region
          %s3603 = smul.u32 2, %s82
        $region148: #{decoder_forward.1} parent=143 // pred_fallthru
          _
        // Predicated region
        $region149: #{decoder_forward.1} parent=143 // pred_check
          %p3604 = pneg %p792
        $region150: #{decoder_forward.1} parent=143 // pred_check_branch
          %3606 = sbr.rel (%p3604) target = $region152
        $region151: #{decoder_forward.1} parent=143 // pred_region
          %s3607 = smul.u32 2, %s82
          %3609 = vsyncadd %s3590, 0
          %s3610 = smul.addr %s3607, 2
          %s3611 = smul.addr %s3610, 8
          %s3612 = scalar_lea.hbm %s65, %s3611
          %s3613 = sshll.u32 %s3593, 4
          %s3614 = int_to_ptr.vmem [resolvable:$true] %s3613
          %s3615 = sshll.u32 %s3612, 4
          %s3616 = int_to_ptr.hbm [resolvable:$true] %s3615
          %3621 = dma.vmem_to_hbm [thread:$0]  %s3614, 512, %s3616, %s3590, 128, 128, 8
        $region152: #{decoder_forward.1} parent=143 // pred_fallthru
          _
        // Predicated region
        $region153: #{decoder_forward.1} parent=143 // pred_check
          %p3622 = pneg %p818
        $region154: #{decoder_forward.1} parent=143 // pred_check_branch
          %3624 = sbr.rel (%p3622) target = $region156
        $region155: #{decoder_forward.1} parent=143 // pred_region
          %s3625 = smul.u32 2, %s82
        $region156: #{decoder_forward.1} parent=143 // pred_fallthru
          _
      $region144: #{decoder_forward.1} parent=5 // pred_fallthru
        _
      %p3626 = scmp.le.s32.totalorder 2, %s77
      // Predicated region
      $region157: #{decoder_forward.1} parent=5 // pred_check
        %p3627 = pneg %p3626
      $region158: #{decoder_forward.1} parent=5 // pred_check_branch
        %3629 = sbr.rel (%p3627) target = $region160
      $region159: #{decoder_forward.1} parent=5 // pred_region
        %s3630 = ssub.s32 %s77, 2
        // Predicated region
        $region161: #{decoder_forward.1} parent=159 // pred_check
          %p3631 = pneg %p772
        $region162: #{decoder_forward.1} parent=159 // pred_check_branch
          %3633 = sbr.rel (%p3631) target = $region164
        $region163: #{decoder_forward.1} parent=159 // pred_region
          %s3634 = smul.u32 2, %s83
          %p3635 = scmp.lt.s32.totalorder %s3634, 3
          %s3636 = scalar_select %p3635, %s3634, 3
          %s3637 = smul.addr %s3636, 2
          %s3638 = smul.addr %s3637, 8
          %s3639 = scalar_lea.vmem %s63, %s3638
        $region164: #{decoder_forward.1} parent=159 // pred_fallthru
          _
        // Predicated region
        $region165: #{decoder_forward.1} parent=159 // pred_check
          %p3640 = pneg %p798
        $region166: #{decoder_forward.1} parent=159 // pred_check_branch
          %3642 = sbr.rel (%p3640) target = $region168
        $region167: #{decoder_forward.1} parent=159 // pred_region
          %s3643 = sand.u32 %s783, 1
          %s3644 = scalar_lea.sflag [#allocation4], %s3643
          %s3645 = sand.u32 %s783, 1
          %s3646 = smul.addr %s3645, 32
          %s3647 = scalar_lea.vmem [#allocation3], %s3646
          %3649 = dma.done %s3644, 512
        $region168: #{decoder_forward.1} parent=159 // pred_fallthru
          _
        // Predicated region
        $region169: #{decoder_forward.1} parent=159 // pred_check
          %p3650 = pneg %p824
        $region170: #{decoder_forward.1} parent=159 // pred_check_branch
          %3652 = sbr.rel (%p3650) target = $region172
        $region171: #{decoder_forward.1} parent=159 // pred_region
          %s3653 = smul.u32 2, %s83
          %p3654 = scmp.lt.s32.totalorder %s3653, 3
          %s3655 = scalar_select %p3654, %s3653, 3
          %s3656 = smul.addr %s3655, 4
          %s3657 = smul.addr %s3656, 8
          %s3658 = scalar_lea.vmem %s67, %s3657
        $region172: #{decoder_forward.1} parent=159 // pred_fallthru
          _
      $region160: #{decoder_forward.1} parent=5 // pred_fallthru
        _
    $region6: #{decoder_forward.1} parent=1 // loop_footer
      %s81 = sadd.s32 1, %s77
    $region7: #{decoder_forward.1} parent=1 // loop_footer_branch
      %76 = sbr.rel target = $region3
    $region8: #{decoder_forward.1} parent=1 // loop_exit
      _
    %3659 = vsyncpa [#allocation4], 1
    %s3660 = scalar_lea.sflag [#allocation4], 1
    %3661 = vsyncpa %s3660, 1

</llo_original>
